<compile_context>
chip_gen: v7x
topology: tpu7x:2x2x1
jax: 0.10.0
libtpu: 0.0.40
codegen_flags: <defaults>
</compile_context>

<pallas_src>
import functools

import numpy as np
import jax
import jax.numpy as jnp
from jax.experimental import pallas as pl
from jax.experimental.pallas import tpu as pltpu

_ROW_GRANULE = 16  # bf16 sublane packing granule for row-dim padding


def _round_up(x, m):
    return (x + m - 1) // m * m


# ------------------------------- Pallas kernel --------------------------------
def _patchdisc_kernel(x_ref, *refs, acts, neg_slope):
    """Whole PatchDiscriminator forward in one kernel invocation.

    refs layout: for each layer i: refs[3i] = S (4, Rout, Rin) bf16 row-gather,
    refs[3i+1] = W2 (4, Win*Cin, Ncols) bf16 folded weights, refs[3i+2] = shift
    (1, Ncols) f32.  refs[-1] is the output ref.
    """
    num_layers = len(acts)
    o_ref = refs[-1]

    a = x_ref[...]                                     # bf16 (R0, W0*C0)
    for i in range(num_layers):
        s_ref = refs[3 * i]
        w_ref = refs[3 * i + 1]
        b_ref = refs[3 * i + 2]

        acc = None
        for kh in range(4):
            # Row gather via 0/1 matmul (exact: copies bf16 rows), then the
            # folded conv matmul with f32 accumulation on the MXU.
            g = jnp.dot(s_ref[kh], a,
                        preferred_element_type=jnp.float32).astype(jnp.bfloat16)
            t = jnp.dot(g, w_ref[kh], preferred_element_type=jnp.float32)
            acc = t if acc is None else acc + t

        y = acc + b_ref[...]                           # bias / BN shift
        if acts[i]:
            y = jnp.where(y >= 0.0, y, neg_slope * y)  # LeakyReLU(0.2)

        if i + 1 < num_layers:
            a = y.astype(jnp.bfloat16)                 # bf16 inter-layer act
        else:
            o_ref[...] = y.astype(o_ref.dtype)         # final f32 store


# --------------------------------- JAX wrapper ---------------------------------
def patch_discriminator_forward(x_nhwc, prepared):
    n, h, w, c = x_nhwc.shape
    # (N,H,W,C) -> rows (n,h), lanes (w,c): the kernel's native activation layout.
    x2 = x_nhwc.astype(jnp.bfloat16).reshape(n * h, w * c)
    r0 = prepared[0]["rin"]
    if x2.shape[0] < r0:                               # row-granule padding
        x2 = jnp.pad(x2, ((0, r0 - x2.shape[0]), (0, 0)))

    kernel = functools.partial(
        _patchdisc_kernel,
        acts=tuple(p["act"] for p in prepared),
        neg_slope=0.2)

    args = [x2]
    for p in prepared:
        args.extend([p["S"], p["W2"], p["shift_row"]])

    last = prepared[-1]
    out2d = pl.pallas_call(
        kernel,
        out_shape=jax.ShapeDtypeStruct((last["rout"], last["ncols_p"]),
                                       jnp.float32),
        compiler_params=pltpu.CompilerParams(
            vmem_limit_bytes=32 * 1024 * 1024),
    )(*args)

    oh, ow, cout = last["oh"], last["ow"], last["cout"]
    return out2d[: n * oh, : ow * cout].reshape(n, oh, ow, cout)


# --------------------------- parameter construction ---------------------------
def init_patch_discriminator(key, input_c, num_filters=64, n_down=3):
    # Layer specs exactly mirroring PatchDiscriminator.__init__:
    #   (cin, cout, stride, norm, act)
    specs = [(input_c, num_filters, 2, False, True)]
    for i in range(n_down):
        s = 1 if i == n_down - 1 else 2
        specs.append((num_filters * 2 ** i, num_filters * 2 ** (i + 1), s, True, True))
    specs.append((num_filters * 2 ** n_down, 1, 1, False, False))

    eps = 1e-5
    params = []
    for (cin, cout, s, norm, act) in specs:
        key, kw, kb, kg, kbe, km, kv = jax.random.split(key, 7)
        w = 0.05 * jax.random.normal(kw, (4, 4, cin, cout), jnp.float32)
        if norm:
            # Eval-mode BatchNorm folded into per-channel (scale, shift).
            # TODO(synk): training-mode BatchNorm (batch statistics) not
            # implemented; eval-mode running stats are used instead.
            gamma = 1.0 + 0.1 * jax.random.normal(kg, (cout,), jnp.float32)
            beta = 0.1 * jax.random.normal(kbe, (cout,), jnp.float32)
            mean = 0.1 * jax.random.normal(km, (cout,), jnp.float32)
            var = jnp.abs(jax.random.normal(kv, (cout,), jnp.float32)) + 0.5
            scale = gamma / jnp.sqrt(var + eps)
            shift = beta - mean * scale
        else:
            bias = 0.1 * jax.random.normal(kb, (cout,), jnp.float32)
            scale = jnp.ones((cout,), jnp.float32)
            shift = bias
        params.append(dict(w=w, scale=scale, shift=shift, stride=s, act=act))
    return params


def prepare_params(params, batch, in_h, in_w):
    """Precompute per-layer S (row gather), W2 (folded weights) and shift rows."""
    prepared = []
    hin, win = in_h, in_w
    n_layers = len(params)
    for idx, p in enumerate(params):
        s = p["stride"]
        _, _, cin, cout = p["w"].shape
        oh = (hin + 2 - 4) // s + 1
        ow = (win + 2 - 4) // s + 1
        rin = _round_up(batch * hin, _ROW_GRANULE)
        rout = _round_up(batch * oh, _ROW_GRANULE)

        # 0/1 row-gather matrices (one per kernel row kh); spatial H padding is
        # folded in: out-of-range source rows simply select nothing.  Padded
        # (junk) rows of the previous activation are never selected because
        # their columns are left at zero.
        S = np.zeros((4, rout, rin), np.float32)
        for kh in range(4):
            for n in range(batch):
                for oy in range(oh):
                    h_src = oy * s + kh - 1
                    if 0 <= h_src < hin:
                        S[kh, n * oh + oy, n * hin + h_src] = 1.0

        # Block-banded folded weights: (w, cin) -> (ox, cout), W padding and the
        # conv-bias / eval-BN scale folded in.
        w_np = (np.asarray(p["w"], np.float32) *
                np.asarray(p["scale"], np.float32)[None, None, None, :])
        is_last = idx == n_layers - 1
        ncols = ow * cout
        ncols_p = max(ncols, 128) if is_last else ncols   # lane-dense final store
        W2 = np.zeros((4, win * cin, ncols_p), np.float32)
        for kh in range(4):
            for ox in range(ow):
                for kw in range(4):
                    w_src = ox * s + kw - 1
                    if 0 <= w_src < win:
                        W2[kh, w_src * cin:(w_src + 1) * cin,
                           ox * cout:(ox + 1) * cout] = w_np[kh, kw]

        shift_row = np.zeros((1, ncols_p), np.float32)
        shift_row[0, :ncols] = np.tile(np.asarray(p["shift"], np.float32), ow)

        prepared.append(dict(
            S=jnp.asarray(S, dtype=jnp.bfloat16),
            W2=jnp.asarray(W2, dtype=jnp.bfloat16),
            shift_row=jnp.asarray(shift_row, dtype=jnp.float32),
            act=p["act"], oh=oh, ow=ow, cout=cout,
            rin=rin, rout=rout, ncols=ncols, ncols_p=ncols_p))
        hin, win = oh, ow
    return prepared


# ----------------------- reference (bf16-matched, pure JAX) -------------------
def reference_forward(x_nhwc, params):
    y = x_nhwc.astype(jnp.bfloat16)
    n_layers = len(params)
    for idx, p in enumerate(params):
        # Same bias/BN folding as the kernel (scale folded into bf16 weights).
        w_fold = (p["w"] * p["scale"][None, None, None, :]).astype(jnp.bfloat16)
        z = jax.lax.conv_general_dilated(
            y, w_fold,
            window_strides=(p["stride"], p["stride"]),
            padding=((1, 1), (1, 1)),
            dimension_numbers=("NHWC", "HWIO", "NHWC"),
            preferred_element_type=jnp.float32)
        z = z + p["shift"]
        if p["act"]:
            z = jnp.where(z >= 0.0, z, 0.2 * z)
        y = z.astype(jnp.float32 if idx == n_layers - 1 else jnp.bfloat16)
    return y


if __name__ == "__main__":
    key = jax.random.PRNGKey(0)
    k_in, k_par = jax.random.split(key)

    # Small shapes: batch=2, input_c=3, spatial=32x32, num_filters=8, n_down=3.
    # (NCHW equivalent of the input: [2, 3, 32, 32].)
    x_nhwc = jax.random.normal(k_in, (2, 32, 32, 3), jnp.float32)
    params = init_patch_discriminator(k_par, input_c=3, num_filters=8, n_down=3)
    prepared = prepare_params(params, batch=2, in_h=32, in_w=32)

    fwd = jax.jit(functools.partial(patch_discriminator_forward,
                                    prepared=prepared))
    out = jax.block_until_ready(fwd(x_nhwc))

    ref = jax.block_until_ready(reference_forward(x_nhwc, params))
    assert out.shape == ref.shape == (2, 2, 2, 1), out.shape
    max_err = float(jnp.max(jnp.abs(out - ref)))
    assert jnp.allclose(out, ref, atol=5e-2, rtol=5e-2), max_err

    print("KERNEL_OK")
</pallas_src>

<mosaic_0001>
module attributes {stable_mosaic.version = 11 : i64} {
  func.func @_patchdisc_kernel(%arg0: memref<64x96xbf16, #tpu.memory_space<vmem>>, %arg1: memref<4x32x64xbf16, #tpu.memory_space<vmem>>, %arg2: memref<4x96x128xbf16, #tpu.memory_space<vmem>>, %arg3: memref<1x128xf32, #tpu.memory_space<vmem>>, %arg4: memref<4x16x32xbf16, #tpu.memory_space<vmem>>, %arg5: memref<4x128x128xbf16, #tpu.memory_space<vmem>>, %arg6: memref<1x128xf32, #tpu.memory_space<vmem>>, %arg7: memref<4x16x16xbf16, #tpu.memory_space<vmem>>, %arg8: memref<4x128x128xbf16, #tpu.memory_space<vmem>>, %arg9: memref<1x128xf32, #tpu.memory_space<vmem>>, %arg10: memref<4x16x16xbf16, #tpu.memory_space<vmem>>, %arg11: memref<4x128x192xbf16, #tpu.memory_space<vmem>>, %arg12: memref<1x192xf32, #tpu.memory_space<vmem>>, %arg13: memref<4x16x16xbf16, #tpu.memory_space<vmem>>, %arg14: memref<4x192x128xbf16, #tpu.memory_space<vmem>>, %arg15: memref<1x128xf32, #tpu.memory_space<vmem>>, %arg16: memref<16x128xf32, #tpu.memory_space<vmem>>) attributes {dimension_semantics = [], scalar_prefetch = 0 : i64, scratch_operands = 0 : i64, tpu.core_type = #tpu.core_type<tc>} {
    %c0 = arith.constant 0 : index
    %c0_0 = arith.constant 0 : index
    %0 = vector.load %arg0[%c0, %c0_0] : memref<64x96xbf16, #tpu.memory_space<vmem>>, vector<64x96xbf16>
    %c0_1 = arith.constant 0 : index
    %c0_2 = arith.constant 0 : index
    %c0_3 = arith.constant 0 : index
    %1 = vector.load %arg1[%c0_1, %c0_2, %c0_3] : memref<4x32x64xbf16, #tpu.memory_space<vmem>>, vector<1x32x64xbf16>
    %2 = vector.shape_cast %1 : vector<1x32x64xbf16> to vector<32x64xbf16>
    %cst = arith.constant dense<0.000000e+00> : vector<32x96xf32>
    %3 = tpu.matmul %2, %0, %cst {dimension_numbers = #tpu.dot_dimension_numbers<[1], [0], [0], [1], [0, 0, 1, 1], [], []>} : vector<32x64xbf16>, vector<64x96xbf16>, vector<32x96xf32> -> vector<32x96xf32>
    %4 = arith.truncf %3 : vector<32x96xf32> to vector<32x96xbf16>
    %c0_4 = arith.constant 0 : index
    %c0_5 = arith.constant 0 : index
    %c0_6 = arith.constant 0 : index
    %5 = vector.load %arg2[%c0_4, %c0_5, %c0_6] : memref<4x96x128xbf16, #tpu.memory_space<vmem>>, vector<1x96x128xbf16>
    %6 = vector.shape_cast %5 : vector<1x96x128xbf16> to vector<96x128xbf16>
    %cst_7 = arith.constant dense<0.000000e+00> : vector<32x128xf32>
    %7 = tpu.matmul %4, %6, %cst_7 {dimension_numbers = #tpu.dot_dimension_numbers<[1], [0], [0], [1], [0, 0, 1, 1], [], []>} : vector<32x96xbf16>, vector<96x128xbf16>, vector<32x128xf32> -> vector<32x128xf32>
    %c1 = arith.constant 1 : index
    %c0_8 = arith.constant 0 : index
    %c0_9 = arith.constant 0 : index
    %8 = vector.load %arg1[%c1, %c0_8, %c0_9] : memref<4x32x64xbf16, #tpu.memory_space<vmem>>, vector<1x32x64xbf16>
    %9 = vector.shape_cast %8 : vector<1x32x64xbf16> to vector<32x64xbf16>
    %cst_10 = arith.constant dense<0.000000e+00> : vector<32x96xf32>
    %10 = tpu.matmul %9, %0, %cst_10 {dimension_numbers = #tpu.dot_dimension_numbers<[1], [0], [0], [1], [0, 0, 1, 1], [], []>} : vector<32x64xbf16>, vector<64x96xbf16>, vector<32x96xf32> -> vector<32x96xf32>
    %11 = arith.truncf %10 : vector<32x96xf32> to vector<32x96xbf16>
    %c1_11 = arith.constant 1 : index
    %c0_12 = arith.constant 0 : index
    %c0_13 = arith.constant 0 : index
    %12 = vector.load %arg2[%c1_11, %c0_12, %c0_13] : memref<4x96x128xbf16, #tpu.memory_space<vmem>>, vector<1x96x128xbf16>
    %13 = vector.shape_cast %12 : vector<1x96x128xbf16> to vector<96x128xbf16>
    %cst_14 = arith.constant dense<0.000000e+00> : vector<32x128xf32>
    %14 = tpu.matmul %11, %13, %cst_14 {dimension_numbers = #tpu.dot_dimension_numbers<[1], [0], [0], [1], [0, 0, 1, 1], [], []>} : vector<32x96xbf16>, vector<96x128xbf16>, vector<32x128xf32> -> vector<32x128xf32>
    %15 = arith.addf %7, %14 : vector<32x128xf32>
    %c2 = arith.constant 2 : index
    %c0_15 = arith.constant 0 : index
    %c0_16 = arith.constant 0 : index
    %16 = vector.load %arg1[%c2, %c0_15, %c0_16] : memref<4x32x64xbf16, #tpu.memory_space<vmem>>, vector<1x32x64xbf16>
    %17 = vector.shape_cast %16 : vector<1x32x64xbf16> to vector<32x64xbf16>
    %cst_17 = arith.constant dense<0.000000e+00> : vector<32x96xf32>
    %18 = tpu.matmul %17, %0, %cst_17 {dimension_numbers = #tpu.dot_dimension_numbers<[1], [0], [0], [1], [0, 0, 1, 1], [], []>} : vector<32x64xbf16>, vector<64x96xbf16>, vector<32x96xf32> -> vector<32x96xf32>
    %19 = arith.truncf %18 : vector<32x96xf32> to vector<32x96xbf16>
    %c2_18 = arith.constant 2 : index
    %c0_19 = arith.constant 0 : index
    %c0_20 = arith.constant 0 : index
    %20 = vector.load %arg2[%c2_18, %c0_19, %c0_20] : memref<4x96x128xbf16, #tpu.memory_space<vmem>>, vector<1x96x128xbf16>
    %21 = vector.shape_cast %20 : vector<1x96x128xbf16> to vector<96x128xbf16>
    %cst_21 = arith.constant dense<0.000000e+00> : vector<32x128xf32>
    %22 = tpu.matmul %19, %21, %cst_21 {dimension_numbers = #tpu.dot_dimension_numbers<[1], [0], [0], [1], [0, 0, 1, 1], [], []>} : vector<32x96xbf16>, vector<96x128xbf16>, vector<32x128xf32> -> vector<32x128xf32>
    %23 = arith.addf %15, %22 : vector<32x128xf32>
    %c3 = arith.constant 3 : index
    %c0_22 = arith.constant 0 : index
    %c0_23 = arith.constant 0 : index
    %24 = vector.load %arg1[%c3, %c0_22, %c0_23] : memref<4x32x64xbf16, #tpu.memory_space<vmem>>, vector<1x32x64xbf16>
    %25 = vector.shape_cast %24 : vector<1x32x64xbf16> to vector<32x64xbf16>
    %cst_24 = arith.constant dense<0.000000e+00> : vector<32x96xf32>
    %26 = tpu.matmul %25, %0, %cst_24 {dimension_numbers = #tpu.dot_dimension_numbers<[1], [0], [0], [1], [0, 0, 1, 1], [], []>} : vector<32x64xbf16>, vector<64x96xbf16>, vector<32x96xf32> -> vector<32x96xf32>
    %27 = arith.truncf %26 : vector<32x96xf32> to vector<32x96xbf16>
    %c3_25 = arith.constant 3 : index
    %c0_26 = arith.constant 0 : index
    %c0_27 = arith.constant 0 : index
    %28 = vector.load %arg2[%c3_25, %c0_26, %c0_27] : memref<4x96x128xbf16, #tpu.memory_space<vmem>>, vector<1x96x128xbf16>
    %29 = vector.shape_cast %28 : vector<1x96x128xbf16> to vector<96x128xbf16>
    %cst_28 = arith.constant dense<0.000000e+00> : vector<32x128xf32>
    %30 = tpu.matmul %27, %29, %cst_28 {dimension_numbers = #tpu.dot_dimension_numbers<[1], [0], [0], [1], [0, 0, 1, 1], [], []>} : vector<32x96xbf16>, vector<96x128xbf16>, vector<32x128xf32> -> vector<32x128xf32>
    %31 = arith.addf %23, %30 : vector<32x128xf32>
    %c0_29 = arith.constant 0 : index
    %c0_30 = arith.constant 0 : index
    %32 = vector.load %arg3[%c0_29, %c0_30] : memref<1x128xf32, #tpu.memory_space<vmem>>, vector<1x128xf32>
    %33 = vector.broadcast %32 : vector<1x128xf32> to vector<32x128xf32>
    %34 = arith.addf %31, %33 : vector<32x128xf32>
    %cst_31 = arith.constant 0.000000e+00 : f32
    %35 = vector.broadcast %cst_31 : f32 to vector<32x128xf32>
    %36 = arith.cmpf oge, %34, %35 : vector<32x128xf32>
    %cst_32 = arith.constant 2.000000e-01 : f32
    %37 = vector.broadcast %cst_32 : f32 to vector<32x128xf32>
    %38 = arith.mulf %37, %34 : vector<32x128xf32>
    %39 = arith.select %36, %34, %38 : vector<32x128xi1>, vector<32x128xf32>
    %40 = arith.truncf %39 : vector<32x128xf32> to vector<32x128xbf16>
    %c0_33 = arith.constant 0 : index
    %c0_34 = arith.constant 0 : index
    %c0_35 = arith.constant 0 : index
    %41 = vector.load %arg4[%c0_33, %c0_34, %c0_35] : memref<4x16x32xbf16, #tpu.memory_space<vmem>>, vector<1x16x32xbf16>
    %42 = vector.shape_cast %41 : vector<1x16x32xbf16> to vector<16x32xbf16>
    %cst_36 = arith.constant dense<0.000000e+00> : vector<16x128xf32>
    %43 = tpu.matmul %42, %40, %cst_36 {dimension_numbers = #tpu.dot_dimension_numbers<[1], [0], [0], [1], [0, 0, 1, 1], [], []>} : vector<16x32xbf16>, vector<32x128xbf16>, vector<16x128xf32> -> vector<16x128xf32>
    %44 = arith.truncf %43 : vector<16x128xf32> to vector<16x128xbf16>
    %c0_37 = arith.constant 0 : index
    %c0_38 = arith.constant 0 : index
    %c0_39 = arith.constant 0 : index
    %45 = vector.load %arg5[%c0_37, %c0_38, %c0_39] : memref<4x128x128xbf16, #tpu.memory_space<vmem>>, vector<1x128x128xbf16>
    %46 = vector.shape_cast %45 : vector<1x128x128xbf16> to vector<128x128xbf16>
    %cst_40 = arith.constant dense<0.000000e+00> : vector<16x128xf32>
    %47 = tpu.matmul %44, %46, %cst_40 {dimension_numbers = #tpu.dot_dimension_numbers<[1], [0], [0], [1], [0, 0, 1, 1], [], []>} : vector<16x128xbf16>, vector<128x128xbf16>, vector<16x128xf32> -> vector<16x128xf32>
    %c1_41 = arith.constant 1 : index
    %c0_42 = arith.constant 0 : index
    %c0_43 = arith.constant 0 : index
    %48 = vector.load %arg4[%c1_41, %c0_42, %c0_43] : memref<4x16x32xbf16, #tpu.memory_space<vmem>>, vector<1x16x32xbf16>
    %49 = vector.shape_cast %48 : vector<1x16x32xbf16> to vector<16x32xbf16>
    %cst_44 = arith.constant dense<0.000000e+00> : vector<16x128xf32>
    %50 = tpu.matmul %49, %40, %cst_44 {dimension_numbers = #tpu.dot_dimension_numbers<[1], [0], [0], [1], [0, 0, 1, 1], [], []>} : vector<16x32xbf16>, vector<32x128xbf16>, vector<16x128xf32> -> vector<16x128xf32>
    %51 = arith.truncf %50 : vector<16x128xf32> to vector<16x128xbf16>
    %c1_45 = arith.constant 1 : index
    %c0_46 = arith.constant 0 : index
    %c0_47 = arith.constant 0 : index
    %52 = vector.load %arg5[%c1_45, %c0_46, %c0_47] : memref<4x128x128xbf16, #tpu.memory_space<vmem>>, vector<1x128x128xbf16>
    %53 = vector.shape_cast %52 : vector<1x128x128xbf16> to vector<128x128xbf16>
    %cst_48 = arith.constant dense<0.000000e+00> : vector<16x128xf32>
    %54 = tpu.matmul %51, %53, %cst_48 {dimension_numbers = #tpu.dot_dimension_numbers<[1], [0], [0], [1], [0, 0, 1, 1], [], []>} : vector<16x128xbf16>, vector<128x128xbf16>, vector<16x128xf32> -> vector<16x128xf32>
    %55 = arith.addf %47, %54 : vector<16x128xf32>
    %c2_49 = arith.constant 2 : index
    %c0_50 = arith.constant 0 : index
    %c0_51 = arith.constant 0 : index
    %56 = vector.load %arg4[%c2_49, %c0_50, %c0_51] : memref<4x16x32xbf16, #tpu.memory_space<vmem>>, vector<1x16x32xbf16>
    %57 = vector.shape_cast %56 : vector<1x16x32xbf16> to vector<16x32xbf16>
    %cst_52 = arith.constant dense<0.000000e+00> : vector<16x128xf32>
    %58 = tpu.matmul %57, %40, %cst_52 {dimension_numbers = #tpu.dot_dimension_numbers<[1], [0], [0], [1], [0, 0, 1, 1], [], []>} : vector<16x32xbf16>, vector<32x128xbf16>, vector<16x128xf32> -> vector<16x128xf32>
    %59 = arith.truncf %58 : vector<16x128xf32> to vector<16x128xbf16>
    %c2_53 = arith.constant 2 : index
    %c0_54 = arith.constant 0 : index
    %c0_55 = arith.constant 0 : index
    %60 = vector.load %arg5[%c2_53, %c0_54, %c0_55] : memref<4x128x128xbf16, #tpu.memory_space<vmem>>, vector<1x128x128xbf16>
    %61 = vector.shape_cast %60 : vector<1x128x128xbf16> to vector<128x128xbf16>
    %cst_56 = arith.constant dense<0.000000e+00> : vector<16x128xf32>
    %62 = tpu.matmul %59, %61, %cst_56 {dimension_numbers = #tpu.dot_dimension_numbers<[1], [0], [0], [1], [0, 0, 1, 1], [], []>} : vector<16x128xbf16>, vector<128x128xbf16>, vector<16x128xf32> -> vector<16x128xf32>
    %63 = arith.addf %55, %62 : vector<16x128xf32>
    %c3_57 = arith.constant 3 : index
    %c0_58 = arith.constant 0 : index
    %c0_59 = arith.constant 0 : index
    %64 = vector.load %arg4[%c3_57, %c0_58, %c0_59] : memref<4x16x32xbf16, #tpu.memory_space<vmem>>, vector<1x16x32xbf16>
    %65 = vector.shape_cast %64 : vector<1x16x32xbf16> to vector<16x32xbf16>
    %cst_60 = arith.constant dense<0.000000e+00> : vector<16x128xf32>
    %66 = tpu.matmul %65, %40, %cst_60 {dimension_numbers = #tpu.dot_dimension_numbers<[1], [0], [0], [1], [0, 0, 1, 1], [], []>} : vector<16x32xbf16>, vector<32x128xbf16>, vector<16x128xf32> -> vector<16x128xf32>
    %67 = arith.truncf %66 : vector<16x128xf32> to vector<16x128xbf16>
    %c3_61 = arith.constant 3 : index
    %c0_62 = arith.constant 0 : index
    %c0_63 = arith.constant 0 : index
    %68 = vector.load %arg5[%c3_61, %c0_62, %c0_63] : memref<4x128x128xbf16, #tpu.memory_space<vmem>>, vector<1x128x128xbf16>
    %69 = vector.shape_cast %68 : vector<1x128x128xbf16> to vector<128x128xbf16>
    %cst_64 = arith.constant dense<0.000000e+00> : vector<16x128xf32>
    %70 = tpu.matmul %67, %69, %cst_64 {dimension_numbers = #tpu.dot_dimension_numbers<[1], [0], [0], [1], [0, 0, 1, 1], [], []>} : vector<16x128xbf16>, vector<128x128xbf16>, vector<16x128xf32> -> vector<16x128xf32>
    %71 = arith.addf %63, %70 : vector<16x128xf32>
    %c0_65 = arith.constant 0 : index
    %c0_66 = arith.constant 0 : index
    %72 = vector.load %arg6[%c0_65, %c0_66] : memref<1x128xf32, #tpu.memory_space<vmem>>, vector<1x128xf32>
    %73 = vector.broadcast %72 : vector<1x128xf32> to vector<16x128xf32>
    %74 = arith.addf %71, %73 : vector<16x128xf32>
    %cst_67 = arith.constant 0.000000e+00 : f32
    %75 = vector.broadcast %cst_67 : f32 to vector<16x128xf32>
    %76 = arith.cmpf oge, %74, %75 : vector<16x128xf32>
    %cst_68 = arith.constant 2.000000e-01 : f32
    %77 = vector.broadcast %cst_68 : f32 to vector<16x128xf32>
    %78 = arith.mulf %77, %74 : vector<16x128xf32>
    %79 = arith.select %76, %74, %78 : vector<16x128xi1>, vector<16x128xf32>
    %80 = arith.truncf %79 : vector<16x128xf32> to vector<16x128xbf16>
    %c0_69 = arith.constant 0 : index
    %c0_70 = arith.constant 0 : index
    %c0_71 = arith.constant 0 : index
    %81 = vector.load %arg7[%c0_69, %c0_70, %c0_71] : memref<4x16x16xbf16, #tpu.memory_space<vmem>>, vector<1x16x16xbf16>
    %82 = vector.shape_cast %81 : vector<1x16x16xbf16> to vector<16x16xbf16>
    %cst_72 = arith.constant dense<0.000000e+00> : vector<16x128xf32>
    %83 = tpu.matmul %82, %80, %cst_72 {dimension_numbers = #tpu.dot_dimension_numbers<[1], [0], [0], [1], [0, 0, 1, 1], [], []>} : vector<16x16xbf16>, vector<16x128xbf16>, vector<16x128xf32> -> vector<16x128xf32>
    %84 = arith.truncf %83 : vector<16x128xf32> to vector<16x128xbf16>
    %c0_73 = arith.constant 0 : index
    %c0_74 = arith.constant 0 : index
    %c0_75 = arith.constant 0 : index
    %85 = vector.load %arg8[%c0_73, %c0_74, %c0_75] : memref<4x128x128xbf16, #tpu.memory_space<vmem>>, vector<1x128x128xbf16>
    %86 = vector.shape_cast %85 : vector<1x128x128xbf16> to vector<128x128xbf16>
    %cst_76 = arith.constant dense<0.000000e+00> : vector<16x128xf32>
    %87 = tpu.matmul %84, %86, %cst_76 {dimension_numbers = #tpu.dot_dimension_numbers<[1], [0], [0], [1], [0, 0, 1, 1], [], []>} : vector<16x128xbf16>, vector<128x128xbf16>, vector<16x128xf32> -> vector<16x128xf32>
    %c1_77 = arith.constant 1 : index
    %c0_78 = arith.constant 0 : index
    %c0_79 = arith.constant 0 : index
    %88 = vector.load %arg7[%c1_77, %c0_78, %c0_79] : memref<4x16x16xbf16, #tpu.memory_space<vmem>>, vector<1x16x16xbf16>
    %89 = vector.shape_cast %88 : vector<1x16x16xbf16> to vector<16x16xbf16>
    %cst_80 = arith.constant dense<0.000000e+00> : vector<16x128xf32>
    %90 = tpu.matmul %89, %80, %cst_80 {dimension_numbers = #tpu.dot_dimension_numbers<[1], [0], [0], [1], [0, 0, 1, 1], [], []>} : vector<16x16xbf16>, vector<16x128xbf16>, vector<16x128xf32> -> vector<16x128xf32>
    %91 = arith.truncf %90 : vector<16x128xf32> to vector<16x128xbf16>
    %c1_81 = arith.constant 1 : index
    %c0_82 = arith.constant 0 : index
    %c0_83 = arith.constant 0 : index
    %92 = vector.load %arg8[%c1_81, %c0_82, %c0_83] : memref<4x128x128xbf16, #tpu.memory_space<vmem>>, vector<1x128x128xbf16>
    %93 = vector.shape_cast %92 : vector<1x128x128xbf16> to vector<128x128xbf16>
    %cst_84 = arith.constant dense<0.000000e+00> : vector<16x128xf32>
    %94 = tpu.matmul %91, %93, %cst_84 {dimension_numbers = #tpu.dot_dimension_numbers<[1], [0], [0], [1], [0, 0, 1, 1], [], []>} : vector<16x128xbf16>, vector<128x128xbf16>, vector<16x128xf32> -> vector<16x128xf32>
    %95 = arith.addf %87, %94 : vector<16x128xf32>
    %c2_85 = arith.constant 2 : index
    %c0_86 = arith.constant 0 : index
    %c0_87 = arith.constant 0 : index
    %96 = vector.load %arg7[%c2_85, %c0_86, %c0_87] : memref<4x16x16xbf16, #tpu.memory_space<vmem>>, vector<1x16x16xbf16>
    %97 = vector.shape_cast %96 : vector<1x16x16xbf16> to vector<16x16xbf16>
    %cst_88 = arith.constant dense<0.000000e+00> : vector<16x128xf32>
    %98 = tpu.matmul %97, %80, %cst_88 {dimension_numbers = #tpu.dot_dimension_numbers<[1], [0], [0], [1], [0, 0, 1, 1], [], []>} : vector<16x16xbf16>, vector<16x128xbf16>, vector<16x128xf32> -> vector<16x128xf32>
    %99 = arith.truncf %98 : vector<16x128xf32> to vector<16x128xbf16>
    %c2_89 = arith.constant 2 : index
    %c0_90 = arith.constant 0 : index
    %c0_91 = arith.constant 0 : index
    %100 = vector.load %arg8[%c2_89, %c0_90, %c0_91] : memref<4x128x128xbf16, #tpu.memory_space<vmem>>, vector<1x128x128xbf16>
    %101 = vector.shape_cast %100 : vector<1x128x128xbf16> to vector<128x128xbf16>
    %cst_92 = arith.constant dense<0.000000e+00> : vector<16x128xf32>
    %102 = tpu.matmul %99, %101, %cst_92 {dimension_numbers = #tpu.dot_dimension_numbers<[1], [0], [0], [1], [0, 0, 1, 1], [], []>} : vector<16x128xbf16>, vector<128x128xbf16>, vector<16x128xf32> -> vector<16x128xf32>
    %103 = arith.addf %95, %102 : vector<16x128xf32>
    %c3_93 = arith.constant 3 : index
    %c0_94 = arith.constant 0 : index
    %c0_95 = arith.constant 0 : index
    %104 = vector.load %arg7[%c3_93, %c0_94, %c0_95] : memref<4x16x16xbf16, #tpu.memory_space<vmem>>, vector<1x16x16xbf16>
    %105 = vector.shape_cast %104 : vector<1x16x16xbf16> to vector<16x16xbf16>
    %cst_96 = arith.constant dense<0.000000e+00> : vector<16x128xf32>
    %106 = tpu.matmul %105, %80, %cst_96 {dimension_numbers = #tpu.dot_dimension_numbers<[1], [0], [0], [1], [0, 0, 1, 1], [], []>} : vector<16x16xbf16>, vector<16x128xbf16>, vector<16x128xf32> -> vector<16x128xf32>
    %107 = arith.truncf %106 : vector<16x128xf32> to vector<16x128xbf16>
    %c3_97 = arith.constant 3 : index
    %c0_98 = arith.constant 0 : index
    %c0_99 = arith.constant 0 : index
    %108 = vector.load %arg8[%c3_97, %c0_98, %c0_99] : memref<4x128x128xbf16, #tpu.memory_space<vmem>>, vector<1x128x128xbf16>
    %109 = vector.shape_cast %108 : vector<1x128x128xbf16> to vector<128x128xbf16>
    %cst_100 = arith.constant dense<0.000000e+00> : vector<16x128xf32>
    %110 = tpu.matmul %107, %109, %cst_100 {dimension_numbers = #tpu.dot_dimension_numbers<[1], [0], [0], [1], [0, 0, 1, 1], [], []>} : vector<16x128xbf16>, vector<128x128xbf16>, vector<16x128xf32> -> vector<16x128xf32>
    %111 = arith.addf %103, %110 : vector<16x128xf32>
    %c0_101 = arith.constant 0 : index
    %c0_102 = arith.constant 0 : index
    %112 = vector.load %arg9[%c0_101, %c0_102] : memref<1x128xf32, #tpu.memory_space<vmem>>, vector<1x128xf32>
    %113 = vector.broadcast %112 : vector<1x128xf32> to vector<16x128xf32>
    %114 = arith.addf %111, %113 : vector<16x128xf32>
    %cst_103 = arith.constant 0.000000e+00 : f32
    %115 = vector.broadcast %cst_103 : f32 to vector<16x128xf32>
    %116 = arith.cmpf oge, %114, %115 : vector<16x128xf32>
    %cst_104 = arith.constant 2.000000e-01 : f32
    %117 = vector.broadcast %cst_104 : f32 to vector<16x128xf32>
    %118 = arith.mulf %117, %114 : vector<16x128xf32>
    %119 = arith.select %116, %114, %118 : vector<16x128xi1>, vector<16x128xf32>
    %120 = arith.truncf %119 : vector<16x128xf32> to vector<16x128xbf16>
    %c0_105 = arith.constant 0 : index
    %c0_106 = arith.constant 0 : index
    %c0_107 = arith.constant 0 : index
    %121 = vector.load %arg10[%c0_105, %c0_106, %c0_107] : memref<4x16x16xbf16, #tpu.memory_space<vmem>>, vector<1x16x16xbf16>
    %122 = vector.shape_cast %121 : vector<1x16x16xbf16> to vector<16x16xbf16>
    %cst_108 = arith.constant dense<0.000000e+00> : vector<16x128xf32>
    %123 = tpu.matmul %122, %120, %cst_108 {dimension_numbers = #tpu.dot_dimension_numbers<[1], [0], [0], [1], [0, 0, 1, 1], [], []>} : vector<16x16xbf16>, vector<16x128xbf16>, vector<16x128xf32> -> vector<16x128xf32>
    %124 = arith.truncf %123 : vector<16x128xf32> to vector<16x128xbf16>
    %c0_109 = arith.constant 0 : index
    %c0_110 = arith.constant 0 : index
    %c0_111 = arith.constant 0 : index
    %125 = vector.load %arg11[%c0_109, %c0_110, %c0_111] : memref<4x128x192xbf16, #tpu.memory_space<vmem>>, vector<1x128x192xbf16>
    %126 = vector.shape_cast %125 : vector<1x128x192xbf16> to vector<128x192xbf16>
    %cst_112 = arith.constant dense<0.000000e+00> : vector<16x192xf32>
    %127 = tpu.matmul %124, %126, %cst_112 {dimension_numbers = #tpu.dot_dimension_numbers<[1], [0], [0], [1], [0, 0, 1, 1], [], []>} : vector<16x128xbf16>, vector<128x192xbf16>, vector<16x192xf32> -> vector<16x192xf32>
    %c1_113 = arith.constant 1 : index
    %c0_114 = arith.constant 0 : index
    %c0_115 = arith.constant 0 : index
    %128 = vector.load %arg10[%c1_113, %c0_114, %c0_115] : memref<4x16x16xbf16, #tpu.memory_space<vmem>>, vector<1x16x16xbf16>
    %129 = vector.shape_cast %128 : vector<1x16x16xbf16> to vector<16x16xbf16>
    %cst_116 = arith.constant dense<0.000000e+00> : vector<16x128xf32>
    %130 = tpu.matmul %129, %120, %cst_116 {dimension_numbers = #tpu.dot_dimension_numbers<[1], [0], [0], [1], [0, 0, 1, 1], [], []>} : vector<16x16xbf16>, vector<16x128xbf16>, vector<16x128xf32> -> vector<16x128xf32>
    %131 = arith.truncf %130 : vector<16x128xf32> to vector<16x128xbf16>
    %c1_117 = arith.constant 1 : index
    %c0_118 = arith.constant 0 : index
    %c0_119 = arith.constant 0 : index
    %132 = vector.load %arg11[%c1_117, %c0_118, %c0_119] : memref<4x128x192xbf16, #tpu.memory_space<vmem>>, vector<1x128x192xbf16>
    %133 = vector.shape_cast %132 : vector<1x128x192xbf16> to vector<128x192xbf16>
    %cst_120 = arith.constant dense<0.000000e+00> : vector<16x192xf32>
    %134 = tpu.matmul %131, %133, %cst_120 {dimension_numbers = #tpu.dot_dimension_numbers<[1], [0], [0], [1], [0, 0, 1, 1], [], []>} : vector<16x128xbf16>, vector<128x192xbf16>, vector<16x192xf32> -> vector<16x192xf32>
    %135 = arith.addf %127, %134 : vector<16x192xf32>
    %c2_121 = arith.constant 2 : index
    %c0_122 = arith.constant 0 : index
    %c0_123 = arith.constant 0 : index
    %136 = vector.load %arg10[%c2_121, %c0_122, %c0_123] : memref<4x16x16xbf16, #tpu.memory_space<vmem>>, vector<1x16x16xbf16>
    %137 = vector.shape_cast %136 : vector<1x16x16xbf16> to vector<16x16xbf16>
    %cst_124 = arith.constant dense<0.000000e+00> : vector<16x128xf32>
    %138 = tpu.matmul %137, %120, %cst_124 {dimension_numbers = #tpu.dot_dimension_numbers<[1], [0], [0], [1], [0, 0, 1, 1], [], []>} : vector<16x16xbf16>, vector<16x128xbf16>, vector<16x128xf32> -> vector<16x128xf32>
    %139 = arith.truncf %138 : vector<16x128xf32> to vector<16x128xbf16>
    %c2_125 = arith.constant 2 : index
    %c0_126 = arith.constant 0 : index
    %c0_127 = arith.constant 0 : index
    %140 = vector.load %arg11[%c2_125, %c0_126, %c0_127] : memref<4x128x192xbf16, #tpu.memory_space<vmem>>, vector<1x128x192xbf16>
    %141 = vector.shape_cast %140 : vector<1x128x192xbf16> to vector<128x192xbf16>
    %cst_128 = arith.constant dense<0.000000e+00> : vector<16x192xf32>
    %142 = tpu.matmul %139, %141, %cst_128 {dimension_numbers = #tpu.dot_dimension_numbers<[1], [0], [0], [1], [0, 0, 1, 1], [], []>} : vector<16x128xbf16>, vector<128x192xbf16>, vector<16x192xf32> -> vector<16x192xf32>
    %143 = arith.addf %135, %142 : vector<16x192xf32>
    %c3_129 = arith.constant 3 : index
    %c0_130 = arith.constant 0 : index
    %c0_131 = arith.constant 0 : index
    %144 = vector.load %arg10[%c3_129, %c0_130, %c0_131] : memref<4x16x16xbf16, #tpu.memory_space<vmem>>, vector<1x16x16xbf16>
    %145 = vector.shape_cast %144 : vector<1x16x16xbf16> to vector<16x16xbf16>
    %cst_132 = arith.constant dense<0.000000e+00> : vector<16x128xf32>
    %146 = tpu.matmul %145, %120, %cst_132 {dimension_numbers = #tpu.dot_dimension_numbers<[1], [0], [0], [1], [0, 0, 1, 1], [], []>} : vector<16x16xbf16>, vector<16x128xbf16>, vector<16x128xf32> -> vector<16x128xf32>
    %147 = arith.truncf %146 : vector<16x128xf32> to vector<16x128xbf16>
    %c3_133 = arith.constant 3 : index
    %c0_134 = arith.constant 0 : index
    %c0_135 = arith.constant 0 : index
    %148 = vector.load %arg11[%c3_133, %c0_134, %c0_135] : memref<4x128x192xbf16, #tpu.memory_space<vmem>>, vector<1x128x192xbf16>
    %149 = vector.shape_cast %148 : vector<1x128x192xbf16> to vector<128x192xbf16>
    %cst_136 = arith.constant dense<0.000000e+00> : vector<16x192xf32>
    %150 = tpu.matmul %147, %149, %cst_136 {dimension_numbers = #tpu.dot_dimension_numbers<[1], [0], [0], [1], [0, 0, 1, 1], [], []>} : vector<16x128xbf16>, vector<128x192xbf16>, vector<16x192xf32> -> vector<16x192xf32>
    %151 = arith.addf %143, %150 : vector<16x192xf32>
    %c0_137 = arith.constant 0 : index
    %c0_138 = arith.constant 0 : index
    %152 = vector.load %arg12[%c0_137, %c0_138] : memref<1x192xf32, #tpu.memory_space<vmem>>, vector<1x192xf32>
    %153 = vector.broadcast %152 : vector<1x192xf32> to vector<16x192xf32>
    %154 = arith.addf %151, %153 : vector<16x192xf32>
    %cst_139 = arith.constant 0.000000e+00 : f32
    %155 = vector.broadcast %cst_139 : f32 to vector<16x192xf32>
    %156 = arith.cmpf oge, %154, %155 : vector<16x192xf32>
    %cst_140 = arith.constant 2.000000e-01 : f32
    %157 = vector.broadcast %cst_140 : f32 to vector<16x192xf32>
    %158 = arith.mulf %157, %154 : vector<16x192xf32>
    %159 = arith.select %156, %154, %158 : vector<16x192xi1>, vector<16x192xf32>
    %160 = arith.truncf %159 : vector<16x192xf32> to vector<16x192xbf16>
    %c0_141 = arith.constant 0 : index
    %c0_142 = arith.constant 0 : index
    %c0_143 = arith.constant 0 : index
    %161 = vector.load %arg13[%c0_141, %c0_142, %c0_143] : memref<4x16x16xbf16, #tpu.memory_space<vmem>>, vector<1x16x16xbf16>
    %162 = vector.shape_cast %161 : vector<1x16x16xbf16> to vector<16x16xbf16>
    %cst_144 = arith.constant dense<0.000000e+00> : vector<16x192xf32>
    %163 = tpu.matmul %162, %160, %cst_144 {dimension_numbers = #tpu.dot_dimension_numbers<[1], [0], [0], [1], [0, 0, 1, 1], [], []>} : vector<16x16xbf16>, vector<16x192xbf16>, vector<16x192xf32> -> vector<16x192xf32>
    %164 = arith.truncf %163 : vector<16x192xf32> to vector<16x192xbf16>
    %c0_145 = arith.constant 0 : index
    %c0_146 = arith.constant 0 : index
    %c0_147 = arith.constant 0 : index
    %165 = vector.load %arg14[%c0_145, %c0_146, %c0_147] : memref<4x192x128xbf16, #tpu.memory_space<vmem>>, vector<1x192x128xbf16>
    %166 = vector.shape_cast %165 : vector<1x192x128xbf16> to vector<192x128xbf16>
    %cst_148 = arith.constant dense<0.000000e+00> : vector<16x128xf32>
    %167 = tpu.matmul %164, %166, %cst_148 {dimension_numbers = #tpu.dot_dimension_numbers<[1], [0], [0], [1], [0, 0, 1, 1], [], []>} : vector<16x192xbf16>, vector<192x128xbf16>, vector<16x128xf32> -> vector<16x128xf32>
    %c1_149 = arith.constant 1 : index
    %c0_150 = arith.constant 0 : index
    %c0_151 = arith.constant 0 : index
    %168 = vector.load %arg13[%c1_149, %c0_150, %c0_151] : memref<4x16x16xbf16, #tpu.memory_space<vmem>>, vector<1x16x16xbf16>
    %169 = vector.shape_cast %168 : vector<1x16x16xbf16> to vector<16x16xbf16>
    %cst_152 = arith.constant dense<0.000000e+00> : vector<16x192xf32>
    %170 = tpu.matmul %169, %160, %cst_152 {dimension_numbers = #tpu.dot_dimension_numbers<[1], [0], [0], [1], [0, 0, 1, 1], [], []>} : vector<16x16xbf16>, vector<16x192xbf16>, vector<16x192xf32> -> vector<16x192xf32>
    %171 = arith.truncf %170 : vector<16x192xf32> to vector<16x192xbf16>
    %c1_153 = arith.constant 1 : index
    %c0_154 = arith.constant 0 : index
    %c0_155 = arith.constant 0 : index
    %172 = vector.load %arg14[%c1_153, %c0_154, %c0_155] : memref<4x192x128xbf16, #tpu.memory_space<vmem>>, vector<1x192x128xbf16>
    %173 = vector.shape_cast %172 : vector<1x192x128xbf16> to vector<192x128xbf16>
    %cst_156 = arith.constant dense<0.000000e+00> : vector<16x128xf32>
    %174 = tpu.matmul %171, %173, %cst_156 {dimension_numbers = #tpu.dot_dimension_numbers<[1], [0], [0], [1], [0, 0, 1, 1], [], []>} : vector<16x192xbf16>, vector<192x128xbf16>, vector<16x128xf32> -> vector<16x128xf32>
    %175 = arith.addf %167, %174 : vector<16x128xf32>
    %c2_157 = arith.constant 2 : index
    %c0_158 = arith.constant 0 : index
    %c0_159 = arith.constant 0 : index
    %176 = vector.load %arg13[%c2_157, %c0_158, %c0_159] : memref<4x16x16xbf16, #tpu.memory_space<vmem>>, vector<1x16x16xbf16>
    %177 = vector.shape_cast %176 : vector<1x16x16xbf16> to vector<16x16xbf16>
    %cst_160 = arith.constant dense<0.000000e+00> : vector<16x192xf32>
    %178 = tpu.matmul %177, %160, %cst_160 {dimension_numbers = #tpu.dot_dimension_numbers<[1], [0], [0], [1], [0, 0, 1, 1], [], []>} : vector<16x16xbf16>, vector<16x192xbf16>, vector<16x192xf32> -> vector<16x192xf32>
    %179 = arith.truncf %178 : vector<16x192xf32> to vector<16x192xbf16>
    %c2_161 = arith.constant 2 : index
    %c0_162 = arith.constant 0 : index
    %c0_163 = arith.constant 0 : index
    %180 = vector.load %arg14[%c2_161, %c0_162, %c0_163] : memref<4x192x128xbf16, #tpu.memory_space<vmem>>, vector<1x192x128xbf16>
    %181 = vector.shape_cast %180 : vector<1x192x128xbf16> to vector<192x128xbf16>
    %cst_164 = arith.constant dense<0.000000e+00> : vector<16x128xf32>
    %182 = tpu.matmul %179, %181, %cst_164 {dimension_numbers = #tpu.dot_dimension_numbers<[1], [0], [0], [1], [0, 0, 1, 1], [], []>} : vector<16x192xbf16>, vector<192x128xbf16>, vector<16x128xf32> -> vector<16x128xf32>
    %183 = arith.addf %175, %182 : vector<16x128xf32>
    %c3_165 = arith.constant 3 : index
    %c0_166 = arith.constant 0 : index
    %c0_167 = arith.constant 0 : index
    %184 = vector.load %arg13[%c3_165, %c0_166, %c0_167] : memref<4x16x16xbf16, #tpu.memory_space<vmem>>, vector<1x16x16xbf16>
    %185 = vector.shape_cast %184 : vector<1x16x16xbf16> to vector<16x16xbf16>
    %cst_168 = arith.constant dense<0.000000e+00> : vector<16x192xf32>
    %186 = tpu.matmul %185, %160, %cst_168 {dimension_numbers = #tpu.dot_dimension_numbers<[1], [0], [0], [1], [0, 0, 1, 1], [], []>} : vector<16x16xbf16>, vector<16x192xbf16>, vector<16x192xf32> -> vector<16x192xf32>
    %187 = arith.truncf %186 : vector<16x192xf32> to vector<16x192xbf16>
    %c3_169 = arith.constant 3 : index
    %c0_170 = arith.constant 0 : index
    %c0_171 = arith.constant 0 : index
    %188 = vector.load %arg14[%c3_169, %c0_170, %c0_171] : memref<4x192x128xbf16, #tpu.memory_space<vmem>>, vector<1x192x128xbf16>
    %189 = vector.shape_cast %188 : vector<1x192x128xbf16> to vector<192x128xbf16>
    %cst_172 = arith.constant dense<0.000000e+00> : vector<16x128xf32>
    %190 = tpu.matmul %187, %189, %cst_172 {dimension_numbers = #tpu.dot_dimension_numbers<[1], [0], [0], [1], [0, 0, 1, 1], [], []>} : vector<16x192xbf16>, vector<192x128xbf16>, vector<16x128xf32> -> vector<16x128xf32>
    %191 = arith.addf %183, %190 : vector<16x128xf32>
    %c0_173 = arith.constant 0 : index
    %c0_174 = arith.constant 0 : index
    %192 = vector.load %arg15[%c0_173, %c0_174] : memref<1x128xf32, #tpu.memory_space<vmem>>, vector<1x128xf32>
    %193 = vector.broadcast %192 : vector<1x128xf32> to vector<16x128xf32>
    %194 = arith.addf %191, %193 : vector<16x128xf32>
    %c0_175 = arith.constant 0 : index
    %c0_176 = arith.constant 0 : index
    %195 = vector.load %arg16[%c0_175, %c0_176] : memref<16x128xf32, #tpu.memory_space<vmem>>, vector<16x128xf32>
    tpu.vector_store %arg16[%c0_175, %c0_176], %194 {strides = array<i32>} : memref<16x128xf32, #tpu.memory_space<vmem>>, vector<16x128xf32>,
    return
  }
}

</mosaic_0001>

<llo_original>
// kernel: patch_discriminator_forward.1
$region0: #{patch_discriminator_forward.1}
  #allocation0 [shape = 'u32[]', space=smem, size = 0x4, offset = 0x4, fixed_abs, tag = 'smem constant byte address 0x4 - core index']
  #allocation1 [shape = 'u32[144,128]{1,0:T(1,128)}', space=vmem, size = 0x12000, scoped, tag = 'internal scratch']
  %s0 = inlined_call_operand.vmem [shape: bf16[64,96], index: 0, kind: input, shape index: {}]
  %s1 = inlined_call_operand.vmem [shape: bf16[4,32,64], index: 1, kind: input, shape index: {}]
  %s2 = inlined_call_operand.vmem [shape: bf16[4,96,128], index: 2, kind: input, shape index: {}]
  %s3 = inlined_call_operand.vmem [shape: f32[1,128], index: 3, kind: input, shape index: {}]
  %s4 = inlined_call_operand.hbm [shape: bf16[4,16,32], index: 4, kind: input, shape index: {}]
  %s5 = inlined_call_operand.vmem [shape: bf16[4,128,128], index: 5, kind: input, shape index: {}]
  %s6 = inlined_call_operand.vmem [shape: f32[1,128], index: 6, kind: input, shape index: {}]
  %s7 = inlined_call_operand.vmem [shape: bf16[4,16,16], index: 7, kind: input, shape index: {}]
  %s8 = inlined_call_operand.vmem [shape: bf16[4,128,128], index: 8, kind: input, shape index: {}]
  %s9 = inlined_call_operand.vmem [shape: f32[1,128], index: 9, kind: input, shape index: {}]
  %s10 = inlined_call_operand.vmem [shape: bf16[4,16,16], index: 10, kind: input, shape index: {}]
  %s11 = inlined_call_operand.vmem [shape: bf16[4,128,192], index: 11, kind: input, shape index: {}]
  %s12 = inlined_call_operand.vmem [shape: f32[1,192], index: 12, kind: input, shape index: {}]
  %s13 = inlined_call_operand.vmem [shape: bf16[4,16,16], index: 13, kind: input, shape index: {}]
  %s14 = inlined_call_operand.vmem [shape: bf16[4,192,128], index: 14, kind: input, shape index: {}]
  %s15 = inlined_call_operand.vmem [shape: f32[1,128], index: 15, kind: input, shape index: {}]
  %s16 = inlined_call_operand.vmem [shape: f32[16,128], index: 16, kind: output, shape index: {}]
  %s17 = sld [smem:[#allocation0]]
  $region78: #{patch_discriminator_forward.1} parent=0
    _
  %s19 = ssub.s32 1, %s17
  %s20 = scalar_select 0, %s19, %s17
  $region1: #{patch_discriminator_forward.1} parent=0
    #allocation2 [shape = 'u8[16384]{0}', space=vmem, size = 0x4000, scoped, tag = 'input window, operand 4, single buffered']
    #allocation3 [shape = 's32[1]{0}', space=sflag, size = 0x4, scoped, tag = 'scoped memory for patch_discriminator_forward.1']
    %21 = vsyncpa [#allocation3], 0
    // Predicated region
    $region2: #{patch_discriminator_forward.1} parent=1 // pred_check
      _
    $region3: #{patch_discriminator_forward.1} parent=1 // pred_check_branch
      %23 = sbr.rel (0) target = $region5
    $region4: #{patch_discriminator_forward.1} parent=1 // pred_region
      _
    $region5: #{patch_discriminator_forward.1} parent=1 // pred_fallthru
      _
    // Predicated region
    $region6: #{patch_discriminator_forward.1} parent=1 // pred_check
      _
    $region7: #{patch_discriminator_forward.1} parent=1 // pred_check_branch
      %25 = sbr.rel (0) target = $region9
    $region8: #{patch_discriminator_forward.1} parent=1 // pred_region
      _
    $region9: #{patch_discriminator_forward.1} parent=1 // pred_fallthru
      _
    // Predicated region
    $region10: #{patch_discriminator_forward.1} parent=1 // pred_check
      _
    $region11: #{patch_discriminator_forward.1} parent=1 // pred_check_branch
      %27 = sbr.rel (0) target = $region13
    $region12: #{patch_discriminator_forward.1} parent=1 // pred_region
      _
    $region13: #{patch_discriminator_forward.1} parent=1 // pred_fallthru
      _
    // Predicated region
    $region14: #{patch_discriminator_forward.1} parent=1 // pred_check
      _
    $region15: #{patch_discriminator_forward.1} parent=1 // pred_check_branch
      %29 = sbr.rel (0) target = $region17
    $region16: #{patch_discriminator_forward.1} parent=1 // pred_region
      _
    $region17: #{patch_discriminator_forward.1} parent=1 // pred_fallthru
      _
    // Predicated region
    $region18: #{patch_discriminator_forward.1} parent=1 // pred_check
      _
    $region19: #{patch_discriminator_forward.1} parent=1 // pred_check_branch
      %31 = sbr.rel (0) target = $region21
    $region20: #{patch_discriminator_forward.1} parent=1 // pred_region
      %s33 = ssub.s32 512, 512
      %34 = vsyncadd [#allocation3], %s33
      %s35 = sshll.u32 [#allocation2], 4
      %s36 = int_to_ptr.vmem [resolvable:$true] %s35
      %41 = dma.hbm_to_vmem [thread:$0]  %s4, 512, %s36, [#allocation3], 64, 64, 4
    $region21: #{patch_discriminator_forward.1} parent=1 // pred_fallthru
      _
    // Predicated region
    $region22: #{patch_discriminator_forward.1} parent=1 // pred_check
      _
    $region23: #{patch_discriminator_forward.1} parent=1 // pred_check_branch
      %43 = sbr.rel (0) target = $region25
    $region24: #{patch_discriminator_forward.1} parent=1 // pred_region
      _
    $region25: #{patch_discriminator_forward.1} parent=1 // pred_fallthru
      _
    // Predicated region
    $region26: #{patch_discriminator_forward.1} parent=1 // pred_check
      _
    $region27: #{patch_discriminator_forward.1} parent=1 // pred_check_branch
      %45 = sbr.rel (0) target = $region29
    $region28: #{patch_discriminator_forward.1} parent=1 // pred_region
      _
    $region29: #{patch_discriminator_forward.1} parent=1 // pred_fallthru
      _
    // Predicated region
    $region30: #{patch_discriminator_forward.1} parent=1 // pred_check
      _
    $region31: #{patch_discriminator_forward.1} parent=1 // pred_check_branch
      %47 = sbr.rel (0) target = $region33
    $region32: #{patch_discriminator_forward.1} parent=1 // pred_region
      _
    $region33: #{patch_discriminator_forward.1} parent=1 // pred_fallthru
      _
    // Predicated region
    $region34: #{patch_discriminator_forward.1} parent=1 // pred_check
      _
    $region35: #{patch_discriminator_forward.1} parent=1 // pred_check_branch
      %49 = sbr.rel (0) target = $region37
    $region36: #{patch_discriminator_forward.1} parent=1 // pred_region
      _
    $region37: #{patch_discriminator_forward.1} parent=1 // pred_fallthru
      _
    // Predicated region
    $region38: #{patch_discriminator_forward.1} parent=1 // pred_check
      _
    $region39: #{patch_discriminator_forward.1} parent=1 // pred_check_branch
      %51 = sbr.rel (0) target = $region41
    $region40: #{patch_discriminator_forward.1} parent=1 // pred_region
      _
    $region41: #{patch_discriminator_forward.1} parent=1 // pred_fallthru
      _
    // Predicated region
    $region42: #{patch_discriminator_forward.1} parent=1 // pred_check
      _
    $region43: #{patch_discriminator_forward.1} parent=1 // pred_check_branch
      %53 = sbr.rel (0) target = $region45
    $region44: #{patch_discriminator_forward.1} parent=1 // pred_region
      _
    $region45: #{patch_discriminator_forward.1} parent=1 // pred_fallthru
      _
    // Predicated region
    $region46: #{patch_discriminator_forward.1} parent=1 // pred_check
      _
    $region47: #{patch_discriminator_forward.1} parent=1 // pred_check_branch
      %55 = sbr.rel (0) target = $region49
    $region48: #{patch_discriminator_forward.1} parent=1 // pred_region
      _
    $region49: #{patch_discriminator_forward.1} parent=1 // pred_fallthru
      _
    // Predicated region
    $region50: #{patch_discriminator_forward.1} parent=1 // pred_check
      _
    $region51: #{patch_discriminator_forward.1} parent=1 // pred_check_branch
      %57 = sbr.rel (0) target = $region53
    $region52: #{patch_discriminator_forward.1} parent=1 // pred_region
      _
    $region53: #{patch_discriminator_forward.1} parent=1 // pred_fallthru
      _
    // Predicated region
    $region54: #{patch_discriminator_forward.1} parent=1 // pred_check
      _
    $region55: #{patch_discriminator_forward.1} parent=1 // pred_check_branch
      %59 = sbr.rel (0) target = $region57
    $region56: #{patch_discriminator_forward.1} parent=1 // pred_region
      _
    $region57: #{patch_discriminator_forward.1} parent=1 // pred_fallthru
      _
    // Predicated region
    $region58: #{patch_discriminator_forward.1} parent=1 // pred_check
      _
    $region59: #{patch_discriminator_forward.1} parent=1 // pred_check_branch
      %61 = sbr.rel (0) target = $region61
    $region60: #{patch_discriminator_forward.1} parent=1 // pred_region
      _
    $region61: #{patch_discriminator_forward.1} parent=1 // pred_fallthru
      _
    // Predicated region
    $region62: #{patch_discriminator_forward.1} parent=1 // pred_check
      _
    $region63: #{patch_discriminator_forward.1} parent=1 // pred_check_branch
      %63 = sbr.rel (0) target = $region65
    $region64: #{patch_discriminator_forward.1} parent=1 // pred_region
      _
    $region65: #{patch_discriminator_forward.1} parent=1 // pred_fallthru
      _
    // Predicated region
    $region66: #{patch_discriminator_forward.1} parent=1 // pred_check
      _
    $region67: #{patch_discriminator_forward.1} parent=1 // pred_check_branch
      %65 = sbr.rel (0) target = $region69
    $region68: #{patch_discriminator_forward.1} parent=1 // pred_region
      %66 = dma.done [#allocation3], 512
    $region69: #{patch_discriminator_forward.1} parent=1 // pred_fallthru
      _
    %v68 = vld [vmem:[%s0] sm:$0xf]
    %v69 = vld [vmem:[%s0 + $0x4] sm:$0xf]
    %v70 = vld [vmem:[%s0 + $0x8] sm:$0xf]
    %v71 = vld [vmem:[%s0 + $0xc] sm:$0xf]
    %v72 = vld [vmem:[%s0 + $0x10] sm:$0xf]
    %v73 = vld [vmem:[%s0 + $0x14] sm:$0xf]
    %v74 = vld [vmem:[%s0 + $0x18] sm:$0xf]
    %v75 = vld [vmem:[%s0 + $0x1c] sm:$0xf]
    %v76 = vld [vmem:[%s1] sm:$0xf]
    %v77 = vld [vmem:[%s1 + $0x4] sm:$0xf]
    %v78 = vld [vmem:[%s1 + $0x8] sm:$0xf]
    %v79 = vld [vmem:[%s1 + $0xc] sm:$0xf]
    %v84 = vunpack.c.l.b16 %v76
    %v85 = vunpack.c.l.b16 %v77
    %v86 = vunpack.c.l.b16 %v78
    %v87 = vunpack.c.l.b16 %v79
    %v88 = vpack.c.b16 %v85, %v84
    %v89 = vpack.c.b16 %v87, %v86
    %v98 = vunpack.c.l.b16 %v68
    %v99 = vunpack.c.l.b16 %v69
    %v100 = vunpack.c.l.b16 %v70
    %v101 = vunpack.c.l.b16 %v71
    %v102 = vunpack.c.l.b16 %v72
    %v103 = vunpack.c.l.b16 %v73
    %v104 = vunpack.c.l.b16 %v74
    %v105 = vunpack.c.l.b16 %v75
    %v106 = vpack.c.b16 %v99, %v98
    %v107 = vpack.c.b16 %v101, %v100
    %v108 = vpack.c.b16 %v103, %v102
    %v109 = vpack.c.b16 %v105, %v104
    %vm114 = vcmask 523264
    %v116 = vsel %vm114, %v88, 0
    %v119 = vsel %vm114, %v89, 0
    %121 = vmatprep.subr.bf16.mxu0 0
    %122 = vmatpush1.bf16.msra.mxu0 %v106
    %123 = vmatprep.subr.bf16.mxu0 0
    %124 = vmatpush1.bf16.msra.mxu0 %v107
    %125 = vmatprep.subr.bf16.mxu0 0
    %126 = vmatpush1.bf16.msra.mxu0 %v108
    %127 = vmatprep.subr.bf16.mxu0 0
    %128 = vmatpush1.bf16.msra.mxu0 %v109
    %129 = vmatprep.subr.bf16.mxu0 0
    %130 = vmatpush1.bf16.msra.mxu0 0
    %131 = vmatprep.subr.bf16.mxu0 0
    %132 = vmatpush1.bf16.msra.mxu0 0
    %133 = vmatprep.subr.bf16.mxu0 0
    %134 = vmatpush1.bf16.msra.mxu0 0
    %135 = vmatprep.subr.bf16.mxu0 0
    %136 = vmatpush1.bf16.msra.mxu0 0
    %137 = vmatprep.subr.bf16.mxu0 0
    %138 = vmatpush1.bf16.msra.mxu0 0
    %139 = vmatprep.subr.bf16.mxu0 0
    %140 = vmatpush1.bf16.msra.mxu0 0
    %141 = vmatprep.subr.bf16.mxu0 0
    %142 = vmatpush1.bf16.msra.mxu0 0
    %143 = vmatprep.subr.bf16.mxu0 0
    %144 = vmatpush1.bf16.msra.mxu0 0
    %145 = vmatprep.subr.bf16.mxu0 0
    %146 = vmatpush1.bf16.msra.mxu0 0
    %147 = vmatprep.subr.bf16.mxu0 0
    %148 = vmatpush1.bf16.msra.mxu0 0
    %149 = vmatprep.subr.bf16.mxu0 0
    %150 = vmatpush1.bf16.msra.mxu0 0
    %151 = vmatprep.subr.bf16.mxu0 0
    %152 = vmatpush1.bf16.msra.mxu0 0
    %153 = vmatprep.mubr.bf16.mxu0 0
    %154 = vmatmul.mubr.bf16.gmra.mrb[0].mxu0 %v116
    %v155 = vpop.f32.mrb[0].mxu0
    %v156 = vadd.f32 0.0, %v155
    %v157 = vpop.f32.mrb[0].mxu0
    %v158 = vpop.f32.mrb[0].mxu0
    %v159 = vadd.f32 0.0, %v158
    %v160 = vpop.f32.mrb[0].mxu0
    %161 = vmatprep.mubr.bf16.mxu0 0
    %162 = vmatmul.mubr.bf16.gmra.mrb[0].mxu0 %v119
    %v163 = vpop.f32.mrb[0].mxu0
    %v164 = vadd.f32 0.0, %v163
    %v165 = vpop.f32.mrb[0].mxu0
    %v166 = vpop.f32.mrb[0].mxu0
    %v167 = vadd.f32 0.0, %v166
    %v168 = vpop.f32.mrb[0].mxu0
    %169 = vdwg.mxu0
    %v170 = vpack.c.bf16 %v159, %v156
    %v171 = vpack.c.bf16 %v167, %v164
    %v172 = vld [vmem:[%s2] sm:$0xf]
    %v173 = vld [vmem:[%s2 + $0x4] sm:$0xf]
    %v174 = vld [vmem:[%s2 + $0x8] sm:$0xf]
    %v175 = vld [vmem:[%s2 + $0xc] sm:$0xf]
    %v176 = vld [vmem:[%s2 + $0x10] sm:$0xf]
    %v177 = vld [vmem:[%s2 + $0x14] sm:$0xf]
    %v178 = vld [vmem:[%s2 + $0x18] sm:$0xf]
    %v179 = vld [vmem:[%s2 + $0x1c] sm:$0xf]
    %v180 = vld [vmem:[%s2 + $0x20] sm:$0xf]
    %v181 = vld [vmem:[%s2 + $0x24] sm:$0xf]
    %v182 = vld [vmem:[%s2 + $0x28] sm:$0xf]
    %v183 = vld [vmem:[%s2 + $0x2c] sm:$0xf]
    %s184 = scalar_lea.vmem %s1, 16
    %v185 = vld [vmem:[%s184] sm:$0xf]
    %v186 = vld [vmem:[%s184 + $0x4] sm:$0xf]
    %v187 = vld [vmem:[%s184 + $0x8] sm:$0xf]
    %v188 = vld [vmem:[%s184 + $0xc] sm:$0xf]
    %v193 = vunpack.c.l.b16 %v185
    %v194 = vunpack.c.l.b16 %v186
    %v195 = vunpack.c.l.b16 %v187
    %v196 = vunpack.c.l.b16 %v188
    %v197 = vpack.c.b16 %v194, %v193
    %v198 = vpack.c.b16 %v196, %v195
    %v200 = vsel %vm114, %v197, 0
    %v203 = vsel %vm114, %v198, 0
    %205 = vmatprep.subr.bf16.mxu0 0
    %206 = vmatpush1.bf16.msra.mxu0 %v106
    %207 = vmatprep.subr.bf16.mxu0 0
    %208 = vmatpush1.bf16.msra.mxu0 %v107
    %209 = vmatprep.subr.bf16.mxu0 0
    %210 = vmatpush1.bf16.msra.mxu0 %v108
    %211 = vmatprep.subr.bf16.mxu0 0
    %212 = vmatpush1.bf16.msra.mxu0 %v109
    %213 = vmatprep.subr.bf16.mxu0 0
    %214 = vmatpush1.bf16.msra.mxu0 0
    %215 = vmatprep.subr.bf16.mxu0 0
    %216 = vmatpush1.bf16.msra.mxu0 0
    %217 = vmatprep.subr.bf16.mxu0 0
    %218 = vmatpush1.bf16.msra.mxu0 0
    %219 = vmatprep.subr.bf16.mxu0 0
    %220 = vmatpush1.bf16.msra.mxu0 0
    %221 = vmatprep.subr.bf16.mxu0 0
    %222 = vmatpush1.bf16.msra.mxu0 0
    %223 = vmatprep.subr.bf16.mxu0 0
    %224 = vmatpush1.bf16.msra.mxu0 0
    %225 = vmatprep.subr.bf16.mxu0 0
    %226 = vmatpush1.bf16.msra.mxu0 0
    %227 = vmatprep.subr.bf16.mxu0 0
    %228 = vmatpush1.bf16.msra.mxu0 0
    %229 = vmatprep.subr.bf16.mxu0 0
    %230 = vmatpush1.bf16.msra.mxu0 0
    %231 = vmatprep.subr.bf16.mxu0 0
    %232 = vmatpush1.bf16.msra.mxu0 0
    %233 = vmatprep.subr.bf16.mxu0 0
    %234 = vmatpush1.bf16.msra.mxu0 0
    %235 = vmatprep.subr.bf16.mxu0 0
    %236 = vmatpush1.bf16.msra.mxu0 0
    %237 = vmatprep.mubr.bf16.mxu0 0
    %238 = vmatmul.mubr.bf16.gmra.mrb[0].mxu0 %v200
    %v239 = vpop.f32.mrb[0].mxu0
    %v240 = vadd.f32 0.0, %v239
    %v241 = vpop.f32.mrb[0].mxu0
    %v242 = vpop.f32.mrb[0].mxu0
    %v243 = vadd.f32 0.0, %v242
    %v244 = vpop.f32.mrb[0].mxu0
    %245 = vmatprep.mubr.bf16.mxu0 0
    %246 = vmatmul.mubr.bf16.gmra.mrb[0].mxu0 %v203
    %v247 = vpop.f32.mrb[0].mxu0
    %v248 = vadd.f32 0.0, %v247
    %v249 = vpop.f32.mrb[0].mxu0
    %v250 = vpop.f32.mrb[0].mxu0
    %v251 = vadd.f32 0.0, %v250
    %v252 = vpop.f32.mrb[0].mxu0
    %253 = vdwg.mxu0
    %v254 = vpack.c.bf16 %v243, %v240
    %v255 = vpack.c.bf16 %v251, %v248
    %s256 = scalar_lea.vmem %s2, 48
    %v257 = vld [vmem:[%s256] sm:$0xf]
    %v258 = vld [vmem:[%s256 + $0x4] sm:$0xf]
    %v259 = vld [vmem:[%s256 + $0x8] sm:$0xf]
    %v260 = vld [vmem:[%s256 + $0xc] sm:$0xf]
    %v261 = vld [vmem:[%s256 + $0x10] sm:$0xf]
    %v262 = vld [vmem:[%s256 + $0x14] sm:$0xf]
    %v263 = vld [vmem:[%s256 + $0x18] sm:$0xf]
    %v264 = vld [vmem:[%s256 + $0x1c] sm:$0xf]
    %v265 = vld [vmem:[%s256 + $0x20] sm:$0xf]
    %v266 = vld [vmem:[%s256 + $0x24] sm:$0xf]
    %v267 = vld [vmem:[%s256 + $0x28] sm:$0xf]
    %v268 = vld [vmem:[%s256 + $0x2c] sm:$0xf]
    %v281 = vunpack.c.l.b16 %v257
    %v282 = vunpack.c.l.b16 %v258
    %v283 = vunpack.c.l.b16 %v259
    %v284 = vunpack.c.l.b16 %v260
    %v285 = vunpack.c.l.b16 %v261
    %v286 = vunpack.c.l.b16 %v262
    %v287 = vunpack.c.l.b16 %v263
    %v288 = vunpack.c.l.b16 %v264
    %v289 = vunpack.c.l.b16 %v265
    %v290 = vunpack.c.l.b16 %v266
    %v291 = vunpack.c.l.b16 %v267
    %v292 = vunpack.c.l.b16 %v268
    %v293 = vpack.c.b16 %v282, %v281
    %v294 = vpack.c.b16 %v284, %v283
    %v295 = vpack.c.b16 %v286, %v285
    %v296 = vpack.c.b16 %v288, %v287
    %v297 = vpack.c.b16 %v290, %v289
    %v298 = vpack.c.b16 %v292, %v291
    %vm305 = vcmask 785408
    %v307 = vsel %vm305, %v254, 0
    %v310 = vsel %vm305, %v255, 0
    %312 = vmatprep.subr.bf16.mxu0 0
    %313 = vmatpush1.bf16.msra.mxu0 %v293
    %314 = vmatprep.subr.bf16.mxu0 0
    %315 = vmatpush1.bf16.msra.mxu0 %v294
    %316 = vmatprep.subr.bf16.mxu0 0
    %317 = vmatpush1.bf16.msra.mxu0 %v295
    %318 = vmatprep.subr.bf16.mxu0 0
    %319 = vmatpush1.bf16.msra.mxu0 %v296
    %320 = vmatprep.subr.bf16.mxu0 0
    %321 = vmatpush1.bf16.msra.mxu0 %v297
    %322 = vmatprep.subr.bf16.mxu0 0
    %323 = vmatpush1.bf16.msra.mxu0 %v298
    %324 = vmatprep.subr.bf16.mxu0 0
    %325 = vmatpush1.bf16.msra.mxu0 0
    %326 = vmatprep.subr.bf16.mxu0 0
    %327 = vmatpush1.bf16.msra.mxu0 0
    %328 = vmatprep.subr.bf16.mxu0 0
    %329 = vmatpush1.bf16.msra.mxu0 0
    %330 = vmatprep.subr.bf16.mxu0 0
    %331 = vmatpush1.bf16.msra.mxu0 0
    %332 = vmatprep.subr.bf16.mxu0 0
    %333 = vmatpush1.bf16.msra.mxu0 0
    %334 = vmatprep.subr.bf16.mxu0 0
    %335 = vmatpush1.bf16.msra.mxu0 0
    %336 = vmatprep.subr.bf16.mxu0 0
    %337 = vmatpush1.bf16.msra.mxu0 0
    %338 = vmatprep.subr.bf16.mxu0 0
    %339 = vmatpush1.bf16.msra.mxu0 0
    %340 = vmatprep.subr.bf16.mxu0 0
    %341 = vmatpush1.bf16.msra.mxu0 0
    %342 = vmatprep.subr.bf16.mxu0 0
    %343 = vmatpush1.bf16.msra.mxu0 0
    %344 = vmatprep.mubr.bf16.mxu0 0
    %345 = vmatmul.mubr.bf16.gmra.mrb[0].mxu0 %v307
    %v346 = vpop.f32.mrb[0].mxu0
    %v347 = vadd.f32 0.0, %v346
    %v348 = vpop.f32.mrb[0].mxu0
    %v349 = vpop.f32.mrb[0].mxu0
    %v350 = vadd.f32 0.0, %v349
    %v351 = vpop.f32.mrb[0].mxu0
    %352 = vmatprep.mubr.bf16.mxu0 0
    %353 = vmatmul.mubr.bf16.gmra.mrb[0].mxu0 %v310
    %v354 = vpop.f32.mrb[0].mxu0
    %v355 = vadd.f32 0.0, %v354
    %v356 = vpop.f32.mrb[0].mxu0
    %v357 = vpop.f32.mrb[0].mxu0
    %v358 = vadd.f32 0.0, %v357
    %v359 = vpop.f32.mrb[0].mxu0
    %360 = vdwg.mxu0
    %v373 = vunpack.c.l.b16 %v172
    %v374 = vunpack.c.l.b16 %v173
    %v375 = vunpack.c.l.b16 %v174
    %v376 = vunpack.c.l.b16 %v175
    %v377 = vunpack.c.l.b16 %v176
    %v378 = vunpack.c.l.b16 %v177
    %v379 = vunpack.c.l.b16 %v178
    %v380 = vunpack.c.l.b16 %v179
    %v381 = vunpack.c.l.b16 %v180
    %v382 = vunpack.c.l.b16 %v181
    %v383 = vunpack.c.l.b16 %v182
    %v384 = vunpack.c.l.b16 %v183
    %v385 = vpack.c.b16 %v374, %v373
    %v386 = vpack.c.b16 %v376, %v375
    %v387 = vpack.c.b16 %v378, %v377
    %v388 = vpack.c.b16 %v380, %v379
    %v389 = vpack.c.b16 %v382, %v381
    %v390 = vpack.c.b16 %v384, %v383
    %v398 = vsel %vm305, %v170, 0
    %v401 = vsel %vm305, %v171, 0
    %403 = vmatprep.subr.bf16.mxu0 0
    %404 = vmatpush1.bf16.msra.mxu0 %v385
    %405 = vmatprep.subr.bf16.mxu0 0
    %406 = vmatpush1.bf16.msra.mxu0 %v386
    %407 = vmatprep.subr.bf16.mxu0 0
    %408 = vmatpush1.bf16.msra.mxu0 %v387
    %409 = vmatprep.subr.bf16.mxu0 0
    %410 = vmatpush1.bf16.msra.mxu0 %v388
    %411 = vmatprep.subr.bf16.mxu0 0
    %412 = vmatpush1.bf16.msra.mxu0 %v389
    %413 = vmatprep.subr.bf16.mxu0 0
    %414 = vmatpush1.bf16.msra.mxu0 %v390
    %415 = vmatprep.subr.bf16.mxu0 0
    %416 = vmatpush1.bf16.msra.mxu0 0
    %417 = vmatprep.subr.bf16.mxu0 0
    %418 = vmatpush1.bf16.msra.mxu0 0
    %419 = vmatprep.subr.bf16.mxu0 0
    %420 = vmatpush1.bf16.msra.mxu0 0
    %421 = vmatprep.subr.bf16.mxu0 0
    %422 = vmatpush1.bf16.msra.mxu0 0
    %423 = vmatprep.subr.bf16.mxu0 0
    %424 = vmatpush1.bf16.msra.mxu0 0
    %425 = vmatprep.subr.bf16.mxu0 0
    %426 = vmatpush1.bf16.msra.mxu0 0
    %427 = vmatprep.subr.bf16.mxu0 0
    %428 = vmatpush1.bf16.msra.mxu0 0
    %429 = vmatprep.subr.bf16.mxu0 0
    %430 = vmatpush1.bf16.msra.mxu0 0
    %431 = vmatprep.subr.bf16.mxu0 0
    %432 = vmatpush1.bf16.msra.mxu0 0
    %433 = vmatprep.subr.bf16.mxu0 0
    %434 = vmatpush1.bf16.msra.mxu0 0
    %435 = vmatprep.mubr.bf16.mxu0 0
    %436 = vmatmul.mubr.bf16.gmra.mrb[0].mxu0 %v398
    %v437 = vpop.f32.mrb[0].mxu0
    %v438 = vadd.f32 %v347, %v437
    %v439 = vpop.f32.mrb[0].mxu0
    %v440 = vpop.f32.mrb[0].mxu0
    %v441 = vadd.f32 %v350, %v440
    %v442 = vpop.f32.mrb[0].mxu0
    %443 = vmatprep.mubr.bf16.mxu0 0
    %444 = vmatmul.mubr.bf16.gmra.mrb[0].mxu0 %v401
    %v445 = vpop.f32.mrb[0].mxu0
    %v446 = vadd.f32 %v355, %v445
    %v447 = vpop.f32.mrb[0].mxu0
    %v448 = vpop.f32.mrb[0].mxu0
    %v449 = vadd.f32 %v358, %v448
    %v450 = vpop.f32.mrb[0].mxu0
    %451 = vdwg.mxu0
    %s452 = scalar_lea.vmem %s1, 32
    %v453 = vld [vmem:[%s452] sm:$0xf]
    %v454 = vld [vmem:[%s452 + $0x4] sm:$0xf]
    %v455 = vld [vmem:[%s452 + $0x8] sm:$0xf]
    %v456 = vld [vmem:[%s452 + $0xc] sm:$0xf]
    %v461 = vunpack.c.l.b16 %v453
    %v462 = vunpack.c.l.b16 %v454
    %v463 = vunpack.c.l.b16 %v455
    %v464 = vunpack.c.l.b16 %v456
    %v465 = vpack.c.b16 %v462, %v461
    %v466 = vpack.c.b16 %v464, %v463
    %v468 = vsel %vm114, %v465, 0
    %v471 = vsel %vm114, %v466, 0
    %473 = vmatprep.subr.bf16.mxu0 0
    %474 = vmatpush1.bf16.msra.mxu0 %v106
    %475 = vmatprep.subr.bf16.mxu0 0
    %476 = vmatpush1.bf16.msra.mxu0 %v107
    %477 = vmatprep.subr.bf16.mxu0 0
    %478 = vmatpush1.bf16.msra.mxu0 %v108
    %479 = vmatprep.subr.bf16.mxu0 0
    %480 = vmatpush1.bf16.msra.mxu0 %v109
    %481 = vmatprep.subr.bf16.mxu0 0
    %482 = vmatpush1.bf16.msra.mxu0 0
    %483 = vmatprep.subr.bf16.mxu0 0
    %484 = vmatpush1.bf16.msra.mxu0 0
    %485 = vmatprep.subr.bf16.mxu0 0
    %486 = vmatpush1.bf16.msra.mxu0 0
    %487 = vmatprep.subr.bf16.mxu0 0
    %488 = vmatpush1.bf16.msra.mxu0 0
    %489 = vmatprep.subr.bf16.mxu0 0
    %490 = vmatpush1.bf16.msra.mxu0 0
    %491 = vmatprep.subr.bf16.mxu0 0
    %492 = vmatpush1.bf16.msra.mxu0 0
    %493 = vmatprep.subr.bf16.mxu0 0
    %494 = vmatpush1.bf16.msra.mxu0 0
    %495 = vmatprep.subr.bf16.mxu0 0
    %496 = vmatpush1.bf16.msra.mxu0 0
    %497 = vmatprep.subr.bf16.mxu0 0
    %498 = vmatpush1.bf16.msra.mxu0 0
    %499 = vmatprep.subr.bf16.mxu0 0
    %500 = vmatpush1.bf16.msra.mxu0 0
    %501 = vmatprep.subr.bf16.mxu0 0
    %502 = vmatpush1.bf16.msra.mxu0 0
    %503 = vmatprep.subr.bf16.mxu0 0
    %504 = vmatpush1.bf16.msra.mxu0 0
    %505 = vmatprep.mubr.bf16.mxu0 0
    %506 = vmatmul.mubr.bf16.gmra.mrb[0].mxu0 %v468
    %v507 = vpop.f32.mrb[0].mxu0
    %v508 = vadd.f32 0.0, %v507
    %v509 = vpop.f32.mrb[0].mxu0
    %v510 = vpop.f32.mrb[0].mxu0
    %v511 = vadd.f32 0.0, %v510
    %v512 = vpop.f32.mrb[0].mxu0
    %513 = vmatprep.mubr.bf16.mxu0 0
    %514 = vmatmul.mubr.bf16.gmra.mrb[0].mxu0 %v471
    %v515 = vpop.f32.mrb[0].mxu0
    %v516 = vadd.f32 0.0, %v515
    %v517 = vpop.f32.mrb[0].mxu0
    %v518 = vpop.f32.mrb[0].mxu0
    %v519 = vadd.f32 0.0, %v518
    %v520 = vpop.f32.mrb[0].mxu0
    %521 = vdwg.mxu0
    %v522 = vpack.c.bf16 %v511, %v508
    %v523 = vpack.c.bf16 %v519, %v516
    %s524 = scalar_lea.vmem %s2, 96
    %v525 = vld [vmem:[%s524] sm:$0xf]
    %v526 = vld [vmem:[%s524 + $0x4] sm:$0xf]
    %v527 = vld [vmem:[%s524 + $0x8] sm:$0xf]
    %v528 = vld [vmem:[%s524 + $0xc] sm:$0xf]
    %v529 = vld [vmem:[%s524 + $0x10] sm:$0xf]
    %v530 = vld [vmem:[%s524 + $0x14] sm:$0xf]
    %v531 = vld [vmem:[%s524 + $0x18] sm:$0xf]
    %v532 = vld [vmem:[%s524 + $0x1c] sm:$0xf]
    %v533 = vld [vmem:[%s524 + $0x20] sm:$0xf]
    %v534 = vld [vmem:[%s524 + $0x24] sm:$0xf]
    %v535 = vld [vmem:[%s524 + $0x28] sm:$0xf]
    %v536 = vld [vmem:[%s524 + $0x2c] sm:$0xf]
    %v549 = vunpack.c.l.b16 %v525
    %v550 = vunpack.c.l.b16 %v526
    %v551 = vunpack.c.l.b16 %v527
    %v552 = vunpack.c.l.b16 %v528
    %v553 = vunpack.c.l.b16 %v529
    %v554 = vunpack.c.l.b16 %v530
    %v555 = vunpack.c.l.b16 %v531
    %v556 = vunpack.c.l.b16 %v532
    %v557 = vunpack.c.l.b16 %v533
    %v558 = vunpack.c.l.b16 %v534
    %v559 = vunpack.c.l.b16 %v535
    %v560 = vunpack.c.l.b16 %v536
    %v561 = vpack.c.b16 %v550, %v549
    %v562 = vpack.c.b16 %v552, %v551
    %v563 = vpack.c.b16 %v554, %v553
    %v564 = vpack.c.b16 %v556, %v555
    %v565 = vpack.c.b16 %v558, %v557
    %v566 = vpack.c.b16 %v560, %v559
    %v574 = vsel %vm305, %v522, 0
    %v577 = vsel %vm305, %v523, 0
    %579 = vmatprep.subr.bf16.mxu0 0
    %580 = vmatpush1.bf16.msra.mxu0 %v561
    %581 = vmatprep.subr.bf16.mxu0 0
    %582 = vmatpush1.bf16.msra.mxu0 %v562
    %583 = vmatprep.subr.bf16.mxu0 0
    %584 = vmatpush1.bf16.msra.mxu0 %v563
    %585 = vmatprep.subr.bf16.mxu0 0
    %586 = vmatpush1.bf16.msra.mxu0 %v564
    %587 = vmatprep.subr.bf16.mxu0 0
    %588 = vmatpush1.bf16.msra.mxu0 %v565
    %589 = vmatprep.subr.bf16.mxu0 0
    %590 = vmatpush1.bf16.msra.mxu0 %v566
    %591 = vmatprep.subr.bf16.mxu0 0
    %592 = vmatpush1.bf16.msra.mxu0 0
    %593 = vmatprep.subr.bf16.mxu0 0
    %594 = vmatpush1.bf16.msra.mxu0 0
    %595 = vmatprep.subr.bf16.mxu0 0
    %596 = vmatpush1.bf16.msra.mxu0 0
    %597 = vmatprep.subr.bf16.mxu0 0
    %598 = vmatpush1.bf16.msra.mxu0 0
    %599 = vmatprep.subr.bf16.mxu0 0
    %600 = vmatpush1.bf16.msra.mxu0 0
    %601 = vmatprep.subr.bf16.mxu0 0
    %602 = vmatpush1.bf16.msra.mxu0 0
    %603 = vmatprep.subr.bf16.mxu0 0
    %604 = vmatpush1.bf16.msra.mxu0 0
    %605 = vmatprep.subr.bf16.mxu0 0
    %606 = vmatpush1.bf16.msra.mxu0 0
    %607 = vmatprep.subr.bf16.mxu0 0
    %608 = vmatpush1.bf16.msra.mxu0 0
    %609 = vmatprep.subr.bf16.mxu0 0
    %610 = vmatpush1.bf16.msra.mxu0 0
    %611 = vmatprep.mubr.bf16.mxu0 0
    %612 = vmatmul.mubr.bf16.gmra.mrb[0].mxu0 %v574
    %v613 = vpop.f32.mrb[0].mxu0
    %v614 = vadd.f32 0.0, %v613
    %v615 = vpop.f32.mrb[0].mxu0
    %v616 = vpop.f32.mrb[0].mxu0
    %v617 = vadd.f32 0.0, %v616
    %v618 = vpop.f32.mrb[0].mxu0
    %619 = vmatprep.mubr.bf16.mxu0 0
    %620 = vmatmul.mubr.bf16.gmra.mrb[0].mxu0 %v577
    %v621 = vpop.f32.mrb[0].mxu0
    %v622 = vadd.f32 0.0, %v621
    %v623 = vpop.f32.mrb[0].mxu0
    %v624 = vpop.f32.mrb[0].mxu0
    %v625 = vadd.f32 0.0, %v624
    %v626 = vpop.f32.mrb[0].mxu0
    %627 = vdwg.mxu0
    %v628 = vadd.f32 %v438, %v614
    %v629 = vadd.f32 %v441, %v617
    %v630 = vadd.f32 %v446, %v622
    %v631 = vadd.f32 %v449, %v625
    %s632 = scalar_lea.vmem %s1, 48
    %v633 = vld [vmem:[%s632] sm:$0xf]
    %v634 = vld [vmem:[%s632 + $0x4] sm:$0xf]
    %v635 = vld [vmem:[%s632 + $0x8] sm:$0xf]
    %v636 = vld [vmem:[%s632 + $0xc] sm:$0xf]
    %v641 = vunpack.c.l.b16 %v633
    %v642 = vunpack.c.l.b16 %v634
    %v643 = vunpack.c.l.b16 %v635
    %v644 = vunpack.c.l.b16 %v636
    %v645 = vpack.c.b16 %v642, %v641
    %v646 = vpack.c.b16 %v644, %v643
    %v648 = vsel %vm114, %v645, 0
    %v651 = vsel %vm114, %v646, 0
    %653 = vmatprep.subr.bf16.mxu0 0
    %654 = vmatpush1.bf16.msra.mxu0 %v106
    %655 = vmatprep.subr.bf16.mxu0 0
    %656 = vmatpush1.bf16.msra.mxu0 %v107
    %657 = vmatprep.subr.bf16.mxu0 0
    %658 = vmatpush1.bf16.msra.mxu0 %v108
    %659 = vmatprep.subr.bf16.mxu0 0
    %660 = vmatpush1.bf16.msra.mxu0 %v109
    %661 = vmatprep.subr.bf16.mxu0 0
    %662 = vmatpush1.bf16.msra.mxu0 0
    %663 = vmatprep.subr.bf16.mxu0 0
    %664 = vmatpush1.bf16.msra.mxu0 0
    %665 = vmatprep.subr.bf16.mxu0 0
    %666 = vmatpush1.bf16.msra.mxu0 0
    %667 = vmatprep.subr.bf16.mxu0 0
    %668 = vmatpush1.bf16.msra.mxu0 0
    %669 = vmatprep.subr.bf16.mxu0 0
    %670 = vmatpush1.bf16.msra.mxu0 0
    %671 = vmatprep.subr.bf16.mxu0 0
    %672 = vmatpush1.bf16.msra.mxu0 0
    %673 = vmatprep.subr.bf16.mxu0 0
    %674 = vmatpush1.bf16.msra.mxu0 0
    %675 = vmatprep.subr.bf16.mxu0 0
    %676 = vmatpush1.bf16.msra.mxu0 0
    %677 = vmatprep.subr.bf16.mxu0 0
    %678 = vmatpush1.bf16.msra.mxu0 0
    %679 = vmatprep.subr.bf16.mxu0 0
    %680 = vmatpush1.bf16.msra.mxu0 0
    %681 = vmatprep.subr.bf16.mxu0 0
    %682 = vmatpush1.bf16.msra.mxu0 0
    %683 = vmatprep.subr.bf16.mxu0 0
    %684 = vmatpush1.bf16.msra.mxu0 0
    %685 = vmatprep.mubr.bf16.mxu0 0
    %686 = vmatmul.mubr.bf16.gmra.mrb[0].mxu0 %v648
    %v687 = vpop.f32.mrb[0].mxu0
    %v688 = vadd.f32 0.0, %v687
    %v689 = vpop.f32.mrb[0].mxu0
    %v690 = vpop.f32.mrb[0].mxu0
    %v691 = vadd.f32 0.0, %v690
    %v692 = vpop.f32.mrb[0].mxu0
    %693 = vmatprep.mubr.bf16.mxu0 0
    %694 = vmatmul.mubr.bf16.gmra.mrb[0].mxu0 %v651
    %v695 = vpop.f32.mrb[0].mxu0
    %v696 = vadd.f32 0.0, %v695
    %v697 = vpop.f32.mrb[0].mxu0
    %v698 = vpop.f32.mrb[0].mxu0
    %v699 = vadd.f32 0.0, %v698
    %v700 = vpop.f32.mrb[0].mxu0
    %701 = vdwg.mxu0
    %v702 = vpack.c.bf16 %v691, %v688
    %v703 = vpack.c.bf16 %v699, %v696
    %s704 = scalar_lea.vmem %s2, 144
    %v705 = vld [vmem:[%s704] sm:$0xf]
    %v706 = vld [vmem:[%s704 + $0x4] sm:$0xf]
    %v707 = vld [vmem:[%s704 + $0x8] sm:$0xf]
    %v708 = vld [vmem:[%s704 + $0xc] sm:$0xf]
    %v709 = vld [vmem:[%s704 + $0x10] sm:$0xf]
    %v710 = vld [vmem:[%s704 + $0x14] sm:$0xf]
    %v711 = vld [vmem:[%s704 + $0x18] sm:$0xf]
    %v712 = vld [vmem:[%s704 + $0x1c] sm:$0xf]
    %v713 = vld [vmem:[%s704 + $0x20] sm:$0xf]
    %v714 = vld [vmem:[%s704 + $0x24] sm:$0xf]
    %v715 = vld [vmem:[%s704 + $0x28] sm:$0xf]
    %v716 = vld [vmem:[%s704 + $0x2c] sm:$0xf]
    %v729 = vunpack.c.l.b16 %v705
    %v730 = vunpack.c.l.b16 %v706
    %v731 = vunpack.c.l.b16 %v707
    %v732 = vunpack.c.l.b16 %v708
    %v733 = vunpack.c.l.b16 %v709
    %v734 = vunpack.c.l.b16 %v710
    %v735 = vunpack.c.l.b16 %v711
    %v736 = vunpack.c.l.b16 %v712
    %v737 = vunpack.c.l.b16 %v713
    %v738 = vunpack.c.l.b16 %v714
    %v739 = vunpack.c.l.b16 %v715
    %v740 = vunpack.c.l.b16 %v716
    %v741 = vpack.c.b16 %v730, %v729
    %v742 = vpack.c.b16 %v732, %v731
    %v743 = vpack.c.b16 %v734, %v733
    %v744 = vpack.c.b16 %v736, %v735
    %v745 = vpack.c.b16 %v738, %v737
    %v746 = vpack.c.b16 %v740, %v739
    %v754 = vsel %vm305, %v702, 0
    %v757 = vsel %vm305, %v703, 0
    %759 = vmatprep.subr.bf16.mxu0 0
    %760 = vmatpush1.bf16.msra.mxu0 %v741
    %761 = vmatprep.subr.bf16.mxu0 0
    %762 = vmatpush1.bf16.msra.mxu0 %v742
    %763 = vmatprep.subr.bf16.mxu0 0
    %764 = vmatpush1.bf16.msra.mxu0 %v743
    %765 = vmatprep.subr.bf16.mxu0 0
    %766 = vmatpush1.bf16.msra.mxu0 %v744
    %767 = vmatprep.subr.bf16.mxu0 0
    %768 = vmatpush1.bf16.msra.mxu0 %v745
    %769 = vmatprep.subr.bf16.mxu0 0
    %770 = vmatpush1.bf16.msra.mxu0 %v746
    %771 = vmatprep.subr.bf16.mxu0 0
    %772 = vmatpush1.bf16.msra.mxu0 0
    %773 = vmatprep.subr.bf16.mxu0 0
    %774 = vmatpush1.bf16.msra.mxu0 0
    %775 = vmatprep.subr.bf16.mxu0 0
    %776 = vmatpush1.bf16.msra.mxu0 0
    %777 = vmatprep.subr.bf16.mxu0 0
    %778 = vmatpush1.bf16.msra.mxu0 0
    %779 = vmatprep.subr.bf16.mxu0 0
    %780 = vmatpush1.bf16.msra.mxu0 0
    %781 = vmatprep.subr.bf16.mxu0 0
    %782 = vmatpush1.bf16.msra.mxu0 0
    %783 = vmatprep.subr.bf16.mxu0 0
    %784 = vmatpush1.bf16.msra.mxu0 0
    %785 = vmatprep.subr.bf16.mxu0 0
    %786 = vmatpush1.bf16.msra.mxu0 0
    %787 = vmatprep.subr.bf16.mxu0 0
    %788 = vmatpush1.bf16.msra.mxu0 0
    %789 = vmatprep.subr.bf16.mxu0 0
    %790 = vmatpush1.bf16.msra.mxu0 0
    %791 = vmatprep.mubr.bf16.mxu0 0
    %792 = vmatmul.mubr.bf16.gmra.mrb[0].mxu0 %v754
    %v793 = vpop.f32.mrb[0].mxu0
    %v794 = vadd.f32 0.0, %v793
    %v795 = vpop.f32.mrb[0].mxu0
    %v796 = vpop.f32.mrb[0].mxu0
    %v797 = vadd.f32 0.0, %v796
    %v798 = vpop.f32.mrb[0].mxu0
    %799 = vmatprep.mubr.bf16.mxu0 0
    %800 = vmatmul.mubr.bf16.gmra.mrb[0].mxu0 %v757
    %v801 = vpop.f32.mrb[0].mxu0
    %v802 = vadd.f32 0.0, %v801
    %v803 = vpop.f32.mrb[0].mxu0
    %v804 = vpop.f32.mrb[0].mxu0
    %v805 = vadd.f32 0.0, %v804
    %v806 = vpop.f32.mrb[0].mxu0
    %807 = vdwg.mxu0
    %v808 = vadd.f32 %v628, %v794
    %v809 = vadd.f32 %v629, %v797
    %v810 = vadd.f32 %v630, %v802
    %v811 = vadd.f32 %v631, %v805
    %v812 = vld [vmem:[%s3] sm:$0x1]
    %v814 = vlaneseq
    %v815 = vshrl.u32 %v814, 7
    %v816 = vsub.s32 0, %v815
    %v817 = vrot.slane %v812, %v816
    %v819 = vadd.f32 %v808, %v817
    %v820 = vadd.f32 %v809, %v817
    %v821 = vadd.f32 %v810, %v817
    %v822 = vadd.f32 %v811, %v817
    %vm823 = vcmp.ge.f32.partialorder %v819, 0.0
    %vm824 = vcmp.ge.f32.partialorder %v820, 0.0
    %vm825 = vcmp.ge.f32.partialorder %v821, 0.0
    %vm826 = vcmp.ge.f32.partialorder %v822, 0.0
    %v827 = vmul.f32 %v819, 0.2
    %v828 = vmul.f32 %v820, 0.2
    %v829 = vmul.f32 %v821, 0.2
    %v830 = vmul.f32 %v822, 0.2
    %v831 = vsel %vm823, %v819, %v827
    %v832 = vsel %vm824, %v820, %v828
    %v833 = vsel %vm825, %v821, %v829
    %v834 = vsel %vm826, %v822, %v830
    %v835 = vpack.c.bf16 %v832, %v831
    %v836 = vpack.c.bf16 %v834, %v833
    %v837 = vld [vmem:[#allocation2] sm:$0xf]
    %v838 = vld [vmem:[#allocation2 + $0x4] sm:$0xf]
    %v841 = vunpack.c.l.b16 %v837
    %v842 = vunpack.c.l.b16 %v838
    %v843 = vpack.c.b16 %v842, %v841
    %vm844 = vcmask 261120
    %v846 = vsel %vm844, %v843, 0
    %848 = vmatprep.subr.bf16.mxu0 0
    %849 = vmatpush1.bf16.msra.mxu0 %v835
    %850 = vmatprep.subr.bf16.mxu0 0
    %851 = vmatpush1.bf16.msra.mxu0 %v836
    %852 = vmatprep.subr.bf16.mxu0 0
    %853 = vmatpush1.bf16.msra.mxu0 0
    %854 = vmatprep.subr.bf16.mxu0 0
    %855 = vmatpush1.bf16.msra.mxu0 0
    %856 = vmatprep.subr.bf16.mxu0 0
    %857 = vmatpush1.bf16.msra.mxu0 0
    %858 = vmatprep.subr.bf16.mxu0 0
    %859 = vmatpush1.bf16.msra.mxu0 0
    %860 = vmatprep.subr.bf16.mxu0 0
    %861 = vmatpush1.bf16.msra.mxu0 0
    %862 = vmatprep.subr.bf16.mxu0 0
    %863 = vmatpush1.bf16.msra.mxu0 0
    %864 = vmatprep.subr.bf16.mxu0 0
    %865 = vmatpush1.bf16.msra.mxu0 0
    %866 = vmatprep.subr.bf16.mxu0 0
    %867 = vmatpush1.bf16.msra.mxu0 0
    %868 = vmatprep.subr.bf16.mxu0 0
    %869 = vmatpush1.bf16.msra.mxu0 0
    %870 = vmatprep.subr.bf16.mxu0 0
    %871 = vmatpush1.bf16.msra.mxu0 0
    %872 = vmatprep.subr.bf16.mxu0 0
    %873 = vmatpush1.bf16.msra.mxu0 0
    %874 = vmatprep.subr.bf16.mxu0 0
    %875 = vmatpush1.bf16.msra.mxu0 0
    %876 = vmatprep.subr.bf16.mxu0 0
    %877 = vmatpush1.bf16.msra.mxu0 0
    %878 = vmatprep.subr.bf16.mxu0 0
    %879 = vmatpush1.bf16.msra.mxu0 0
    %880 = vmatprep.mubr.bf16.mxu0 0
    %881 = vmatmul.mubr.bf16.gmra.mrb[0].mxu0 %v846
    %v882 = vpop.f32.mrb[0].mxu0
    %v883 = vadd.f32 0.0, %v882
    %v884 = vpop.f32.mrb[0].mxu0
    %v885 = vpop.f32.mrb[0].mxu0
    %v886 = vadd.f32 0.0, %v885
    %v887 = vpop.f32.mrb[0].mxu0
    %888 = vdwg.mxu0
    %v889 = vpack.c.bf16 %v886, %v883
    %v890 = vld [vmem:[%s5] sm:$0xf]
    %v891 = vld [vmem:[%s5 + $0x4] sm:$0xf]
    %v892 = vld [vmem:[%s5 + $0x8] sm:$0xf]
    %v893 = vld [vmem:[%s5 + $0xc] sm:$0xf]
    %v894 = vld [vmem:[%s5 + $0x10] sm:$0xf]
    %v895 = vld [vmem:[%s5 + $0x14] sm:$0xf]
    %v896 = vld [vmem:[%s5 + $0x18] sm:$0xf]
    %v897 = vld [vmem:[%s5 + $0x1c] sm:$0xf]
    %v898 = vld [vmem:[%s5 + $0x20] sm:$0xf]
    %v899 = vld [vmem:[%s5 + $0x24] sm:$0xf]
    %v900 = vld [vmem:[%s5 + $0x28] sm:$0xf]
    %v901 = vld [vmem:[%s5 + $0x2c] sm:$0xf]
    %v902 = vld [vmem:[%s5 + $0x30] sm:$0xf]
    %v903 = vld [vmem:[%s5 + $0x34] sm:$0xf]
    %v904 = vld [vmem:[%s5 + $0x38] sm:$0xf]
    %v905 = vld [vmem:[%s5 + $0x3c] sm:$0xf]
    %s906 = scalar_lea.vmem [#allocation2], 8
    %v907 = vld [vmem:[%s906] sm:$0xf]
    %v908 = vld [vmem:[%s906 + $0x4] sm:$0xf]
    %v911 = vunpack.c.l.b16 %v907
    %v912 = vunpack.c.l.b16 %v908
    %v913 = vpack.c.b16 %v912, %v911
    %v915 = vsel %vm844, %v913, 0
    %917 = vmatprep.subr.bf16.mxu0 0
    %918 = vmatpush1.bf16.msra.mxu0 %v835
    %919 = vmatprep.subr.bf16.mxu0 0
    %920 = vmatpush1.bf16.msra.mxu0 %v836
    %921 = vmatprep.subr.bf16.mxu0 0
    %922 = vmatpush1.bf16.msra.mxu0 0
    %923 = vmatprep.subr.bf16.mxu0 0
    %924 = vmatpush1.bf16.msra.mxu0 0
    %925 = vmatprep.subr.bf16.mxu0 0
    %926 = vmatpush1.bf16.msra.mxu0 0
    %927 = vmatprep.subr.bf16.mxu0 0
    %928 = vmatpush1.bf16.msra.mxu0 0
    %929 = vmatprep.subr.bf16.mxu0 0
    %930 = vmatpush1.bf16.msra.mxu0 0
    %931 = vmatprep.subr.bf16.mxu0 0
    %932 = vmatpush1.bf16.msra.mxu0 0
    %933 = vmatprep.subr.bf16.mxu0 0
    %934 = vmatpush1.bf16.msra.mxu0 0
    %935 = vmatprep.subr.bf16.mxu0 0
    %936 = vmatpush1.bf16.msra.mxu0 0
    %937 = vmatprep.subr.bf16.mxu0 0
    %938 = vmatpush1.bf16.msra.mxu0 0
    %939 = vmatprep.subr.bf16.mxu0 0
    %940 = vmatpush1.bf16.msra.mxu0 0
    %941 = vmatprep.subr.bf16.mxu0 0
    %942 = vmatpush1.bf16.msra.mxu0 0
    %943 = vmatprep.subr.bf16.mxu0 0
    %944 = vmatpush1.bf16.msra.mxu0 0
    %945 = vmatprep.subr.bf16.mxu0 0
    %946 = vmatpush1.bf16.msra.mxu0 0
    %947 = vmatprep.subr.bf16.mxu0 0
    %948 = vmatpush1.bf16.msra.mxu0 0
    %949 = vmatprep.mubr.bf16.mxu0 0
    %950 = vmatmul.mubr.bf16.gmra.mrb[0].mxu0 %v915
    %v951 = vpop.f32.mrb[0].mxu0
    %v952 = vadd.f32 0.0, %v951
    %v953 = vpop.f32.mrb[0].mxu0
    %v954 = vpop.f32.mrb[0].mxu0
    %v955 = vadd.f32 0.0, %v954
    %v956 = vpop.f32.mrb[0].mxu0
    %957 = vdwg.mxu0
    %v958 = vpack.c.bf16 %v955, %v952
    %s959 = scalar_lea.vmem %s5, 64
    %v960 = vld [vmem:[%s959] sm:$0xf]
    %v961 = vld [vmem:[%s959 + $0x4] sm:$0xf]
    %v962 = vld [vmem:[%s959 + $0x8] sm:$0xf]
    %v963 = vld [vmem:[%s959 + $0xc] sm:$0xf]
    %v964 = vld [vmem:[%s959 + $0x10] sm:$0xf]
    %v965 = vld [vmem:[%s959 + $0x14] sm:$0xf]
    %v966 = vld [vmem:[%s959 + $0x18] sm:$0xf]
    %v967 = vld [vmem:[%s959 + $0x1c] sm:$0xf]
    %v968 = vld [vmem:[%s959 + $0x20] sm:$0xf]
    %v969 = vld [vmem:[%s959 + $0x24] sm:$0xf]
    %v970 = vld [vmem:[%s959 + $0x28] sm:$0xf]
    %v971 = vld [vmem:[%s959 + $0x2c] sm:$0xf]
    %v972 = vld [vmem:[%s959 + $0x30] sm:$0xf]
    %v973 = vld [vmem:[%s959 + $0x34] sm:$0xf]
    %v974 = vld [vmem:[%s959 + $0x38] sm:$0xf]
    %v975 = vld [vmem:[%s959 + $0x3c] sm:$0xf]
    %v992 = vunpack.c.l.b16 %v960
    %v993 = vunpack.c.l.b16 %v961
    %v994 = vunpack.c.l.b16 %v962
    %v995 = vunpack.c.l.b16 %v963
    %v996 = vunpack.c.l.b16 %v964
    %v997 = vunpack.c.l.b16 %v965
    %v998 = vunpack.c.l.b16 %v966
    %v999 = vunpack.c.l.b16 %v967
    %v1000 = vunpack.c.l.b16 %v968
    %v1001 = vunpack.c.l.b16 %v969
    %v1002 = vunpack.c.l.b16 %v970
    %v1003 = vunpack.c.l.b16 %v971
    %v1004 = vunpack.c.l.b16 %v972
    %v1005 = vunpack.c.l.b16 %v973
    %v1006 = vunpack.c.l.b16 %v974
    %v1007 = vunpack.c.l.b16 %v975
    %v1008 = vpack.c.b16 %v993, %v992
    %v1009 = vpack.c.b16 %v995, %v994
    %v1010 = vpack.c.b16 %v997, %v996
    %v1011 = vpack.c.b16 %v999, %v998
    %v1012 = vpack.c.b16 %v1001, %v1000
    %v1013 = vpack.c.b16 %v1003, %v1002
    %v1014 = vpack.c.b16 %v1005, %v1004
    %v1015 = vpack.c.b16 %v1007, %v1006
    %1024 = vmatprep.subr.bf16.mxu0 0
    %1025 = vmatpush1.bf16.msra.mxu0 %v1008
    %1026 = vmatprep.subr.bf16.mxu0 0
    %1027 = vmatpush1.bf16.msra.mxu0 %v1009
    %1028 = vmatprep.subr.bf16.mxu0 0
    %1029 = vmatpush1.bf16.msra.mxu0 %v1010
    %1030 = vmatprep.subr.bf16.mxu0 0
    %1031 = vmatpush1.bf16.msra.mxu0 %v1011
    %1032 = vmatprep.subr.bf16.mxu0 0
    %1033 = vmatpush1.bf16.msra.mxu0 %v1012
    %1034 = vmatprep.subr.bf16.mxu0 0
    %1035 = vmatpush1.bf16.msra.mxu0 %v1013
    %1036 = vmatprep.subr.bf16.mxu0 0
    %1037 = vmatpush1.bf16.msra.mxu0 %v1014
    %1038 = vmatprep.subr.bf16.mxu0 0
    %1039 = vmatpush1.bf16.msra.mxu0 %v1015
    %1040 = vmatprep.subr.bf16.mxu0 0
    %1041 = vmatpush1.bf16.msra.mxu0 0
    %1042 = vmatprep.subr.bf16.mxu0 0
    %1043 = vmatpush1.bf16.msra.mxu0 0
    %1044 = vmatprep.subr.bf16.mxu0 0
    %1045 = vmatpush1.bf16.msra.mxu0 0
    %1046 = vmatprep.subr.bf16.mxu0 0
    %1047 = vmatpush1.bf16.msra.mxu0 0
    %1048 = vmatprep.subr.bf16.mxu0 0
    %1049 = vmatpush1.bf16.msra.mxu0 0
    %1050 = vmatprep.subr.bf16.mxu0 0
    %1051 = vmatpush1.bf16.msra.mxu0 0
    %1052 = vmatprep.subr.bf16.mxu0 0
    %1053 = vmatpush1.bf16.msra.mxu0 0
    %1054 = vmatprep.subr.bf16.mxu0 0
    %1055 = vmatpush1.bf16.msra.mxu0 0
    %1056 = vmatprep.mubr.bf16.mxu0 0
    %1057 = vmatmul.mubr.bf16.gmra.mrb[0].mxu0 %v958
    %v1058 = vpop.f32.mrb[0].mxu0
    %v1059 = vadd.f32 0.0, %v1058
    %v1060 = vpop.f32.mrb[0].mxu0
    %v1061 = vpop.f32.mrb[0].mxu0
    %v1062 = vadd.f32 0.0, %v1061
    %v1063 = vpop.f32.mrb[0].mxu0
    %1064 = vdwg.mxu0
    %v1081 = vunpack.c.l.b16 %v890
    %v1082 = vunpack.c.l.b16 %v891
    %v1083 = vunpack.c.l.b16 %v892
    %v1084 = vunpack.c.l.b16 %v893
    %v1085 = vunpack.c.l.b16 %v894
    %v1086 = vunpack.c.l.b16 %v895
    %v1087 = vunpack.c.l.b16 %v896
    %v1088 = vunpack.c.l.b16 %v897
    %v1089 = vunpack.c.l.b16 %v898
    %v1090 = vunpack.c.l.b16 %v899
    %v1091 = vunpack.c.l.b16 %v900
    %v1092 = vunpack.c.l.b16 %v901
    %v1093 = vunpack.c.l.b16 %v902
    %v1094 = vunpack.c.l.b16 %v903
    %v1095 = vunpack.c.l.b16 %v904
    %v1096 = vunpack.c.l.b16 %v905
    %v1097 = vpack.c.b16 %v1082, %v1081
    %v1098 = vpack.c.b16 %v1084, %v1083
    %v1099 = vpack.c.b16 %v1086, %v1085
    %v1100 = vpack.c.b16 %v1088, %v1087
    %v1101 = vpack.c.b16 %v1090, %v1089
    %v1102 = vpack.c.b16 %v1092, %v1091
    %v1103 = vpack.c.b16 %v1094, %v1093
    %v1104 = vpack.c.b16 %v1096, %v1095
    %1113 = vmatprep.subr.bf16.mxu0 0
    %1114 = vmatpush1.bf16.msra.mxu0 %v1097
    %1115 = vmatprep.subr.bf16.mxu0 0
    %1116 = vmatpush1.bf16.msra.mxu0 %v1098
    %1117 = vmatprep.subr.bf16.mxu0 0
    %1118 = vmatpush1.bf16.msra.mxu0 %v1099
    %1119 = vmatprep.subr.bf16.mxu0 0
    %1120 = vmatpush1.bf16.msra.mxu0 %v1100
    %1121 = vmatprep.subr.bf16.mxu0 0
    %1122 = vmatpush1.bf16.msra.mxu0 %v1101
    %1123 = vmatprep.subr.bf16.mxu0 0
    %1124 = vmatpush1.bf16.msra.mxu0 %v1102
    %1125 = vmatprep.subr.bf16.mxu0 0
    %1126 = vmatpush1.bf16.msra.mxu0 %v1103
    %1127 = vmatprep.subr.bf16.mxu0 0
    %1128 = vmatpush1.bf16.msra.mxu0 %v1104
    %1129 = vmatprep.subr.bf16.mxu0 0
    %1130 = vmatpush1.bf16.msra.mxu0 0
    %1131 = vmatprep.subr.bf16.mxu0 0
    %1132 = vmatpush1.bf16.msra.mxu0 0
    %1133 = vmatprep.subr.bf16.mxu0 0
    %1134 = vmatpush1.bf16.msra.mxu0 0
    %1135 = vmatprep.subr.bf16.mxu0 0
    %1136 = vmatpush1.bf16.msra.mxu0 0
    %1137 = vmatprep.subr.bf16.mxu0 0
    %1138 = vmatpush1.bf16.msra.mxu0 0
    %1139 = vmatprep.subr.bf16.mxu0 0
    %1140 = vmatpush1.bf16.msra.mxu0 0
    %1141 = vmatprep.subr.bf16.mxu0 0
    %1142 = vmatpush1.bf16.msra.mxu0 0
    %1143 = vmatprep.subr.bf16.mxu0 0
    %1144 = vmatpush1.bf16.msra.mxu0 0
    %1145 = vmatprep.mubr.bf16.mxu0 0
    %1146 = vmatmul.mubr.bf16.gmra.mrb[0].mxu0 %v889
    %v1147 = vpop.f32.mrb[0].mxu0
    %v1148 = vadd.f32 %v1059, %v1147
    %v1149 = vpop.f32.mrb[0].mxu0
    %v1150 = vpop.f32.mrb[0].mxu0
    %v1151 = vadd.f32 %v1062, %v1150
    %v1152 = vpop.f32.mrb[0].mxu0
    %1153 = vdwg.mxu0
    %s1154 = scalar_lea.vmem [#allocation2], 16
    %v1155 = vld [vmem:[%s1154] sm:$0xf]
    %v1156 = vld [vmem:[%s1154 + $0x4] sm:$0xf]
    %v1159 = vunpack.c.l.b16 %v1155
    %v1160 = vunpack.c.l.b16 %v1156
    %v1161 = vpack.c.b16 %v1160, %v1159
    %v1163 = vsel %vm844, %v1161, 0
    %1165 = vmatprep.subr.bf16.mxu0 0
    %1166 = vmatpush1.bf16.msra.mxu0 %v835
    %1167 = vmatprep.subr.bf16.mxu0 0
    %1168 = vmatpush1.bf16.msra.mxu0 %v836
    %1169 = vmatprep.subr.bf16.mxu0 0
    %1170 = vmatpush1.bf16.msra.mxu0 0
    %1171 = vmatprep.subr.bf16.mxu0 0
    %1172 = vmatpush1.bf16.msra.mxu0 0
    %1173 = vmatprep.subr.bf16.mxu0 0
    %1174 = vmatpush1.bf16.msra.mxu0 0
    %1175 = vmatprep.subr.bf16.mxu0 0
    %1176 = vmatpush1.bf16.msra.mxu0 0
    %1177 = vmatprep.subr.bf16.mxu0 0
    %1178 = vmatpush1.bf16.msra.mxu0 0
    %1179 = vmatprep.subr.bf16.mxu0 0
    %1180 = vmatpush1.bf16.msra.mxu0 0
    %1181 = vmatprep.subr.bf16.mxu0 0
    %1182 = vmatpush1.bf16.msra.mxu0 0
    %1183 = vmatprep.subr.bf16.mxu0 0
    %1184 = vmatpush1.bf16.msra.mxu0 0
    %1185 = vmatprep.subr.bf16.mxu0 0
    %1186 = vmatpush1.bf16.msra.mxu0 0
    %1187 = vmatprep.subr.bf16.mxu0 0
    %1188 = vmatpush1.bf16.msra.mxu0 0
    %1189 = vmatprep.subr.bf16.mxu0 0
    %1190 = vmatpush1.bf16.msra.mxu0 0
    %1191 = vmatprep.subr.bf16.mxu0 0
    %1192 = vmatpush1.bf16.msra.mxu0 0
    %1193 = vmatprep.subr.bf16.mxu0 0
    %1194 = vmatpush1.bf16.msra.mxu0 0
    %1195 = vmatprep.subr.bf16.mxu0 0
    %1196 = vmatpush1.bf16.msra.mxu0 0
    %1197 = vmatprep.mubr.bf16.mxu0 0
    %1198 = vmatmul.mubr.bf16.gmra.mrb[0].mxu0 %v1163
    %v1199 = vpop.f32.mrb[0].mxu0
    %v1200 = vadd.f32 0.0, %v1199
    %v1201 = vpop.f32.mrb[0].mxu0
    %v1202 = vpop.f32.mrb[0].mxu0
    %v1203 = vadd.f32 0.0, %v1202
    %v1204 = vpop.f32.mrb[0].mxu0
    %1205 = vdwg.mxu0
    %v1206 = vpack.c.bf16 %v1203, %v1200
    %s1207 = scalar_lea.vmem %s5, 128
    %v1208 = vld [vmem:[%s1207] sm:$0xf]
    %v1209 = vld [vmem:[%s1207 + $0x4] sm:$0xf]
    %v1210 = vld [vmem:[%s1207 + $0x8] sm:$0xf]
    %v1211 = vld [vmem:[%s1207 + $0xc] sm:$0xf]
    %v1212 = vld [vmem:[%s1207 + $0x10] sm:$0xf]
    %v1213 = vld [vmem:[%s1207 + $0x14] sm:$0xf]
    %v1214 = vld [vmem:[%s1207 + $0x18] sm:$0xf]
    %v1215 = vld [vmem:[%s1207 + $0x1c] sm:$0xf]
    %v1216 = vld [vmem:[%s1207 + $0x20] sm:$0xf]
    %v1217 = vld [vmem:[%s1207 + $0x24] sm:$0xf]
    %v1218 = vld [vmem:[%s1207 + $0x28] sm:$0xf]
    %v1219 = vld [vmem:[%s1207 + $0x2c] sm:$0xf]
    %v1220 = vld [vmem:[%s1207 + $0x30] sm:$0xf]
    %v1221 = vld [vmem:[%s1207 + $0x34] sm:$0xf]
    %v1222 = vld [vmem:[%s1207 + $0x38] sm:$0xf]
    %v1223 = vld [vmem:[%s1207 + $0x3c] sm:$0xf]
    %v1240 = vunpack.c.l.b16 %v1208
    %v1241 = vunpack.c.l.b16 %v1209
    %v1242 = vunpack.c.l.b16 %v1210
    %v1243 = vunpack.c.l.b16 %v1211
    %v1244 = vunpack.c.l.b16 %v1212
    %v1245 = vunpack.c.l.b16 %v1213
    %v1246 = vunpack.c.l.b16 %v1214
    %v1247 = vunpack.c.l.b16 %v1215
    %v1248 = vunpack.c.l.b16 %v1216
    %v1249 = vunpack.c.l.b16 %v1217
    %v1250 = vunpack.c.l.b16 %v1218
    %v1251 = vunpack.c.l.b16 %v1219
    %v1252 = vunpack.c.l.b16 %v1220
    %v1253 = vunpack.c.l.b16 %v1221
    %v1254 = vunpack.c.l.b16 %v1222
    %v1255 = vunpack.c.l.b16 %v1223
    %v1256 = vpack.c.b16 %v1241, %v1240
    %v1257 = vpack.c.b16 %v1243, %v1242
    %v1258 = vpack.c.b16 %v1245, %v1244
    %v1259 = vpack.c.b16 %v1247, %v1246
    %v1260 = vpack.c.b16 %v1249, %v1248
    %v1261 = vpack.c.b16 %v1251, %v1250
    %v1262 = vpack.c.b16 %v1253, %v1252
    %v1263 = vpack.c.b16 %v1255, %v1254
    %1272 = vmatprep.subr.bf16.mxu0 0
    %1273 = vmatpush1.bf16.msra.mxu0 %v1256
    %1274 = vmatprep.subr.bf16.mxu0 0
    %1275 = vmatpush1.bf16.msra.mxu0 %v1257
    %1276 = vmatprep.subr.bf16.mxu0 0
    %1277 = vmatpush1.bf16.msra.mxu0 %v1258
    %1278 = vmatprep.subr.bf16.mxu0 0
    %1279 = vmatpush1.bf16.msra.mxu0 %v1259
    %1280 = vmatprep.subr.bf16.mxu0 0
    %1281 = vmatpush1.bf16.msra.mxu0 %v1260
    %1282 = vmatprep.subr.bf16.mxu0 0
    %1283 = vmatpush1.bf16.msra.mxu0 %v1261
    %1284 = vmatprep.subr.bf16.mxu0 0
    %1285 = vmatpush1.bf16.msra.mxu0 %v1262
    %1286 = vmatprep.subr.bf16.mxu0 0
    %1287 = vmatpush1.bf16.msra.mxu0 %v1263
    %1288 = vmatprep.subr.bf16.mxu0 0
    %1289 = vmatpush1.bf16.msra.mxu0 0
    %1290 = vmatprep.subr.bf16.mxu0 0
    %1291 = vmatpush1.bf16.msra.mxu0 0
    %1292 = vmatprep.subr.bf16.mxu0 0
    %1293 = vmatpush1.bf16.msra.mxu0 0
    %1294 = vmatprep.subr.bf16.mxu0 0
    %1295 = vmatpush1.bf16.msra.mxu0 0
    %1296 = vmatprep.subr.bf16.mxu0 0
    %1297 = vmatpush1.bf16.msra.mxu0 0
    %1298 = vmatprep.subr.bf16.mxu0 0
    %1299 = vmatpush1.bf16.msra.mxu0 0
    %1300 = vmatprep.subr.bf16.mxu0 0
    %1301 = vmatpush1.bf16.msra.mxu0 0
    %1302 = vmatprep.subr.bf16.mxu0 0
    %1303 = vmatpush1.bf16.msra.mxu0 0
    %1304 = vmatprep.mubr.bf16.mxu0 0
    %1305 = vmatmul.mubr.bf16.gmra.mrb[0].mxu0 %v1206
    %v1306 = vpop.f32.mrb[0].mxu0
    %v1307 = vadd.f32 0.0, %v1306
    %v1308 = vpop.f32.mrb[0].mxu0
    %v1309 = vpop.f32.mrb[0].mxu0
    %v1310 = vadd.f32 0.0, %v1309
    %v1311 = vpop.f32.mrb[0].mxu0
    %1312 = vdwg.mxu0
    %v1313 = vadd.f32 %v1148, %v1307
    %v1314 = vadd.f32 %v1151, %v1310
    %s1315 = scalar_lea.vmem [#allocation2], 24
    %v1316 = vld [vmem:[%s1315] sm:$0xf]
    %v1317 = vld [vmem:[%s1315 + $0x4] sm:$0xf]
    %v1320 = vunpack.c.l.b16 %v1316
    %v1321 = vunpack.c.l.b16 %v1317
    %v1322 = vpack.c.b16 %v1321, %v1320
    %v1324 = vsel %vm844, %v1322, 0
    %1326 = vmatprep.subr.bf16.mxu0 0
    %1327 = vmatpush1.bf16.msra.mxu0 %v835
    %1328 = vmatprep.subr.bf16.mxu0 0
    %1329 = vmatpush1.bf16.msra.mxu0 %v836
    %1330 = vmatprep.subr.bf16.mxu0 0
    %1331 = vmatpush1.bf16.msra.mxu0 0
    %1332 = vmatprep.subr.bf16.mxu0 0
    %1333 = vmatpush1.bf16.msra.mxu0 0
    %1334 = vmatprep.subr.bf16.mxu0 0
    %1335 = vmatpush1.bf16.msra.mxu0 0
    %1336 = vmatprep.subr.bf16.mxu0 0
    %1337 = vmatpush1.bf16.msra.mxu0 0
    %1338 = vmatprep.subr.bf16.mxu0 0
    %1339 = vmatpush1.bf16.msra.mxu0 0
    %1340 = vmatprep.subr.bf16.mxu0 0
    %1341 = vmatpush1.bf16.msra.mxu0 0
    %1342 = vmatprep.subr.bf16.mxu0 0
    %1343 = vmatpush1.bf16.msra.mxu0 0
    %1344 = vmatprep.subr.bf16.mxu0 0
    %1345 = vmatpush1.bf16.msra.mxu0 0
    %1346 = vmatprep.subr.bf16.mxu0 0
    %1347 = vmatpush1.bf16.msra.mxu0 0
    %1348 = vmatprep.subr.bf16.mxu0 0
    %1349 = vmatpush1.bf16.msra.mxu0 0
    %1350 = vmatprep.subr.bf16.mxu0 0
    %1351 = vmatpush1.bf16.msra.mxu0 0
    %1352 = vmatprep.subr.bf16.mxu0 0
    %1353 = vmatpush1.bf16.msra.mxu0 0
    %1354 = vmatprep.subr.bf16.mxu0 0
    %1355 = vmatpush1.bf16.msra.mxu0 0
    %1356 = vmatprep.subr.bf16.mxu0 0
    %1357 = vmatpush1.bf16.msra.mxu0 0
    %1358 = vmatprep.mubr.bf16.mxu0 0
    %1359 = vmatmul.mubr.bf16.gmra.mrb[0].mxu0 %v1324
    %v1360 = vpop.f32.mrb[0].mxu0
    %v1361 = vadd.f32 0.0, %v1360
    %v1362 = vpop.f32.mrb[0].mxu0
    %v1363 = vpop.f32.mrb[0].mxu0
    %v1364 = vadd.f32 0.0, %v1363
    %v1365 = vpop.f32.mrb[0].mxu0
    %1366 = vdwg.mxu0
    %v1367 = vpack.c.bf16 %v1364, %v1361
    %s1368 = scalar_lea.vmem %s5, 192
    %v1369 = vld [vmem:[%s1368] sm:$0xf]
    %v1370 = vld [vmem:[%s1368 + $0x4] sm:$0xf]
    %v1371 = vld [vmem:[%s1368 + $0x8] sm:$0xf]
    %v1372 = vld [vmem:[%s1368 + $0xc] sm:$0xf]
    %v1373 = vld [vmem:[%s1368 + $0x10] sm:$0xf]
    %v1374 = vld [vmem:[%s1368 + $0x14] sm:$0xf]
    %v1375 = vld [vmem:[%s1368 + $0x18] sm:$0xf]
    %v1376 = vld [vmem:[%s1368 + $0x1c] sm:$0xf]
    %v1377 = vld [vmem:[%s1368 + $0x20] sm:$0xf]
    %v1378 = vld [vmem:[%s1368 + $0x24] sm:$0xf]
    %v1379 = vld [vmem:[%s1368 + $0x28] sm:$0xf]
    %v1380 = vld [vmem:[%s1368 + $0x2c] sm:$0xf]
    %v1381 = vld [vmem:[%s1368 + $0x30] sm:$0xf]
    %v1382 = vld [vmem:[%s1368 + $0x34] sm:$0xf]
    %v1383 = vld [vmem:[%s1368 + $0x38] sm:$0xf]
    %v1384 = vld [vmem:[%s1368 + $0x3c] sm:$0xf]
    %v1401 = vunpack.c.l.b16 %v1369
    %v1402 = vunpack.c.l.b16 %v1370
    %v1403 = vunpack.c.l.b16 %v1371
    %v1404 = vunpack.c.l.b16 %v1372
    %v1405 = vunpack.c.l.b16 %v1373
    %v1406 = vunpack.c.l.b16 %v1374
    %v1407 = vunpack.c.l.b16 %v1375
    %v1408 = vunpack.c.l.b16 %v1376
    %v1409 = vunpack.c.l.b16 %v1377
    %v1410 = vunpack.c.l.b16 %v1378
    %v1411 = vunpack.c.l.b16 %v1379
    %v1412 = vunpack.c.l.b16 %v1380
    %v1413 = vunpack.c.l.b16 %v1381
    %v1414 = vunpack.c.l.b16 %v1382
    %v1415 = vunpack.c.l.b16 %v1383
    %v1416 = vunpack.c.l.b16 %v1384
    %v1417 = vpack.c.b16 %v1402, %v1401
    %v1418 = vpack.c.b16 %v1404, %v1403
    %v1419 = vpack.c.b16 %v1406, %v1405
    %v1420 = vpack.c.b16 %v1408, %v1407
    %v1421 = vpack.c.b16 %v1410, %v1409
    %v1422 = vpack.c.b16 %v1412, %v1411
    %v1423 = vpack.c.b16 %v1414, %v1413
    %v1424 = vpack.c.b16 %v1416, %v1415
    %1433 = vmatprep.subr.bf16.mxu0 0
    %1434 = vmatpush1.bf16.msra.mxu0 %v1417
    %1435 = vmatprep.subr.bf16.mxu0 0
    %1436 = vmatpush1.bf16.msra.mxu0 %v1418
    %1437 = vmatprep.subr.bf16.mxu0 0
    %1438 = vmatpush1.bf16.msra.mxu0 %v1419
    %1439 = vmatprep.subr.bf16.mxu0 0
    %1440 = vmatpush1.bf16.msra.mxu0 %v1420
    %1441 = vmatprep.subr.bf16.mxu0 0
    %1442 = vmatpush1.bf16.msra.mxu0 %v1421
    %1443 = vmatprep.subr.bf16.mxu0 0
    %1444 = vmatpush1.bf16.msra.mxu0 %v1422
    %1445 = vmatprep.subr.bf16.mxu0 0
    %1446 = vmatpush1.bf16.msra.mxu0 %v1423
    %1447 = vmatprep.subr.bf16.mxu0 0
    %1448 = vmatpush1.bf16.msra.mxu0 %v1424
    %1449 = vmatprep.subr.bf16.mxu0 0
    %1450 = vmatpush1.bf16.msra.mxu0 0
    %1451 = vmatprep.subr.bf16.mxu0 0
    %1452 = vmatpush1.bf16.msra.mxu0 0
    %1453 = vmatprep.subr.bf16.mxu0 0
    %1454 = vmatpush1.bf16.msra.mxu0 0
    %1455 = vmatprep.subr.bf16.mxu0 0
    %1456 = vmatpush1.bf16.msra.mxu0 0
    %1457 = vmatprep.subr.bf16.mxu0 0
    %1458 = vmatpush1.bf16.msra.mxu0 0
    %1459 = vmatprep.subr.bf16.mxu0 0
    %1460 = vmatpush1.bf16.msra.mxu0 0
    %1461 = vmatprep.subr.bf16.mxu0 0
    %1462 = vmatpush1.bf16.msra.mxu0 0
    %1463 = vmatprep.subr.bf16.mxu0 0
    %1464 = vmatpush1.bf16.msra.mxu0 0
    %1465 = vmatprep.mubr.bf16.mxu0 0
    %1466 = vmatmul.mubr.bf16.gmra.mrb[0].mxu0 %v1367
    %v1467 = vpop.f32.mrb[0].mxu0
    %v1468 = vadd.f32 0.0, %v1467
    %v1469 = vpop.f32.mrb[0].mxu0
    %v1470 = vpop.f32.mrb[0].mxu0
    %v1471 = vadd.f32 0.0, %v1470
    %v1472 = vpop.f32.mrb[0].mxu0
    %1473 = vdwg.mxu0
    %v1474 = vadd.f32 %v1313, %v1468
    %v1475 = vadd.f32 %v1314, %v1471
    %v1476 = vld [vmem:[%s6] sm:$0x1]
    %v1478 = vlaneseq
    %v1479 = vshrl.u32 %v1478, 7
    %v1480 = vsub.s32 0, %v1479
    %v1481 = vrot.slane %v1476, %v1480
    %v1483 = vadd.f32 %v1474, %v1481
    %v1484 = vadd.f32 %v1475, %v1481
    %vm1485 = vcmp.ge.f32.partialorder %v1483, 0.0
    %vm1486 = vcmp.ge.f32.partialorder %v1484, 0.0
    %v1487 = vmul.f32 %v1483, 0.2
    %v1488 = vmul.f32 %v1484, 0.2
    %v1489 = vsel %vm1485, %v1483, %v1487
    %v1490 = vsel %vm1486, %v1484, %v1488
    %v1491 = vpack.c.bf16 %v1490, %v1489
    %v1492 = vld [vmem:[%s7] sm:$0xf]
    %v1493 = vld [vmem:[%s7 + $0x4] sm:$0xf]
    %v1496 = vunpack.c.l.b16 %v1492
    %v1497 = vunpack.c.l.b16 %v1493
    %v1498 = vpack.c.b16 %v1497, %v1496
    %vm1499 = vcmask 130048
    %v1501 = vsel %vm1499, %v1498, 0
    %1503 = vmatprep.subr.bf16.mxu0 0
    %1504 = vmatpush1.bf16.msra.mxu0 %v1491
    %1505 = vmatprep.subr.bf16.mxu0 0
    %1506 = vmatpush1.bf16.msra.mxu0 0
    %1507 = vmatprep.subr.bf16.mxu0 0
    %1508 = vmatpush1.bf16.msra.mxu0 0
    %1509 = vmatprep.subr.bf16.mxu0 0
    %1510 = vmatpush1.bf16.msra.mxu0 0
    %1511 = vmatprep.subr.bf16.mxu0 0
    %1512 = vmatpush1.bf16.msra.mxu0 0
    %1513 = vmatprep.subr.bf16.mxu0 0
    %1514 = vmatpush1.bf16.msra.mxu0 0
    %1515 = vmatprep.subr.bf16.mxu0 0
    %1516 = vmatpush1.bf16.msra.mxu0 0
    %1517 = vmatprep.subr.bf16.mxu0 0
    %1518 = vmatpush1.bf16.msra.mxu0 0
    %1519 = vmatprep.subr.bf16.mxu0 0
    %1520 = vmatpush1.bf16.msra.mxu0 0
    %1521 = vmatprep.subr.bf16.mxu0 0
    %1522 = vmatpush1.bf16.msra.mxu0 0
    %1523 = vmatprep.subr.bf16.mxu0 0
    %1524 = vmatpush1.bf16.msra.mxu0 0
    %1525 = vmatprep.subr.bf16.mxu0 0
    %1526 = vmatpush1.bf16.msra.mxu0 0
    %1527 = vmatprep.subr.bf16.mxu0 0
    %1528 = vmatpush1.bf16.msra.mxu0 0
    %1529 = vmatprep.subr.bf16.mxu0 0
    %1530 = vmatpush1.bf16.msra.mxu0 0
    %1531 = vmatprep.subr.bf16.mxu0 0
    %1532 = vmatpush1.bf16.msra.mxu0 0
    %1533 = vmatprep.subr.bf16.mxu0 0
    %1534 = vmatpush1.bf16.msra.mxu0 0
    %1535 = vmatprep.mubr.bf16.mxu0 0
    %1536 = vmatmul.mubr.bf16.gmra.mrb[0].mxu0 %v1501
    %v1537 = vpop.f32.mrb[0].mxu0
    %v1538 = vadd.f32 0.0, %v1537
    %v1539 = vpop.f32.mrb[0].mxu0
    %v1540 = vpop.f32.mrb[0].mxu0
    %v1541 = vadd.f32 0.0, %v1540
    %v1542 = vpop.f32.mrb[0].mxu0
    %1543 = vdwg.mxu0
    %v1544 = vpack.c.bf16 %v1541, %v1538
    %v1545 = vld [vmem:[%s8] sm:$0xf]
    %v1546 = vld [vmem:[%s8 + $0x4] sm:$0xf]
    %v1547 = vld [vmem:[%s8 + $0x8] sm:$0xf]
    %v1548 = vld [vmem:[%s8 + $0xc] sm:$0xf]
    %v1549 = vld [vmem:[%s8 + $0x10] sm:$0xf]
    %v1550 = vld [vmem:[%s8 + $0x14] sm:$0xf]
    %v1551 = vld [vmem:[%s8 + $0x18] sm:$0xf]
    %v1552 = vld [vmem:[%s8 + $0x1c] sm:$0xf]
    %v1553 = vld [vmem:[%s8 + $0x20] sm:$0xf]
    %v1554 = vld [vmem:[%s8 + $0x24] sm:$0xf]
    %v1555 = vld [vmem:[%s8 + $0x28] sm:$0xf]
    %v1556 = vld [vmem:[%s8 + $0x2c] sm:$0xf]
    %v1557 = vld [vmem:[%s8 + $0x30] sm:$0xf]
    %v1558 = vld [vmem:[%s8 + $0x34] sm:$0xf]
    %v1559 = vld [vmem:[%s8 + $0x38] sm:$0xf]
    %v1560 = vld [vmem:[%s8 + $0x3c] sm:$0xf]
    %s1561 = scalar_lea.vmem %s7, 8
    %v1562 = vld [vmem:[%s1561] sm:$0xf]
    %v1563 = vld [vmem:[%s1561 + $0x4] sm:$0xf]
    %v1566 = vunpack.c.l.b16 %v1562
    %v1567 = vunpack.c.l.b16 %v1563
    %v1568 = vpack.c.b16 %v1567, %v1566
    %v1570 = vsel %vm1499, %v1568, 0
    %1572 = vmatprep.subr.bf16.mxu0 0
    %1573 = vmatpush1.bf16.msra.mxu0 %v1491
    %1574 = vmatprep.subr.bf16.mxu0 0
    %1575 = vmatpush1.bf16.msra.mxu0 0
    %1576 = vmatprep.subr.bf16.mxu0 0
    %1577 = vmatpush1.bf16.msra.mxu0 0
    %1578 = vmatprep.subr.bf16.mxu0 0
    %1579 = vmatpush1.bf16.msra.mxu0 0
    %1580 = vmatprep.subr.bf16.mxu0 0
    %1581 = vmatpush1.bf16.msra.mxu0 0
    %1582 = vmatprep.subr.bf16.mxu0 0
    %1583 = vmatpush1.bf16.msra.mxu0 0
    %1584 = vmatprep.subr.bf16.mxu0 0
    %1585 = vmatpush1.bf16.msra.mxu0 0
    %1586 = vmatprep.subr.bf16.mxu0 0
    %1587 = vmatpush1.bf16.msra.mxu0 0
    %1588 = vmatprep.subr.bf16.mxu0 0
    %1589 = vmatpush1.bf16.msra.mxu0 0
    %1590 = vmatprep.subr.bf16.mxu0 0
    %1591 = vmatpush1.bf16.msra.mxu0 0
    %1592 = vmatprep.subr.bf16.mxu0 0
    %1593 = vmatpush1.bf16.msra.mxu0 0
    %1594 = vmatprep.subr.bf16.mxu0 0
    %1595 = vmatpush1.bf16.msra.mxu0 0
    %1596 = vmatprep.subr.bf16.mxu0 0
    %1597 = vmatpush1.bf16.msra.mxu0 0
    %1598 = vmatprep.subr.bf16.mxu0 0
    %1599 = vmatpush1.bf16.msra.mxu0 0
    %1600 = vmatprep.subr.bf16.mxu0 0
    %1601 = vmatpush1.bf16.msra.mxu0 0
    %1602 = vmatprep.subr.bf16.mxu0 0
    %1603 = vmatpush1.bf16.msra.mxu0 0
    %1604 = vmatprep.mubr.bf16.mxu0 0
    %1605 = vmatmul.mubr.bf16.gmra.mrb[0].mxu0 %v1570
    %v1606 = vpop.f32.mrb[0].mxu0
    %v1607 = vadd.f32 0.0, %v1606
    %v1608 = vpop.f32.mrb[0].mxu0
    %v1609 = vpop.f32.mrb[0].mxu0
    %v1610 = vadd.f32 0.0, %v1609
    %v1611 = vpop.f32.mrb[0].mxu0
    %1612 = vdwg.mxu0
    %v1613 = vpack.c.bf16 %v1610, %v1607
    %s1614 = scalar_lea.vmem %s8, 64
    %v1615 = vld [vmem:[%s1614] sm:$0xf]
    %v1616 = vld [vmem:[%s1614 + $0x4] sm:$0xf]
    %v1617 = vld [vmem:[%s1614 + $0x8] sm:$0xf]
    %v1618 = vld [vmem:[%s1614 + $0xc] sm:$0xf]
    %v1619 = vld [vmem:[%s1614 + $0x10] sm:$0xf]
    %v1620 = vld [vmem:[%s1614 + $0x14] sm:$0xf]
    %v1621 = vld [vmem:[%s1614 + $0x18] sm:$0xf]
    %v1622 = vld [vmem:[%s1614 + $0x1c] sm:$0xf]
    %v1623 = vld [vmem:[%s1614 + $0x20] sm:$0xf]
    %v1624 = vld [vmem:[%s1614 + $0x24] sm:$0xf]
    %v1625 = vld [vmem:[%s1614 + $0x28] sm:$0xf]
    %v1626 = vld [vmem:[%s1614 + $0x2c] sm:$0xf]
    %v1627 = vld [vmem:[%s1614 + $0x30] sm:$0xf]
    %v1628 = vld [vmem:[%s1614 + $0x34] sm:$0xf]
    %v1629 = vld [vmem:[%s1614 + $0x38] sm:$0xf]
    %v1630 = vld [vmem:[%s1614 + $0x3c] sm:$0xf]
    %v1647 = vunpack.c.l.b16 %v1615
    %v1648 = vunpack.c.l.b16 %v1616
    %v1649 = vunpack.c.l.b16 %v1617
    %v1650 = vunpack.c.l.b16 %v1618
    %v1651 = vunpack.c.l.b16 %v1619
    %v1652 = vunpack.c.l.b16 %v1620
    %v1653 = vunpack.c.l.b16 %v1621
    %v1654 = vunpack.c.l.b16 %v1622
    %v1655 = vunpack.c.l.b16 %v1623
    %v1656 = vunpack.c.l.b16 %v1624
    %v1657 = vunpack.c.l.b16 %v1625
    %v1658 = vunpack.c.l.b16 %v1626
    %v1659 = vunpack.c.l.b16 %v1627
    %v1660 = vunpack.c.l.b16 %v1628
    %v1661 = vunpack.c.l.b16 %v1629
    %v1662 = vunpack.c.l.b16 %v1630
    %v1663 = vpack.c.b16 %v1648, %v1647
    %v1664 = vpack.c.b16 %v1650, %v1649
    %v1665 = vpack.c.b16 %v1652, %v1651
    %v1666 = vpack.c.b16 %v1654, %v1653
    %v1667 = vpack.c.b16 %v1656, %v1655
    %v1668 = vpack.c.b16 %v1658, %v1657
    %v1669 = vpack.c.b16 %v1660, %v1659
    %v1670 = vpack.c.b16 %v1662, %v1661
    %1679 = vmatprep.subr.bf16.mxu0 0
    %1680 = vmatpush1.bf16.msra.mxu0 %v1663
    %1681 = vmatprep.subr.bf16.mxu0 0
    %1682 = vmatpush1.bf16.msra.mxu0 %v1664
    %1683 = vmatprep.subr.bf16.mxu0 0
    %1684 = vmatpush1.bf16.msra.mxu0 %v1665
    %1685 = vmatprep.subr.bf16.mxu0 0
    %1686 = vmatpush1.bf16.msra.mxu0 %v1666
    %1687 = vmatprep.subr.bf16.mxu0 0
    %1688 = vmatpush1.bf16.msra.mxu0 %v1667
    %1689 = vmatprep.subr.bf16.mxu0 0
    %1690 = vmatpush1.bf16.msra.mxu0 %v1668
    %1691 = vmatprep.subr.bf16.mxu0 0
    %1692 = vmatpush1.bf16.msra.mxu0 %v1669
    %1693 = vmatprep.subr.bf16.mxu0 0
    %1694 = vmatpush1.bf16.msra.mxu0 %v1670
    %1695 = vmatprep.subr.bf16.mxu0 0
    %1696 = vmatpush1.bf16.msra.mxu0 0
    %1697 = vmatprep.subr.bf16.mxu0 0
    %1698 = vmatpush1.bf16.msra.mxu0 0
    %1699 = vmatprep.subr.bf16.mxu0 0
    %1700 = vmatpush1.bf16.msra.mxu0 0
    %1701 = vmatprep.subr.bf16.mxu0 0
    %1702 = vmatpush1.bf16.msra.mxu0 0
    %1703 = vmatprep.subr.bf16.mxu0 0
    %1704 = vmatpush1.bf16.msra.mxu0 0
    %1705 = vmatprep.subr.bf16.mxu0 0
    %1706 = vmatpush1.bf16.msra.mxu0 0
    %1707 = vmatprep.subr.bf16.mxu0 0
    %1708 = vmatpush1.bf16.msra.mxu0 0
    %1709 = vmatprep.subr.bf16.mxu0 0
    %1710 = vmatpush1.bf16.msra.mxu0 0
    %1711 = vmatprep.mubr.bf16.mxu0 0
    %1712 = vmatmul.mubr.bf16.gmra.mrb[0].mxu0 %v1613
    %v1713 = vpop.f32.mrb[0].mxu0
    %v1714 = vadd.f32 0.0, %v1713
    %v1715 = vpop.f32.mrb[0].mxu0
    %v1716 = vpop.f32.mrb[0].mxu0
    %v1717 = vadd.f32 0.0, %v1716
    %v1718 = vpop.f32.mrb[0].mxu0
    %1719 = vdwg.mxu0
    %v1736 = vunpack.c.l.b16 %v1545
    %v1737 = vunpack.c.l.b16 %v1546
    %v1738 = vunpack.c.l.b16 %v1547
    %v1739 = vunpack.c.l.b16 %v1548
    %v1740 = vunpack.c.l.b16 %v1549
    %v1741 = vunpack.c.l.b16 %v1550
    %v1742 = vunpack.c.l.b16 %v1551
    %v1743 = vunpack.c.l.b16 %v1552
    %v1744 = vunpack.c.l.b16 %v1553
    %v1745 = vunpack.c.l.b16 %v1554
    %v1746 = vunpack.c.l.b16 %v1555
    %v1747 = vunpack.c.l.b16 %v1556
    %v1748 = vunpack.c.l.b16 %v1557
    %v1749 = vunpack.c.l.b16 %v1558
    %v1750 = vunpack.c.l.b16 %v1559
    %v1751 = vunpack.c.l.b16 %v1560
    %v1752 = vpack.c.b16 %v1737, %v1736
    %v1753 = vpack.c.b16 %v1739, %v1738
    %v1754 = vpack.c.b16 %v1741, %v1740
    %v1755 = vpack.c.b16 %v1743, %v1742
    %v1756 = vpack.c.b16 %v1745, %v1744
    %v1757 = vpack.c.b16 %v1747, %v1746
    %v1758 = vpack.c.b16 %v1749, %v1748
    %v1759 = vpack.c.b16 %v1751, %v1750
    %1768 = vmatprep.subr.bf16.mxu0 0
    %1769 = vmatpush1.bf16.msra.mxu0 %v1752
    %1770 = vmatprep.subr.bf16.mxu0 0
    %1771 = vmatpush1.bf16.msra.mxu0 %v1753
    %1772 = vmatprep.subr.bf16.mxu0 0
    %1773 = vmatpush1.bf16.msra.mxu0 %v1754
    %1774 = vmatprep.subr.bf16.mxu0 0
    %1775 = vmatpush1.bf16.msra.mxu0 %v1755
    %1776 = vmatprep.subr.bf16.mxu0 0
    %1777 = vmatpush1.bf16.msra.mxu0 %v1756
    %1778 = vmatprep.subr.bf16.mxu0 0
    %1779 = vmatpush1.bf16.msra.mxu0 %v1757
    %1780 = vmatprep.subr.bf16.mxu0 0
    %1781 = vmatpush1.bf16.msra.mxu0 %v1758
    %1782 = vmatprep.subr.bf16.mxu0 0
    %1783 = vmatpush1.bf16.msra.mxu0 %v1759
    %1784 = vmatprep.subr.bf16.mxu0 0
    %1785 = vmatpush1.bf16.msra.mxu0 0
    %1786 = vmatprep.subr.bf16.mxu0 0
    %1787 = vmatpush1.bf16.msra.mxu0 0
    %1788 = vmatprep.subr.bf16.mxu0 0
    %1789 = vmatpush1.bf16.msra.mxu0 0
    %1790 = vmatprep.subr.bf16.mxu0 0
    %1791 = vmatpush1.bf16.msra.mxu0 0
    %1792 = vmatprep.subr.bf16.mxu0 0
    %1793 = vmatpush1.bf16.msra.mxu0 0
    %1794 = vmatprep.subr.bf16.mxu0 0
    %1795 = vmatpush1.bf16.msra.mxu0 0
    %1796 = vmatprep.subr.bf16.mxu0 0
    %1797 = vmatpush1.bf16.msra.mxu0 0
    %1798 = vmatprep.subr.bf16.mxu0 0
    %1799 = vmatpush1.bf16.msra.mxu0 0
    %1800 = vmatprep.mubr.bf16.mxu0 0
    %1801 = vmatmul.mubr.bf16.gmra.mrb[0].mxu0 %v1544
    %v1802 = vpop.f32.mrb[0].mxu0
    %v1803 = vadd.f32 %v1714, %v1802
    %v1804 = vpop.f32.mrb[0].mxu0
    %v1805 = vpop.f32.mrb[0].mxu0
    %v1806 = vadd.f32 %v1717, %v1805
    %v1807 = vpop.f32.mrb[0].mxu0
    %1808 = vdwg.mxu0
    %s1809 = scalar_lea.vmem %s7, 16
    %v1810 = vld [vmem:[%s1809] sm:$0xf]
    %v1811 = vld [vmem:[%s1809 + $0x4] sm:$0xf]
    %v1814 = vunpack.c.l.b16 %v1810
    %v1815 = vunpack.c.l.b16 %v1811
    %v1816 = vpack.c.b16 %v1815, %v1814
    %v1818 = vsel %vm1499, %v1816, 0
    %1820 = vmatprep.subr.bf16.mxu0 0
    %1821 = vmatpush1.bf16.msra.mxu0 %v1491
    %1822 = vmatprep.subr.bf16.mxu0 0
    %1823 = vmatpush1.bf16.msra.mxu0 0
    %1824 = vmatprep.subr.bf16.mxu0 0
    %1825 = vmatpush1.bf16.msra.mxu0 0
    %1826 = vmatprep.subr.bf16.mxu0 0
    %1827 = vmatpush1.bf16.msra.mxu0 0
    %1828 = vmatprep.subr.bf16.mxu0 0
    %1829 = vmatpush1.bf16.msra.mxu0 0
    %1830 = vmatprep.subr.bf16.mxu0 0
    %1831 = vmatpush1.bf16.msra.mxu0 0
    %1832 = vmatprep.subr.bf16.mxu0 0
    %1833 = vmatpush1.bf16.msra.mxu0 0
    %1834 = vmatprep.subr.bf16.mxu0 0
    %1835 = vmatpush1.bf16.msra.mxu0 0
    %1836 = vmatprep.subr.bf16.mxu0 0
    %1837 = vmatpush1.bf16.msra.mxu0 0
    %1838 = vmatprep.subr.bf16.mxu0 0
    %1839 = vmatpush1.bf16.msra.mxu0 0
    %1840 = vmatprep.subr.bf16.mxu0 0
    %1841 = vmatpush1.bf16.msra.mxu0 0
    %1842 = vmatprep.subr.bf16.mxu0 0
    %1843 = vmatpush1.bf16.msra.mxu0 0
    %1844 = vmatprep.subr.bf16.mxu0 0
    %1845 = vmatpush1.bf16.msra.mxu0 0
    %1846 = vmatprep.subr.bf16.mxu0 0
    %1847 = vmatpush1.bf16.msra.mxu0 0
    %1848 = vmatprep.subr.bf16.mxu0 0
    %1849 = vmatpush1.bf16.msra.mxu0 0
    %1850 = vmatprep.subr.bf16.mxu0 0
    %1851 = vmatpush1.bf16.msra.mxu0 0
    %1852 = vmatprep.mubr.bf16.mxu0 0
    %1853 = vmatmul.mubr.bf16.gmra.mrb[0].mxu0 %v1818
    %v1854 = vpop.f32.mrb[0].mxu0
    %v1855 = vadd.f32 0.0, %v1854
    %v1856 = vpop.f32.mrb[0].mxu0
    %v1857 = vpop.f32.mrb[0].mxu0
    %v1858 = vadd.f32 0.0, %v1857
    %v1859 = vpop.f32.mrb[0].mxu0
    %1860 = vdwg.mxu0
    %v1861 = vpack.c.bf16 %v1858, %v1855
    %s1862 = scalar_lea.vmem %s8, 128
    %v1863 = vld [vmem:[%s1862] sm:$0xf]
    %v1864 = vld [vmem:[%s1862 + $0x4] sm:$0xf]
    %v1865 = vld [vmem:[%s1862 + $0x8] sm:$0xf]
    %v1866 = vld [vmem:[%s1862 + $0xc] sm:$0xf]
    %v1867 = vld [vmem:[%s1862 + $0x10] sm:$0xf]
    %v1868 = vld [vmem:[%s1862 + $0x14] sm:$0xf]
    %v1869 = vld [vmem:[%s1862 + $0x18] sm:$0xf]
    %v1870 = vld [vmem:[%s1862 + $0x1c] sm:$0xf]
    %v1871 = vld [vmem:[%s1862 + $0x20] sm:$0xf]
    %v1872 = vld [vmem:[%s1862 + $0x24] sm:$0xf]
    %v1873 = vld [vmem:[%s1862 + $0x28] sm:$0xf]
    %v1874 = vld [vmem:[%s1862 + $0x2c] sm:$0xf]
    %v1875 = vld [vmem:[%s1862 + $0x30] sm:$0xf]
    %v1876 = vld [vmem:[%s1862 + $0x34] sm:$0xf]
    %v1877 = vld [vmem:[%s1862 + $0x38] sm:$0xf]
    %v1878 = vld [vmem:[%s1862 + $0x3c] sm:$0xf]
    %v1895 = vunpack.c.l.b16 %v1863
    %v1896 = vunpack.c.l.b16 %v1864
    %v1897 = vunpack.c.l.b16 %v1865
    %v1898 = vunpack.c.l.b16 %v1866
    %v1899 = vunpack.c.l.b16 %v1867
    %v1900 = vunpack.c.l.b16 %v1868
    %v1901 = vunpack.c.l.b16 %v1869
    %v1902 = vunpack.c.l.b16 %v1870
    %v1903 = vunpack.c.l.b16 %v1871
    %v1904 = vunpack.c.l.b16 %v1872
    %v1905 = vunpack.c.l.b16 %v1873
    %v1906 = vunpack.c.l.b16 %v1874
    %v1907 = vunpack.c.l.b16 %v1875
    %v1908 = vunpack.c.l.b16 %v1876
    %v1909 = vunpack.c.l.b16 %v1877
    %v1910 = vunpack.c.l.b16 %v1878
    %v1911 = vpack.c.b16 %v1896, %v1895
    %v1912 = vpack.c.b16 %v1898, %v1897
    %v1913 = vpack.c.b16 %v1900, %v1899
    %v1914 = vpack.c.b16 %v1902, %v1901
    %v1915 = vpack.c.b16 %v1904, %v1903
    %v1916 = vpack.c.b16 %v1906, %v1905
    %v1917 = vpack.c.b16 %v1908, %v1907
    %v1918 = vpack.c.b16 %v1910, %v1909
    %1927 = vmatprep.subr.bf16.mxu0 0
    %1928 = vmatpush1.bf16.msra.mxu0 %v1911
    %1929 = vmatprep.subr.bf16.mxu0 0
    %1930 = vmatpush1.bf16.msra.mxu0 %v1912
    %1931 = vmatprep.subr.bf16.mxu0 0
    %1932 = vmatpush1.bf16.msra.mxu0 %v1913
    %1933 = vmatprep.subr.bf16.mxu0 0
    %1934 = vmatpush1.bf16.msra.mxu0 %v1914
    %1935 = vmatprep.subr.bf16.mxu0 0
    %1936 = vmatpush1.bf16.msra.mxu0 %v1915
    %1937 = vmatprep.subr.bf16.mxu0 0
    %1938 = vmatpush1.bf16.msra.mxu0 %v1916
    %1939 = vmatprep.subr.bf16.mxu0 0
    %1940 = vmatpush1.bf16.msra.mxu0 %v1917
    %1941 = vmatprep.subr.bf16.mxu0 0
    %1942 = vmatpush1.bf16.msra.mxu0 %v1918
    %1943 = vmatprep.subr.bf16.mxu0 0
    %1944 = vmatpush1.bf16.msra.mxu0 0
    %1945 = vmatprep.subr.bf16.mxu0 0
    %1946 = vmatpush1.bf16.msra.mxu0 0
    %1947 = vmatprep.subr.bf16.mxu0 0
    %1948 = vmatpush1.bf16.msra.mxu0 0
    %1949 = vmatprep.subr.bf16.mxu0 0
    %1950 = vmatpush1.bf16.msra.mxu0 0
    %1951 = vmatprep.subr.bf16.mxu0 0
    %1952 = vmatpush1.bf16.msra.mxu0 0
    %1953 = vmatprep.subr.bf16.mxu0 0
    %1954 = vmatpush1.bf16.msra.mxu0 0
    %1955 = vmatprep.subr.bf16.mxu0 0
    %1956 = vmatpush1.bf16.msra.mxu0 0
    %1957 = vmatprep.subr.bf16.mxu0 0
    %1958 = vmatpush1.bf16.msra.mxu0 0
    %1959 = vmatprep.mubr.bf16.mxu0 0
    %1960 = vmatmul.mubr.bf16.gmra.mrb[0].mxu0 %v1861
    %v1961 = vpop.f32.mrb[0].mxu0
    %v1962 = vadd.f32 0.0, %v1961
    %v1963 = vpop.f32.mrb[0].mxu0
    %v1964 = vpop.f32.mrb[0].mxu0
    %v1965 = vadd.f32 0.0, %v1964
    %v1966 = vpop.f32.mrb[0].mxu0
    %1967 = vdwg.mxu0
    %v1968 = vadd.f32 %v1803, %v1962
    %v1969 = vadd.f32 %v1806, %v1965
    %s1970 = scalar_lea.vmem %s7, 24
    %v1971 = vld [vmem:[%s1970] sm:$0xf]
    %v1972 = vld [vmem:[%s1970 + $0x4] sm:$0xf]
    %v1975 = vunpack.c.l.b16 %v1971
    %v1976 = vunpack.c.l.b16 %v1972
    %v1977 = vpack.c.b16 %v1976, %v1975
    %v1979 = vsel %vm1499, %v1977, 0
    %1981 = vmatprep.subr.bf16.mxu0 0
    %1982 = vmatpush1.bf16.msra.mxu0 %v1491
    %1983 = vmatprep.subr.bf16.mxu0 0
    %1984 = vmatpush1.bf16.msra.mxu0 0
    %1985 = vmatprep.subr.bf16.mxu0 0
    %1986 = vmatpush1.bf16.msra.mxu0 0
    %1987 = vmatprep.subr.bf16.mxu0 0
    %1988 = vmatpush1.bf16.msra.mxu0 0
    %1989 = vmatprep.subr.bf16.mxu0 0
    %1990 = vmatpush1.bf16.msra.mxu0 0
    %1991 = vmatprep.subr.bf16.mxu0 0
    %1992 = vmatpush1.bf16.msra.mxu0 0
    %1993 = vmatprep.subr.bf16.mxu0 0
    %1994 = vmatpush1.bf16.msra.mxu0 0
    %1995 = vmatprep.subr.bf16.mxu0 0
    %1996 = vmatpush1.bf16.msra.mxu0 0
    %1997 = vmatprep.subr.bf16.mxu0 0
    %1998 = vmatpush1.bf16.msra.mxu0 0
    %1999 = vmatprep.subr.bf16.mxu0 0
    %2000 = vmatpush1.bf16.msra.mxu0 0
    %2001 = vmatprep.subr.bf16.mxu0 0
    %2002 = vmatpush1.bf16.msra.mxu0 0
    %2003 = vmatprep.subr.bf16.mxu0 0
    %2004 = vmatpush1.bf16.msra.mxu0 0
    %2005 = vmatprep.subr.bf16.mxu0 0
    %2006 = vmatpush1.bf16.msra.mxu0 0
    %2007 = vmatprep.subr.bf16.mxu0 0
    %2008 = vmatpush1.bf16.msra.mxu0 0
    %2009 = vmatprep.subr.bf16.mxu0 0
    %2010 = vmatpush1.bf16.msra.mxu0 0
    %2011 = vmatprep.subr.bf16.mxu0 0
    %2012 = vmatpush1.bf16.msra.mxu0 0
    %2013 = vmatprep.mubr.bf16.mxu0 0
    %2014 = vmatmul.mubr.bf16.gmra.mrb[0].mxu0 %v1979
    %v2015 = vpop.f32.mrb[0].mxu0
    %v2016 = vadd.f32 0.0, %v2015
    %v2017 = vpop.f32.mrb[0].mxu0
    %v2018 = vpop.f32.mrb[0].mxu0
    %v2019 = vadd.f32 0.0, %v2018
    %v2020 = vpop.f32.mrb[0].mxu0
    %2021 = vdwg.mxu0
    %v2022 = vpack.c.bf16 %v2019, %v2016
    %s2023 = scalar_lea.vmem %s8, 192
    %v2024 = vld [vmem:[%s2023] sm:$0xf]
    %v2025 = vld [vmem:[%s2023 + $0x4] sm:$0xf]
    %v2026 = vld [vmem:[%s2023 + $0x8] sm:$0xf]
    %v2027 = vld [vmem:[%s2023 + $0xc] sm:$0xf]
    %v2028 = vld [vmem:[%s2023 + $0x10] sm:$0xf]
    %v2029 = vld [vmem:[%s2023 + $0x14] sm:$0xf]
    %v2030 = vld [vmem:[%s2023 + $0x18] sm:$0xf]
    %v2031 = vld [vmem:[%s2023 + $0x1c] sm:$0xf]
    %v2032 = vld [vmem:[%s2023 + $0x20] sm:$0xf]
    %v2033 = vld [vmem:[%s2023 + $0x24] sm:$0xf]
    %v2034 = vld [vmem:[%s2023 + $0x28] sm:$0xf]
    %v2035 = vld [vmem:[%s2023 + $0x2c] sm:$0xf]
    %v2036 = vld [vmem:[%s2023 + $0x30] sm:$0xf]
    %v2037 = vld [vmem:[%s2023 + $0x34] sm:$0xf]
    %v2038 = vld [vmem:[%s2023 + $0x38] sm:$0xf]
    %v2039 = vld [vmem:[%s2023 + $0x3c] sm:$0xf]
    %v2056 = vunpack.c.l.b16 %v2024
    %v2057 = vunpack.c.l.b16 %v2025
    %v2058 = vunpack.c.l.b16 %v2026
    %v2059 = vunpack.c.l.b16 %v2027
    %v2060 = vunpack.c.l.b16 %v2028
    %v2061 = vunpack.c.l.b16 %v2029
    %v2062 = vunpack.c.l.b16 %v2030
    %v2063 = vunpack.c.l.b16 %v2031
    %v2064 = vunpack.c.l.b16 %v2032
    %v2065 = vunpack.c.l.b16 %v2033
    %v2066 = vunpack.c.l.b16 %v2034
    %v2067 = vunpack.c.l.b16 %v2035
    %v2068 = vunpack.c.l.b16 %v2036
    %v2069 = vunpack.c.l.b16 %v2037
    %v2070 = vunpack.c.l.b16 %v2038
    %v2071 = vunpack.c.l.b16 %v2039
    %v2072 = vpack.c.b16 %v2057, %v2056
    %v2073 = vpack.c.b16 %v2059, %v2058
    %v2074 = vpack.c.b16 %v2061, %v2060
    %v2075 = vpack.c.b16 %v2063, %v2062
    %v2076 = vpack.c.b16 %v2065, %v2064
    %v2077 = vpack.c.b16 %v2067, %v2066
    %v2078 = vpack.c.b16 %v2069, %v2068
    %v2079 = vpack.c.b16 %v2071, %v2070
    %2088 = vmatprep.subr.bf16.mxu0 0
    %2089 = vmatpush1.bf16.msra.mxu0 %v2072
    %2090 = vmatprep.subr.bf16.mxu0 0
    %2091 = vmatpush1.bf16.msra.mxu0 %v2073
    %2092 = vmatprep.subr.bf16.mxu0 0
    %2093 = vmatpush1.bf16.msra.mxu0 %v2074
    %2094 = vmatprep.subr.bf16.mxu0 0
    %2095 = vmatpush1.bf16.msra.mxu0 %v2075
    %2096 = vmatprep.subr.bf16.mxu0 0
    %2097 = vmatpush1.bf16.msra.mxu0 %v2076
    %2098 = vmatprep.subr.bf16.mxu0 0
    %2099 = vmatpush1.bf16.msra.mxu0 %v2077
    %2100 = vmatprep.subr.bf16.mxu0 0
    %2101 = vmatpush1.bf16.msra.mxu0 %v2078
    %2102 = vmatprep.subr.bf16.mxu0 0
    %2103 = vmatpush1.bf16.msra.mxu0 %v2079
    %2104 = vmatprep.subr.bf16.mxu0 0
    %2105 = vmatpush1.bf16.msra.mxu0 0
    %2106 = vmatprep.subr.bf16.mxu0 0
    %2107 = vmatpush1.bf16.msra.mxu0 0
    %2108 = vmatprep.subr.bf16.mxu0 0
    %2109 = vmatpush1.bf16.msra.mxu0 0
    %2110 = vmatprep.subr.bf16.mxu0 0
    %2111 = vmatpush1.bf16.msra.mxu0 0
    %2112 = vmatprep.subr.bf16.mxu0 0
    %2113 = vmatpush1.bf16.msra.mxu0 0
    %2114 = vmatprep.subr.bf16.mxu0 0
    %2115 = vmatpush1.bf16.msra.mxu0 0
    %2116 = vmatprep.subr.bf16.mxu0 0
    %2117 = vmatpush1.bf16.msra.mxu0 0
    %2118 = vmatprep.subr.bf16.mxu0 0
    %2119 = vmatpush1.bf16.msra.mxu0 0
    %2120 = vmatprep.mubr.bf16.mxu0 0
    %2121 = vmatmul.mubr.bf16.gmra.mrb[0].mxu0 %v2022
    %v2122 = vpop.f32.mrb[0].mxu0
    %v2123 = vadd.f32 0.0, %v2122
    %v2124 = vpop.f32.mrb[0].mxu0
    %v2125 = vpop.f32.mrb[0].mxu0
    %v2126 = vadd.f32 0.0, %v2125
    %v2127 = vpop.f32.mrb[0].mxu0
    %2128 = vdwg.mxu0
    %v2129 = vadd.f32 %v1968, %v2123
    %v2130 = vadd.f32 %v1969, %v2126
    %v2131 = vld [vmem:[%s9] sm:$0x1]
    %v2133 = vlaneseq
    %v2134 = vshrl.u32 %v2133, 7
    %v2135 = vsub.s32 0, %v2134
    %v2136 = vrot.slane %v2131, %v2135
    %v2138 = vadd.f32 %v2129, %v2136
    %v2139 = vadd.f32 %v2130, %v2136
    %vm2140 = vcmp.ge.f32.partialorder %v2138, 0.0
    %vm2141 = vcmp.ge.f32.partialorder %v2139, 0.0
    %v2142 = vmul.f32 %v2138, 0.2
    %v2143 = vmul.f32 %v2139, 0.2
    %v2144 = vsel %vm2140, %v2138, %v2142
    %v2145 = vsel %vm2141, %v2139, %v2143
    %v2146 = vpack.c.bf16 %v2145, %v2144
    %v2147 = vld [vmem:[%s10] sm:$0xf]
    %v2148 = vld [vmem:[%s10 + $0x4] sm:$0xf]
    %v2151 = vunpack.c.l.b16 %v2147
    %v2152 = vunpack.c.l.b16 %v2148
    %v2153 = vpack.c.b16 %v2152, %v2151
    %v2155 = vsel %vm1499, %v2153, 0
    %2157 = vmatprep.subr.bf16.mxu0 0
    %2158 = vmatpush1.bf16.msra.mxu0 %v2146
    %2159 = vmatprep.subr.bf16.mxu0 0
    %2160 = vmatpush1.bf16.msra.mxu0 0
    %2161 = vmatprep.subr.bf16.mxu0 0
    %2162 = vmatpush1.bf16.msra.mxu0 0
    %2163 = vmatprep.subr.bf16.mxu0 0
    %2164 = vmatpush1.bf16.msra.mxu0 0
    %2165 = vmatprep.subr.bf16.mxu0 0
    %2166 = vmatpush1.bf16.msra.mxu0 0
    %2167 = vmatprep.subr.bf16.mxu0 0
    %2168 = vmatpush1.bf16.msra.mxu0 0
    %2169 = vmatprep.subr.bf16.mxu0 0
    %2170 = vmatpush1.bf16.msra.mxu0 0
    %2171 = vmatprep.subr.bf16.mxu0 0
    %2172 = vmatpush1.bf16.msra.mxu0 0
    %2173 = vmatprep.subr.bf16.mxu0 0
    %2174 = vmatpush1.bf16.msra.mxu0 0
    %2175 = vmatprep.subr.bf16.mxu0 0
    %2176 = vmatpush1.bf16.msra.mxu0 0
    %2177 = vmatprep.subr.bf16.mxu0 0
    %2178 = vmatpush1.bf16.msra.mxu0 0
    %2179 = vmatprep.subr.bf16.mxu0 0
    %2180 = vmatpush1.bf16.msra.mxu0 0
    %2181 = vmatprep.subr.bf16.mxu0 0
    %2182 = vmatpush1.bf16.msra.mxu0 0
    %2183 = vmatprep.subr.bf16.mxu0 0
    %2184 = vmatpush1.bf16.msra.mxu0 0
    %2185 = vmatprep.subr.bf16.mxu0 0
    %2186 = vmatpush1.bf16.msra.mxu0 0
    %2187 = vmatprep.subr.bf16.mxu0 0
    %2188 = vmatpush1.bf16.msra.mxu0 0
    %2189 = vmatprep.mubr.bf16.mxu0 0
    %2190 = vmatmul.mubr.bf16.gmra.mrb[0].mxu0 %v2155
    %v2191 = vpop.f32.mrb[0].mxu0
    %v2192 = vadd.f32 0.0, %v2191
    %v2193 = vpop.f32.mrb[0].mxu0
    %v2194 = vpop.f32.mrb[0].mxu0
    %v2195 = vadd.f32 0.0, %v2194
    %v2196 = vpop.f32.mrb[0].mxu0
    %2197 = vdwg.mxu0
    %v2198 = vpack.c.bf16 %v2195, %v2192
    %v2199 = vld [vmem:[%s11] sm:$0xff]
    %v2200 = vld [vmem:[%s11 + $0x8] sm:$0xff]
    %v2201 = vld [vmem:[%s11 + $0x10] sm:$0xff]
    %v2202 = vld [vmem:[%s11 + $0x18] sm:$0xff]
    %v2203 = vld [vmem:[%s11 + $0x20] sm:$0xff]
    %v2204 = vld [vmem:[%s11 + $0x28] sm:$0xff]
    %v2205 = vld [vmem:[%s11 + $0x30] sm:$0xff]
    %v2206 = vld [vmem:[%s11 + $0x38] sm:$0xff]
    %v2207 = vld [vmem:[%s11 + $0x40] sm:$0xff]
    %v2208 = vld [vmem:[%s11 + $0x48] sm:$0xff]
    %v2209 = vld [vmem:[%s11 + $0x50] sm:$0xff]
    %v2210 = vld [vmem:[%s11 + $0x58] sm:$0xff]
    %v2211 = vld [vmem:[%s11 + $0x60] sm:$0xff]
    %v2212 = vld [vmem:[%s11 + $0x68] sm:$0xff]
    %v2213 = vld [vmem:[%s11 + $0x70] sm:$0xff]
    %v2214 = vld [vmem:[%s11 + $0x78] sm:$0xff]
    %s2215 = scalar_lea.vmem %s10, 8
    %v2216 = vld [vmem:[%s2215] sm:$0xf]
    %v2217 = vld [vmem:[%s2215 + $0x4] sm:$0xf]
    %v2220 = vunpack.c.l.b16 %v2216
    %v2221 = vunpack.c.l.b16 %v2217
    %v2222 = vpack.c.b16 %v2221, %v2220
    %v2224 = vsel %vm1499, %v2222, 0
    %2226 = vmatprep.subr.bf16.mxu0 0
    %2227 = vmatpush1.bf16.msra.mxu0 %v2146
    %2228 = vmatprep.subr.bf16.mxu0 0
    %2229 = vmatpush1.bf16.msra.mxu0 0
    %2230 = vmatprep.subr.bf16.mxu0 0
    %2231 = vmatpush1.bf16.msra.mxu0 0
    %2232 = vmatprep.subr.bf16.mxu0 0
    %2233 = vmatpush1.bf16.msra.mxu0 0
    %2234 = vmatprep.subr.bf16.mxu0 0
    %2235 = vmatpush1.bf16.msra.mxu0 0
    %2236 = vmatprep.subr.bf16.mxu0 0
    %2237 = vmatpush1.bf16.msra.mxu0 0
    %2238 = vmatprep.subr.bf16.mxu0 0
    %2239 = vmatpush1.bf16.msra.mxu0 0
    %2240 = vmatprep.subr.bf16.mxu0 0
    %2241 = vmatpush1.bf16.msra.mxu0 0
    %2242 = vmatprep.subr.bf16.mxu0 0
    %2243 = vmatpush1.bf16.msra.mxu0 0
    %2244 = vmatprep.subr.bf16.mxu0 0
    %2245 = vmatpush1.bf16.msra.mxu0 0
    %2246 = vmatprep.subr.bf16.mxu0 0
    %2247 = vmatpush1.bf16.msra.mxu0 0
    %2248 = vmatprep.subr.bf16.mxu0 0
    %2249 = vmatpush1.bf16.msra.mxu0 0
    %2250 = vmatprep.subr.bf16.mxu0 0
    %2251 = vmatpush1.bf16.msra.mxu0 0
    %2252 = vmatprep.subr.bf16.mxu0 0
    %2253 = vmatpush1.bf16.msra.mxu0 0
    %2254 = vmatprep.subr.bf16.mxu0 0
    %2255 = vmatpush1.bf16.msra.mxu0 0
    %2256 = vmatprep.subr.bf16.mxu0 0
    %2257 = vmatpush1.bf16.msra.mxu0 0
    %2258 = vmatprep.mubr.bf16.mxu0 0
    %2259 = vmatmul.mubr.bf16.gmra.mrb[0].mxu0 %v2224
    %v2260 = vpop.f32.mrb[0].mxu0
    %v2261 = vadd.f32 0.0, %v2260
    %v2262 = vpop.f32.mrb[0].mxu0
    %v2263 = vpop.f32.mrb[0].mxu0
    %v2264 = vadd.f32 0.0, %v2263
    %v2265 = vpop.f32.mrb[0].mxu0
    %2266 = vdwg.mxu0
    %v2267 = vpack.c.bf16 %v2264, %v2261
    %s2268 = scalar_lea.vmem %s11, 128
    %v2269 = vld [vmem:[%s2268] sm:$0xff]
    %v2270 = vld [vmem:[%s2268 + $0x8] sm:$0xff]
    %v2271 = vld [vmem:[%s2268 + $0x10] sm:$0xff]
    %v2272 = vld [vmem:[%s2268 + $0x18] sm:$0xff]
    %v2273 = vld [vmem:[%s2268 + $0x20] sm:$0xff]
    %v2274 = vld [vmem:[%s2268 + $0x28] sm:$0xff]
    %v2275 = vld [vmem:[%s2268 + $0x30] sm:$0xff]
    %v2276 = vld [vmem:[%s2268 + $0x38] sm:$0xff]
    %v2277 = vld [vmem:[%s2268 + $0x40] sm:$0xff]
    %v2278 = vld [vmem:[%s2268 + $0x48] sm:$0xff]
    %v2279 = vld [vmem:[%s2268 + $0x50] sm:$0xff]
    %v2280 = vld [vmem:[%s2268 + $0x58] sm:$0xff]
    %v2281 = vld [vmem:[%s2268 + $0x60] sm:$0xff]
    %v2282 = vld [vmem:[%s2268 + $0x68] sm:$0xff]
    %v2283 = vld [vmem:[%s2268 + $0x70] sm:$0xff]
    %v2284 = vld [vmem:[%s2268 + $0x78] sm:$0xff]
    %v2301 = vunpack.c.l.b16 %v2269
    %v2302 = vunpack.c.h.b16 %v2269
    %v2303 = vunpack.c.l.b16 %v2270
    %v2304 = vunpack.c.h.b16 %v2270
    %v2305 = vunpack.c.l.b16 %v2271
    %v2306 = vunpack.c.h.b16 %v2271
    %v2307 = vunpack.c.l.b16 %v2272
    %v2308 = vunpack.c.h.b16 %v2272
    %v2309 = vunpack.c.l.b16 %v2273
    %v2310 = vunpack.c.h.b16 %v2273
    %v2311 = vunpack.c.l.b16 %v2274
    %v2312 = vunpack.c.h.b16 %v2274
    %v2313 = vunpack.c.l.b16 %v2275
    %v2314 = vunpack.c.h.b16 %v2275
    %v2315 = vunpack.c.l.b16 %v2276
    %v2316 = vunpack.c.h.b16 %v2276
    %v2317 = vunpack.c.l.b16 %v2277
    %v2318 = vunpack.c.h.b16 %v2277
    %v2319 = vunpack.c.l.b16 %v2278
    %v2320 = vunpack.c.h.b16 %v2278
    %v2321 = vunpack.c.l.b16 %v2279
    %v2322 = vunpack.c.h.b16 %v2279
    %v2323 = vunpack.c.l.b16 %v2280
    %v2324 = vunpack.c.h.b16 %v2280
    %v2325 = vunpack.c.l.b16 %v2281
    %v2326 = vunpack.c.h.b16 %v2281
    %v2327 = vunpack.c.l.b16 %v2282
    %v2328 = vunpack.c.h.b16 %v2282
    %v2329 = vunpack.c.l.b16 %v2283
    %v2330 = vunpack.c.h.b16 %v2283
    %v2331 = vunpack.c.l.b16 %v2284
    %v2332 = vunpack.c.h.b16 %v2284
    %v2333 = vpack.c.b16 %v2303, %v2301
    %v2334 = vpack.c.b16 %v2304, %v2302
    %v2335 = vpack.c.b16 %v2307, %v2305
    %v2336 = vpack.c.b16 %v2308, %v2306
    %v2337 = vpack.c.b16 %v2311, %v2309
    %v2338 = vpack.c.b16 %v2312, %v2310
    %v2339 = vpack.c.b16 %v2315, %v2313
    %v2340 = vpack.c.b16 %v2316, %v2314
    %v2341 = vpack.c.b16 %v2319, %v2317
    %v2342 = vpack.c.b16 %v2320, %v2318
    %v2343 = vpack.c.b16 %v2323, %v2321
    %v2344 = vpack.c.b16 %v2324, %v2322
    %v2345 = vpack.c.b16 %v2327, %v2325
    %v2346 = vpack.c.b16 %v2328, %v2326
    %v2347 = vpack.c.b16 %v2331, %v2329
    %v2348 = vpack.c.b16 %v2332, %v2330
    %2365 = vmatprep.subr.bf16.mxu0 %v2334
    %2366 = vmatpush1.bf16.msra.mxu0 %v2333
    %2367 = vmatprep.subr.bf16.mxu0 %v2336
    %2368 = vmatpush1.bf16.msra.mxu0 %v2335
    %2369 = vmatprep.subr.bf16.mxu0 %v2338
    %2370 = vmatpush1.bf16.msra.mxu0 %v2337
    %2371 = vmatprep.subr.bf16.mxu0 %v2340
    %2372 = vmatpush1.bf16.msra.mxu0 %v2339
    %2373 = vmatprep.subr.bf16.mxu0 %v2342
    %2374 = vmatpush1.bf16.msra.mxu0 %v2341
    %2375 = vmatprep.subr.bf16.mxu0 %v2344
    %2376 = vmatpush1.bf16.msra.mxu0 %v2343
    %2377 = vmatprep.subr.bf16.mxu0 %v2346
    %2378 = vmatpush1.bf16.msra.mxu0 %v2345
    %2379 = vmatprep.subr.bf16.mxu0 %v2348
    %2380 = vmatpush1.bf16.msra.mxu0 %v2347
    %2381 = vmatprep.subr.bf16.mxu0 0
    %2382 = vmatpush1.bf16.msra.mxu0 0
    %2383 = vmatprep.subr.bf16.mxu0 0
    %2384 = vmatpush1.bf16.msra.mxu0 0
    %2385 = vmatprep.subr.bf16.mxu0 0
    %2386 = vmatpush1.bf16.msra.mxu0 0
    %2387 = vmatprep.subr.bf16.mxu0 0
    %2388 = vmatpush1.bf16.msra.mxu0 0
    %2389 = vmatprep.subr.bf16.mxu0 0
    %2390 = vmatpush1.bf16.msra.mxu0 0
    %2391 = vmatprep.subr.bf16.mxu0 0
    %2392 = vmatpush1.bf16.msra.mxu0 0
    %2393 = vmatprep.subr.bf16.mxu0 0
    %2394 = vmatpush1.bf16.msra.mxu0 0
    %2395 = vmatprep.subr.bf16.mxu0 0
    %2396 = vmatpush1.bf16.msra.mxu0 0
    %2397 = vmatprep.mubr.bf16.mxu0 0
    %2398 = vmatmul.mubr.bf16.gmra.mrb[0].mxu0 %v2267
    %v2399 = vpop.f32.mrb[0].mxu0
    %v2400 = vadd.f32 0.0, %v2399
    %v2401 = vpop.f32.mrb[0].mxu0
    %v2402 = vadd.f32 0.0, %v2401
    %v2403 = vpop.f32.mrb[0].mxu0
    %v2404 = vadd.f32 0.0, %v2403
    %v2405 = vpop.f32.mrb[0].mxu0
    %v2406 = vadd.f32 0.0, %v2405
    %2407 = vdwg.mxu0
    %v2424 = vunpack.c.l.b16 %v2199
    %v2425 = vunpack.c.h.b16 %v2199
    %v2426 = vunpack.c.l.b16 %v2200
    %v2427 = vunpack.c.h.b16 %v2200
    %v2428 = vunpack.c.l.b16 %v2201
    %v2429 = vunpack.c.h.b16 %v2201
    %v2430 = vunpack.c.l.b16 %v2202
    %v2431 = vunpack.c.h.b16 %v2202
    %v2432 = vunpack.c.l.b16 %v2203
    %v2433 = vunpack.c.h.b16 %v2203
    %v2434 = vunpack.c.l.b16 %v2204
    %v2435 = vunpack.c.h.b16 %v2204
    %v2436 = vunpack.c.l.b16 %v2205
    %v2437 = vunpack.c.h.b16 %v2205
    %v2438 = vunpack.c.l.b16 %v2206
    %v2439 = vunpack.c.h.b16 %v2206
    %v2440 = vunpack.c.l.b16 %v2207
    %v2441 = vunpack.c.h.b16 %v2207
    %v2442 = vunpack.c.l.b16 %v2208
    %v2443 = vunpack.c.h.b16 %v2208
    %v2444 = vunpack.c.l.b16 %v2209
    %v2445 = vunpack.c.h.b16 %v2209
    %v2446 = vunpack.c.l.b16 %v2210
    %v2447 = vunpack.c.h.b16 %v2210
    %v2448 = vunpack.c.l.b16 %v2211
    %v2449 = vunpack.c.h.b16 %v2211
    %v2450 = vunpack.c.l.b16 %v2212
    %v2451 = vunpack.c.h.b16 %v2212
    %v2452 = vunpack.c.l.b16 %v2213
    %v2453 = vunpack.c.h.b16 %v2213
    %v2454 = vunpack.c.l.b16 %v2214
    %v2455 = vunpack.c.h.b16 %v2214
    %v2456 = vpack.c.b16 %v2426, %v2424
    %v2457 = vpack.c.b16 %v2427, %v2425
    %v2458 = vpack.c.b16 %v2430, %v2428
    %v2459 = vpack.c.b16 %v2431, %v2429
    %v2460 = vpack.c.b16 %v2434, %v2432
    %v2461 = vpack.c.b16 %v2435, %v2433
    %v2462 = vpack.c.b16 %v2438, %v2436
    %v2463 = vpack.c.b16 %v2439, %v2437
    %v2464 = vpack.c.b16 %v2442, %v2440
    %v2465 = vpack.c.b16 %v2443, %v2441
    %v2466 = vpack.c.b16 %v2446, %v2444
    %v2467 = vpack.c.b16 %v2447, %v2445
    %v2468 = vpack.c.b16 %v2450, %v2448
    %v2469 = vpack.c.b16 %v2451, %v2449
    %v2470 = vpack.c.b16 %v2454, %v2452
    %v2471 = vpack.c.b16 %v2455, %v2453
    %2488 = vmatprep.subr.bf16.mxu0 %v2457
    %2489 = vmatpush1.bf16.msra.mxu0 %v2456
    %2490 = vmatprep.subr.bf16.mxu0 %v2459
    %2491 = vmatpush1.bf16.msra.mxu0 %v2458
    %2492 = vmatprep.subr.bf16.mxu0 %v2461
    %2493 = vmatpush1.bf16.msra.mxu0 %v2460
    %2494 = vmatprep.subr.bf16.mxu0 %v2463
    %2495 = vmatpush1.bf16.msra.mxu0 %v2462
    %2496 = vmatprep.subr.bf16.mxu0 %v2465
    %2497 = vmatpush1.bf16.msra.mxu0 %v2464
    %2498 = vmatprep.subr.bf16.mxu0 %v2467
    %2499 = vmatpush1.bf16.msra.mxu0 %v2466
    %2500 = vmatprep.subr.bf16.mxu0 %v2469
    %2501 = vmatpush1.bf16.msra.mxu0 %v2468
    %2502 = vmatprep.subr.bf16.mxu0 %v2471
    %2503 = vmatpush1.bf16.msra.mxu0 %v2470
    %2504 = vmatprep.subr.bf16.mxu0 0
    %2505 = vmatpush1.bf16.msra.mxu0 0
    %2506 = vmatprep.subr.bf16.mxu0 0
    %2507 = vmatpush1.bf16.msra.mxu0 0
    %2508 = vmatprep.subr.bf16.mxu0 0
    %2509 = vmatpush1.bf16.msra.mxu0 0
    %2510 = vmatprep.subr.bf16.mxu0 0
    %2511 = vmatpush1.bf16.msra.mxu0 0
    %2512 = vmatprep.subr.bf16.mxu0 0
    %2513 = vmatpush1.bf16.msra.mxu0 0
    %2514 = vmatprep.subr.bf16.mxu0 0
    %2515 = vmatpush1.bf16.msra.mxu0 0
    %2516 = vmatprep.subr.bf16.mxu0 0
    %2517 = vmatpush1.bf16.msra.mxu0 0
    %2518 = vmatprep.subr.bf16.mxu0 0
    %2519 = vmatpush1.bf16.msra.mxu0 0
    %2520 = vmatprep.mubr.bf16.mxu0 0
    %2521 = vmatmul.mubr.bf16.gmra.mrb[0].mxu0 %v2198
    %v2522 = vpop.f32.mrb[0].mxu0
    %v2523 = vadd.f32 %v2400, %v2522
    %v2524 = vpop.f32.mrb[0].mxu0
    %v2525 = vadd.f32 %v2402, %v2524
    %v2526 = vpop.f32.mrb[0].mxu0
    %v2527 = vadd.f32 %v2404, %v2526
    %v2528 = vpop.f32.mrb[0].mxu0
    %v2529 = vadd.f32 %v2406, %v2528
    %2530 = vdwg.mxu0
    %s2531 = scalar_lea.vmem %s10, 16
    %v2532 = vld [vmem:[%s2531] sm:$0xf]
    %v2533 = vld [vmem:[%s2531 + $0x4] sm:$0xf]
    %v2536 = vunpack.c.l.b16 %v2532
    %v2537 = vunpack.c.l.b16 %v2533
    %v2538 = vpack.c.b16 %v2537, %v2536
    %v2540 = vsel %vm1499, %v2538, 0
    %2542 = vmatprep.subr.bf16.mxu0 0
    %2543 = vmatpush1.bf16.msra.mxu0 %v2146
    %2544 = vmatprep.subr.bf16.mxu0 0
    %2545 = vmatpush1.bf16.msra.mxu0 0
    %2546 = vmatprep.subr.bf16.mxu0 0
    %2547 = vmatpush1.bf16.msra.mxu0 0
    %2548 = vmatprep.subr.bf16.mxu0 0
    %2549 = vmatpush1.bf16.msra.mxu0 0
    %2550 = vmatprep.subr.bf16.mxu0 0
    %2551 = vmatpush1.bf16.msra.mxu0 0
    %2552 = vmatprep.subr.bf16.mxu0 0
    %2553 = vmatpush1.bf16.msra.mxu0 0
    %2554 = vmatprep.subr.bf16.mxu0 0
    %2555 = vmatpush1.bf16.msra.mxu0 0
    %2556 = vmatprep.subr.bf16.mxu0 0
    %2557 = vmatpush1.bf16.msra.mxu0 0
    %2558 = vmatprep.subr.bf16.mxu0 0
    %2559 = vmatpush1.bf16.msra.mxu0 0
    %2560 = vmatprep.subr.bf16.mxu0 0
    %2561 = vmatpush1.bf16.msra.mxu0 0
    %2562 = vmatprep.subr.bf16.mxu0 0
    %2563 = vmatpush1.bf16.msra.mxu0 0
    %2564 = vmatprep.subr.bf16.mxu0 0
    %2565 = vmatpush1.bf16.msra.mxu0 0
    %2566 = vmatprep.subr.bf16.mxu0 0
    %2567 = vmatpush1.bf16.msra.mxu0 0
    %2568 = vmatprep.subr.bf16.mxu0 0
    %2569 = vmatpush1.bf16.msra.mxu0 0
    %2570 = vmatprep.subr.bf16.mxu0 0
    %2571 = vmatpush1.bf16.msra.mxu0 0
    %2572 = vmatprep.subr.bf16.mxu0 0
    %2573 = vmatpush1.bf16.msra.mxu0 0
    %2574 = vmatprep.mubr.bf16.mxu0 0
    %2575 = vmatmul.mubr.bf16.gmra.mrb[0].mxu0 %v2540
    %v2576 = vpop.f32.mrb[0].mxu0
    %v2577 = vadd.f32 0.0, %v2576
    %v2578 = vpop.f32.mrb[0].mxu0
    %v2579 = vpop.f32.mrb[0].mxu0
    %v2580 = vadd.f32 0.0, %v2579
    %v2581 = vpop.f32.mrb[0].mxu0
    %2582 = vdwg.mxu0
    %v2583 = vpack.c.bf16 %v2580, %v2577
    %s2584 = scalar_lea.vmem %s11, 256
    %v2585 = vld [vmem:[%s2584] sm:$0xff]
    %v2586 = vld [vmem:[%s2584 + $0x8] sm:$0xff]
    %v2587 = vld [vmem:[%s2584 + $0x10] sm:$0xff]
    %v2588 = vld [vmem:[%s2584 + $0x18] sm:$0xff]
    %v2589 = vld [vmem:[%s2584 + $0x20] sm:$0xff]
    %v2590 = vld [vmem:[%s2584 + $0x28] sm:$0xff]
    %v2591 = vld [vmem:[%s2584 + $0x30] sm:$0xff]
    %v2592 = vld [vmem:[%s2584 + $0x38] sm:$0xff]
    %v2593 = vld [vmem:[%s2584 + $0x40] sm:$0xff]
    %v2594 = vld [vmem:[%s2584 + $0x48] sm:$0xff]
    %v2595 = vld [vmem:[%s2584 + $0x50] sm:$0xff]
    %v2596 = vld [vmem:[%s2584 + $0x58] sm:$0xff]
    %v2597 = vld [vmem:[%s2584 + $0x60] sm:$0xff]
    %v2598 = vld [vmem:[%s2584 + $0x68] sm:$0xff]
    %v2599 = vld [vmem:[%s2584 + $0x70] sm:$0xff]
    %v2600 = vld [vmem:[%s2584 + $0x78] sm:$0xff]
    %v2617 = vunpack.c.l.b16 %v2585
    %v2618 = vunpack.c.h.b16 %v2585
    %v2619 = vunpack.c.l.b16 %v2586
    %v2620 = vunpack.c.h.b16 %v2586
    %v2621 = vunpack.c.l.b16 %v2587
    %v2622 = vunpack.c.h.b16 %v2587
    %v2623 = vunpack.c.l.b16 %v2588
    %v2624 = vunpack.c.h.b16 %v2588
    %v2625 = vunpack.c.l.b16 %v2589
    %v2626 = vunpack.c.h.b16 %v2589
    %v2627 = vunpack.c.l.b16 %v2590
    %v2628 = vunpack.c.h.b16 %v2590
    %v2629 = vunpack.c.l.b16 %v2591
    %v2630 = vunpack.c.h.b16 %v2591
    %v2631 = vunpack.c.l.b16 %v2592
    %v2632 = vunpack.c.h.b16 %v2592
    %v2633 = vunpack.c.l.b16 %v2593
    %v2634 = vunpack.c.h.b16 %v2593
    %v2635 = vunpack.c.l.b16 %v2594
    %v2636 = vunpack.c.h.b16 %v2594
    %v2637 = vunpack.c.l.b16 %v2595
    %v2638 = vunpack.c.h.b16 %v2595
    %v2639 = vunpack.c.l.b16 %v2596
    %v2640 = vunpack.c.h.b16 %v2596
    %v2641 = vunpack.c.l.b16 %v2597
    %v2642 = vunpack.c.h.b16 %v2597
    %v2643 = vunpack.c.l.b16 %v2598
    %v2644 = vunpack.c.h.b16 %v2598
    %v2645 = vunpack.c.l.b16 %v2599
    %v2646 = vunpack.c.h.b16 %v2599
    %v2647 = vunpack.c.l.b16 %v2600
    %v2648 = vunpack.c.h.b16 %v2600
    %v2649 = vpack.c.b16 %v2619, %v2617
    %v2650 = vpack.c.b16 %v2620, %v2618
    %v2651 = vpack.c.b16 %v2623, %v2621
    %v2652 = vpack.c.b16 %v2624, %v2622
    %v2653 = vpack.c.b16 %v2627, %v2625
    %v2654 = vpack.c.b16 %v2628, %v2626
    %v2655 = vpack.c.b16 %v2631, %v2629
    %v2656 = vpack.c.b16 %v2632, %v2630
    %v2657 = vpack.c.b16 %v2635, %v2633
    %v2658 = vpack.c.b16 %v2636, %v2634
    %v2659 = vpack.c.b16 %v2639, %v2637
    %v2660 = vpack.c.b16 %v2640, %v2638
    %v2661 = vpack.c.b16 %v2643, %v2641
    %v2662 = vpack.c.b16 %v2644, %v2642
    %v2663 = vpack.c.b16 %v2647, %v2645
    %v2664 = vpack.c.b16 %v2648, %v2646
    %2681 = vmatprep.subr.bf16.mxu0 %v2650
    %2682 = vmatpush1.bf16.msra.mxu0 %v2649
    %2683 = vmatprep.subr.bf16.mxu0 %v2652
    %2684 = vmatpush1.bf16.msra.mxu0 %v2651
    %2685 = vmatprep.subr.bf16.mxu0 %v2654
    %2686 = vmatpush1.bf16.msra.mxu0 %v2653
    %2687 = vmatprep.subr.bf16.mxu0 %v2656
    %2688 = vmatpush1.bf16.msra.mxu0 %v2655
    %2689 = vmatprep.subr.bf16.mxu0 %v2658
    %2690 = vmatpush1.bf16.msra.mxu0 %v2657
    %2691 = vmatprep.subr.bf16.mxu0 %v2660
    %2692 = vmatpush1.bf16.msra.mxu0 %v2659
    %2693 = vmatprep.subr.bf16.mxu0 %v2662
    %2694 = vmatpush1.bf16.msra.mxu0 %v2661
    %2695 = vmatprep.subr.bf16.mxu0 %v2664
    %2696 = vmatpush1.bf16.msra.mxu0 %v2663
    %2697 = vmatprep.subr.bf16.mxu0 0
    %2698 = vmatpush1.bf16.msra.mxu0 0
    %2699 = vmatprep.subr.bf16.mxu0 0
    %2700 = vmatpush1.bf16.msra.mxu0 0
    %2701 = vmatprep.subr.bf16.mxu0 0
    %2702 = vmatpush1.bf16.msra.mxu0 0
    %2703 = vmatprep.subr.bf16.mxu0 0
    %2704 = vmatpush1.bf16.msra.mxu0 0
    %2705 = vmatprep.subr.bf16.mxu0 0
    %2706 = vmatpush1.bf16.msra.mxu0 0
    %2707 = vmatprep.subr.bf16.mxu0 0
    %2708 = vmatpush1.bf16.msra.mxu0 0
    %2709 = vmatprep.subr.bf16.mxu0 0
    %2710 = vmatpush1.bf16.msra.mxu0 0
    %2711 = vmatprep.subr.bf16.mxu0 0
    %2712 = vmatpush1.bf16.msra.mxu0 0
    %2713 = vmatprep.mubr.bf16.mxu0 0
    %2714 = vmatmul.mubr.bf16.gmra.mrb[0].mxu0 %v2583
    %v2715 = vpop.f32.mrb[0].mxu0
    %v2716 = vadd.f32 0.0, %v2715
    %v2717 = vpop.f32.mrb[0].mxu0
    %v2718 = vadd.f32 0.0, %v2717
    %v2719 = vpop.f32.mrb[0].mxu0
    %v2720 = vadd.f32 0.0, %v2719
    %v2721 = vpop.f32.mrb[0].mxu0
    %v2722 = vadd.f32 0.0, %v2721
    %2723 = vdwg.mxu0
    %v2724 = vadd.f32 %v2523, %v2716
    %v2725 = vadd.f32 %v2525, %v2718
    %v2726 = vadd.f32 %v2527, %v2720
    %v2727 = vadd.f32 %v2529, %v2722
    %s2728 = scalar_lea.vmem %s10, 24
    %v2729 = vld [vmem:[%s2728] sm:$0xf]
    %v2730 = vld [vmem:[%s2728 + $0x4] sm:$0xf]
    %v2733 = vunpack.c.l.b16 %v2729
    %v2734 = vunpack.c.l.b16 %v2730
    %v2735 = vpack.c.b16 %v2734, %v2733
    %v2737 = vsel %vm1499, %v2735, 0
    %2739 = vmatprep.subr.bf16.mxu0 0
    %2740 = vmatpush1.bf16.msra.mxu0 %v2146
    %2741 = vmatprep.subr.bf16.mxu0 0
    %2742 = vmatpush1.bf16.msra.mxu0 0
    %2743 = vmatprep.subr.bf16.mxu0 0
    %2744 = vmatpush1.bf16.msra.mxu0 0
    %2745 = vmatprep.subr.bf16.mxu0 0
    %2746 = vmatpush1.bf16.msra.mxu0 0
    %2747 = vmatprep.subr.bf16.mxu0 0
    %2748 = vmatpush1.bf16.msra.mxu0 0
    %2749 = vmatprep.subr.bf16.mxu0 0
    %2750 = vmatpush1.bf16.msra.mxu0 0
    %2751 = vmatprep.subr.bf16.mxu0 0
    %2752 = vmatpush1.bf16.msra.mxu0 0
    %2753 = vmatprep.subr.bf16.mxu0 0
    %2754 = vmatpush1.bf16.msra.mxu0 0
    %2755 = vmatprep.subr.bf16.mxu0 0
    %2756 = vmatpush1.bf16.msra.mxu0 0
    %2757 = vmatprep.subr.bf16.mxu0 0
    %2758 = vmatpush1.bf16.msra.mxu0 0
    %2759 = vmatprep.subr.bf16.mxu0 0
    %2760 = vmatpush1.bf16.msra.mxu0 0
    %2761 = vmatprep.subr.bf16.mxu0 0
    %2762 = vmatpush1.bf16.msra.mxu0 0
    %2763 = vmatprep.subr.bf16.mxu0 0
    %2764 = vmatpush1.bf16.msra.mxu0 0
    %2765 = vmatprep.subr.bf16.mxu0 0
    %2766 = vmatpush1.bf16.msra.mxu0 0
    %2767 = vmatprep.subr.bf16.mxu0 0
    %2768 = vmatpush1.bf16.msra.mxu0 0
    %2769 = vmatprep.subr.bf16.mxu0 0
    %2770 = vmatpush1.bf16.msra.mxu0 0
    %2771 = vmatprep.mubr.bf16.mxu0 0
    %2772 = vmatmul.mubr.bf16.gmra.mrb[0].mxu0 %v2737
    %v2773 = vpop.f32.mrb[0].mxu0
    %v2774 = vadd.f32 0.0, %v2773
    %v2775 = vpop.f32.mrb[0].mxu0
    %v2776 = vpop.f32.mrb[0].mxu0
    %v2777 = vadd.f32 0.0, %v2776
    %v2778 = vpop.f32.mrb[0].mxu0
    %2779 = vdwg.mxu0
    %v2780 = vpack.c.bf16 %v2777, %v2774
    %s2781 = scalar_lea.vmem %s11, 384
    %v2782 = vld [vmem:[%s2781] sm:$0xff]
    %v2783 = vld [vmem:[%s2781 + $0x8] sm:$0xff]
    %v2784 = vld [vmem:[%s2781 + $0x10] sm:$0xff]
    %v2785 = vld [vmem:[%s2781 + $0x18] sm:$0xff]
    %v2786 = vld [vmem:[%s2781 + $0x20] sm:$0xff]
    %v2787 = vld [vmem:[%s2781 + $0x28] sm:$0xff]
    %v2788 = vld [vmem:[%s2781 + $0x30] sm:$0xff]
    %v2789 = vld [vmem:[%s2781 + $0x38] sm:$0xff]
    %v2790 = vld [vmem:[%s2781 + $0x40] sm:$0xff]
    %v2791 = vld [vmem:[%s2781 + $0x48] sm:$0xff]
    %v2792 = vld [vmem:[%s2781 + $0x50] sm:$0xff]
    %v2793 = vld [vmem:[%s2781 + $0x58] sm:$0xff]
    %v2794 = vld [vmem:[%s2781 + $0x60] sm:$0xff]
    %v2795 = vld [vmem:[%s2781 + $0x68] sm:$0xff]
    %v2796 = vld [vmem:[%s2781 + $0x70] sm:$0xff]
    %v2797 = vld [vmem:[%s2781 + $0x78] sm:$0xff]
    %v2814 = vunpack.c.l.b16 %v2782
    %v2815 = vunpack.c.h.b16 %v2782
    %v2816 = vunpack.c.l.b16 %v2783
    %v2817 = vunpack.c.h.b16 %v2783
    %v2818 = vunpack.c.l.b16 %v2784
    %v2819 = vunpack.c.h.b16 %v2784
    %v2820 = vunpack.c.l.b16 %v2785
    %v2821 = vunpack.c.h.b16 %v2785
    %v2822 = vunpack.c.l.b16 %v2786
    %v2823 = vunpack.c.h.b16 %v2786
    %v2824 = vunpack.c.l.b16 %v2787
    %v2825 = vunpack.c.h.b16 %v2787
    %v2826 = vunpack.c.l.b16 %v2788
    %v2827 = vunpack.c.h.b16 %v2788
    %v2828 = vunpack.c.l.b16 %v2789
    %v2829 = vunpack.c.h.b16 %v2789
    %v2830 = vunpack.c.l.b16 %v2790
    %v2831 = vunpack.c.h.b16 %v2790
    %v2832 = vunpack.c.l.b16 %v2791
    %v2833 = vunpack.c.h.b16 %v2791
    %v2834 = vunpack.c.l.b16 %v2792
    %v2835 = vunpack.c.h.b16 %v2792
    %v2836 = vunpack.c.l.b16 %v2793
    %v2837 = vunpack.c.h.b16 %v2793
    %v2838 = vunpack.c.l.b16 %v2794
    %v2839 = vunpack.c.h.b16 %v2794
    %v2840 = vunpack.c.l.b16 %v2795
    %v2841 = vunpack.c.h.b16 %v2795
    %v2842 = vunpack.c.l.b16 %v2796
    %v2843 = vunpack.c.h.b16 %v2796
    %v2844 = vunpack.c.l.b16 %v2797
    %v2845 = vunpack.c.h.b16 %v2797
    %v2846 = vpack.c.b16 %v2816, %v2814
    %v2847 = vpack.c.b16 %v2817, %v2815
    %v2848 = vpack.c.b16 %v2820, %v2818
    %v2849 = vpack.c.b16 %v2821, %v2819
    %v2850 = vpack.c.b16 %v2824, %v2822
    %v2851 = vpack.c.b16 %v2825, %v2823
    %v2852 = vpack.c.b16 %v2828, %v2826
    %v2853 = vpack.c.b16 %v2829, %v2827
    %v2854 = vpack.c.b16 %v2832, %v2830
    %v2855 = vpack.c.b16 %v2833, %v2831
    %v2856 = vpack.c.b16 %v2836, %v2834
    %v2857 = vpack.c.b16 %v2837, %v2835
    %v2858 = vpack.c.b16 %v2840, %v2838
    %v2859 = vpack.c.b16 %v2841, %v2839
    %v2860 = vpack.c.b16 %v2844, %v2842
    %v2861 = vpack.c.b16 %v2845, %v2843
    %2878 = vmatprep.subr.bf16.mxu0 %v2847
    %2879 = vmatpush1.bf16.msra.mxu0 %v2846
    %2880 = vmatprep.subr.bf16.mxu0 %v2849
    %2881 = vmatpush1.bf16.msra.mxu0 %v2848
    %2882 = vmatprep.subr.bf16.mxu0 %v2851
    %2883 = vmatpush1.bf16.msra.mxu0 %v2850
    %2884 = vmatprep.subr.bf16.mxu0 %v2853
    %2885 = vmatpush1.bf16.msra.mxu0 %v2852
    %2886 = vmatprep.subr.bf16.mxu0 %v2855
    %2887 = vmatpush1.bf16.msra.mxu0 %v2854
    %2888 = vmatprep.subr.bf16.mxu0 %v2857
    %2889 = vmatpush1.bf16.msra.mxu0 %v2856
    %2890 = vmatprep.subr.bf16.mxu0 %v2859
    %2891 = vmatpush1.bf16.msra.mxu0 %v2858
    %2892 = vmatprep.subr.bf16.mxu0 %v2861
    %2893 = vmatpush1.bf16.msra.mxu0 %v2860
    %2894 = vmatprep.subr.bf16.mxu0 0
    %2895 = vmatpush1.bf16.msra.mxu0 0
    %2896 = vmatprep.subr.bf16.mxu0 0
    %2897 = vmatpush1.bf16.msra.mxu0 0
    %2898 = vmatprep.subr.bf16.mxu0 0
    %2899 = vmatpush1.bf16.msra.mxu0 0
    %2900 = vmatprep.subr.bf16.mxu0 0
    %2901 = vmatpush1.bf16.msra.mxu0 0
    %2902 = vmatprep.subr.bf16.mxu0 0
    %2903 = vmatpush1.bf16.msra.mxu0 0
    %2904 = vmatprep.subr.bf16.mxu0 0
    %2905 = vmatpush1.bf16.msra.mxu0 0
    %2906 = vmatprep.subr.bf16.mxu0 0
    %2907 = vmatpush1.bf16.msra.mxu0 0
    %2908 = vmatprep.subr.bf16.mxu0 0
    %2909 = vmatpush1.bf16.msra.mxu0 0
    %2910 = vmatprep.mubr.bf16.mxu0 0
    %2911 = vmatmul.mubr.bf16.gmra.mrb[0].mxu0 %v2780
    %v2912 = vpop.f32.mrb[0].mxu0
    %v2913 = vadd.f32 0.0, %v2912
    %v2914 = vpop.f32.mrb[0].mxu0
    %v2915 = vadd.f32 0.0, %v2914
    %v2916 = vpop.f32.mrb[0].mxu0
    %v2917 = vadd.f32 0.0, %v2916
    %v2918 = vpop.f32.mrb[0].mxu0
    %v2919 = vadd.f32 0.0, %v2918
    %2920 = vdwg.mxu0
    %v2921 = vadd.f32 %v2724, %v2913
    %v2922 = vadd.f32 %v2725, %v2915
    %v2923 = vadd.f32 %v2726, %v2917
    %v2924 = vadd.f32 %v2727, %v2919
    %v2925 = vld [vmem:[%s12] sm:$0x3]
    %v2927 = vlaneseq
    %v2928 = vshrl.u32 %v2927, 7
    %v2929 = vsub.s32 0, %v2928
    %v2930 = vrot.slane %v2925, %v2929
    %v2931 = vlaneseq
    %v2932 = vshrl.u32 %v2931, 7
    %v2933 = vsub.s32 1, %v2932
    %v2934 = vrot.slane %v2925, %v2933
    %v2937 = vadd.f32 %v2921, %v2930
    %v2938 = vadd.f32 %v2922, %v2934
    %v2939 = vadd.f32 %v2923, %v2930
    %v2940 = vadd.f32 %v2924, %v2934
    %vm2941 = vcmp.ge.f32.partialorder %v2937, 0.0
    %vm2942 = vcmp.ge.f32.partialorder %v2938, 0.0
    %vm2943 = vcmp.ge.f32.partialorder %v2939, 0.0
    %vm2944 = vcmp.ge.f32.partialorder %v2940, 0.0
    %v2945 = vmul.f32 %v2937, 0.2
    %v2946 = vmul.f32 %v2938, 0.2
    %v2947 = vmul.f32 %v2939, 0.2
    %v2948 = vmul.f32 %v2940, 0.2
    %v2949 = vsel %vm2941, %v2937, %v2945
    %v2950 = vsel %vm2942, %v2938, %v2946
    %v2951 = vsel %vm2943, %v2939, %v2947
    %v2952 = vsel %vm2944, %v2940, %v2948
    %v2953 = vpack.c.bf16 %v2951, %v2949
    %v2954 = vpack.c.bf16 %v2952, %v2950
    %v2955 = vld [vmem:[%s13] sm:$0xf]
    %v2956 = vld [vmem:[%s13 + $0x4] sm:$0xf]
    %v2959 = vunpack.c.l.b16 %v2955
    %v2960 = vunpack.c.l.b16 %v2956
    %v2961 = vpack.c.b16 %v2960, %v2959
    %v2963 = vsel %vm1499, %v2961, 0
    %2965 = vmatprep.subr.bf16.mxu0 %v2954
    %2966 = vmatpush1.bf16.msra.mxu0 %v2953
    %2967 = vmatprep.subr.bf16.mxu0 0
    %2968 = vmatpush1.bf16.msra.mxu0 0
    %2969 = vmatprep.subr.bf16.mxu0 0
    %2970 = vmatpush1.bf16.msra.mxu0 0
    %2971 = vmatprep.subr.bf16.mxu0 0
    %2972 = vmatpush1.bf16.msra.mxu0 0
    %2973 = vmatprep.subr.bf16.mxu0 0
    %2974 = vmatpush1.bf16.msra.mxu0 0
    %2975 = vmatprep.subr.bf16.mxu0 0
    %2976 = vmatpush1.bf16.msra.mxu0 0
    %2977 = vmatprep.subr.bf16.mxu0 0
    %2978 = vmatpush1.bf16.msra.mxu0 0
    %2979 = vmatprep.subr.bf16.mxu0 0
    %2980 = vmatpush1.bf16.msra.mxu0 0
    %2981 = vmatprep.subr.bf16.mxu0 0
    %2982 = vmatpush1.bf16.msra.mxu0 0
    %2983 = vmatprep.subr.bf16.mxu0 0
    %2984 = vmatpush1.bf16.msra.mxu0 0
    %2985 = vmatprep.subr.bf16.mxu0 0
    %2986 = vmatpush1.bf16.msra.mxu0 0
    %2987 = vmatprep.subr.bf16.mxu0 0
    %2988 = vmatpush1.bf16.msra.mxu0 0
    %2989 = vmatprep.subr.bf16.mxu0 0
    %2990 = vmatpush1.bf16.msra.mxu0 0
    %2991 = vmatprep.subr.bf16.mxu0 0
    %2992 = vmatpush1.bf16.msra.mxu0 0
    %2993 = vmatprep.subr.bf16.mxu0 0
    %2994 = vmatpush1.bf16.msra.mxu0 0
    %2995 = vmatprep.subr.bf16.mxu0 0
    %2996 = vmatpush1.bf16.msra.mxu0 0
    %2997 = vmatprep.mubr.bf16.mxu0 0
    %2998 = vmatmul.mubr.bf16.gmra.mrb[0].mxu0 %v2963
    %v2999 = vpop.f32.mrb[0].mxu0
    %v3000 = vadd.f32 0.0, %v2999
    %v3001 = vpop.f32.mrb[0].mxu0
    %v3002 = vadd.f32 0.0, %v3001
    %v3003 = vpop.f32.mrb[0].mxu0
    %v3004 = vadd.f32 0.0, %v3003
    %v3005 = vpop.f32.mrb[0].mxu0
    %v3006 = vadd.f32 0.0, %v3005
    %3007 = vdwg.mxu0
    %v3008 = vpack.c.bf16 %v3004, %v3000
    %v3009 = vpack.c.bf16 %v3006, %v3002
    %v3010 = vld [vmem:[%s14] sm:$0xf]
    %v3011 = vld [vmem:[%s14 + $0x4] sm:$0xf]
    %v3012 = vld [vmem:[%s14 + $0x8] sm:$0xf]
    %v3013 = vld [vmem:[%s14 + $0xc] sm:$0xf]
    %v3014 = vld [vmem:[%s14 + $0x10] sm:$0xf]
    %v3015 = vld [vmem:[%s14 + $0x14] sm:$0xf]
    %v3016 = vld [vmem:[%s14 + $0x18] sm:$0xf]
    %v3017 = vld [vmem:[%s14 + $0x1c] sm:$0xf]
    %v3018 = vld [vmem:[%s14 + $0x20] sm:$0xf]
    %v3019 = vld [vmem:[%s14 + $0x24] sm:$0xf]
    %v3020 = vld [vmem:[%s14 + $0x28] sm:$0xf]
    %v3021 = vld [vmem:[%s14 + $0x2c] sm:$0xf]
    %v3022 = vld [vmem:[%s14 + $0x30] sm:$0xf]
    %v3023 = vld [vmem:[%s14 + $0x34] sm:$0xf]
    %v3024 = vld [vmem:[%s14 + $0x38] sm:$0xf]
    %v3025 = vld [vmem:[%s14 + $0x3c] sm:$0xf]
    %v3026 = vld [vmem:[%s14 + $0x40] sm:$0xf]
    %v3027 = vld [vmem:[%s14 + $0x44] sm:$0xf]
    %v3028 = vld [vmem:[%s14 + $0x48] sm:$0xf]
    %v3029 = vld [vmem:[%s14 + $0x4c] sm:$0xf]
    %v3030 = vld [vmem:[%s14 + $0x50] sm:$0xf]
    %v3031 = vld [vmem:[%s14 + $0x54] sm:$0xf]
    %v3032 = vld [vmem:[%s14 + $0x58] sm:$0xf]
    %v3033 = vld [vmem:[%s14 + $0x5c] sm:$0xf]
    %s3034 = scalar_lea.vmem %s13, 8
    %v3035 = vld [vmem:[%s3034] sm:$0xf]
    %v3036 = vld [vmem:[%s3034 + $0x4] sm:$0xf]
    %v3039 = vunpack.c.l.b16 %v3035
    %v3040 = vunpack.c.l.b16 %v3036
    %v3041 = vpack.c.b16 %v3040, %v3039
    %v3043 = vsel %vm1499, %v3041, 0
    %3045 = vmatprep.subr.bf16.mxu0 %v2954
    %3046 = vmatpush1.bf16.msra.mxu0 %v2953
    %3047 = vmatprep.subr.bf16.mxu0 0
    %3048 = vmatpush1.bf16.msra.mxu0 0
    %3049 = vmatprep.subr.bf16.mxu0 0
    %3050 = vmatpush1.bf16.msra.mxu0 0
    %3051 = vmatprep.subr.bf16.mxu0 0
    %3052 = vmatpush1.bf16.msra.mxu0 0
    %3053 = vmatprep.subr.bf16.mxu0 0
    %3054 = vmatpush1.bf16.msra.mxu0 0
    %3055 = vmatprep.subr.bf16.mxu0 0
    %3056 = vmatpush1.bf16.msra.mxu0 0
    %3057 = vmatprep.subr.bf16.mxu0 0
    %3058 = vmatpush1.bf16.msra.mxu0 0
    %3059 = vmatprep.subr.bf16.mxu0 0
    %3060 = vmatpush1.bf16.msra.mxu0 0
    %3061 = vmatprep.subr.bf16.mxu0 0
    %3062 = vmatpush1.bf16.msra.mxu0 0
    %3063 = vmatprep.subr.bf16.mxu0 0
    %3064 = vmatpush1.bf16.msra.mxu0 0
    %3065 = vmatprep.subr.bf16.mxu0 0
    %3066 = vmatpush1.bf16.msra.mxu0 0
    %3067 = vmatprep.subr.bf16.mxu0 0
    %3068 = vmatpush1.bf16.msra.mxu0 0
    %3069 = vmatprep.subr.bf16.mxu0 0
    %3070 = vmatpush1.bf16.msra.mxu0 0
    %3071 = vmatprep.subr.bf16.mxu0 0
    %3072 = vmatpush1.bf16.msra.mxu0 0
    %3073 = vmatprep.subr.bf16.mxu0 0
    %3074 = vmatpush1.bf16.msra.mxu0 0
    %3075 = vmatprep.subr.bf16.mxu0 0
    %3076 = vmatpush1.bf16.msra.mxu0 0
    %3077 = vmatprep.mubr.bf16.mxu0 0
    %3078 = vmatmul.mubr.bf16.gmra.mrb[0].mxu0 %v3043
    %v3079 = vpop.f32.mrb[0].mxu0
    %v3080 = vadd.f32 0.0, %v3079
    %v3081 = vpop.f32.mrb[0].mxu0
    %v3082 = vadd.f32 0.0, %v3081
    %v3083 = vpop.f32.mrb[0].mxu0
    %v3084 = vadd.f32 0.0, %v3083
    %v3085 = vpop.f32.mrb[0].mxu0
    %v3086 = vadd.f32 0.0, %v3085
    %3087 = vdwg.mxu0
    %v3088 = vpack.c.bf16 %v3084, %v3080
    %v3089 = vpack.c.bf16 %v3086, %v3082
    %s3090 = scalar_lea.vmem %s14, 96
    %v3091 = vld [vmem:[%s3090] sm:$0xf]
    %v3092 = vld [vmem:[%s3090 + $0x4] sm:$0xf]
    %v3093 = vld [vmem:[%s3090 + $0x8] sm:$0xf]
    %v3094 = vld [vmem:[%s3090 + $0xc] sm:$0xf]
    %v3095 = vld [vmem:[%s3090 + $0x10] sm:$0xf]
    %v3096 = vld [vmem:[%s3090 + $0x14] sm:$0xf]
    %v3097 = vld [vmem:[%s3090 + $0x18] sm:$0xf]
    %v3098 = vld [vmem:[%s3090 + $0x1c] sm:$0xf]
    %v3099 = vld [vmem:[%s3090 + $0x20] sm:$0xf]
    %v3100 = vld [vmem:[%s3090 + $0x24] sm:$0xf]
    %v3101 = vld [vmem:[%s3090 + $0x28] sm:$0xf]
    %v3102 = vld [vmem:[%s3090 + $0x2c] sm:$0xf]
    %v3103 = vld [vmem:[%s3090 + $0x30] sm:$0xf]
    %v3104 = vld [vmem:[%s3090 + $0x34] sm:$0xf]
    %v3105 = vld [vmem:[%s3090 + $0x38] sm:$0xf]
    %v3106 = vld [vmem:[%s3090 + $0x3c] sm:$0xf]
    %v3107 = vld [vmem:[%s3090 + $0x40] sm:$0xf]
    %v3108 = vld [vmem:[%s3090 + $0x44] sm:$0xf]
    %v3109 = vld [vmem:[%s3090 + $0x48] sm:$0xf]
    %v3110 = vld [vmem:[%s3090 + $0x4c] sm:$0xf]
    %v3111 = vld [vmem:[%s3090 + $0x50] sm:$0xf]
    %v3112 = vld [vmem:[%s3090 + $0x54] sm:$0xf]
    %v3113 = vld [vmem:[%s3090 + $0x58] sm:$0xf]
    %v3114 = vld [vmem:[%s3090 + $0x5c] sm:$0xf]
    %v3139 = vunpack.c.l.b16 %v3091
    %v3140 = vunpack.c.l.b16 %v3092
    %v3141 = vunpack.c.l.b16 %v3093
    %v3142 = vunpack.c.l.b16 %v3094
    %v3143 = vunpack.c.l.b16 %v3095
    %v3144 = vunpack.c.l.b16 %v3096
    %v3145 = vunpack.c.l.b16 %v3097
    %v3146 = vunpack.c.l.b16 %v3098
    %v3147 = vunpack.c.l.b16 %v3099
    %v3148 = vunpack.c.l.b16 %v3100
    %v3149 = vunpack.c.l.b16 %v3101
    %v3150 = vunpack.c.l.b16 %v3102
    %v3151 = vunpack.c.l.b16 %v3103
    %v3152 = vunpack.c.l.b16 %v3104
    %v3153 = vunpack.c.l.b16 %v3105
    %v3154 = vunpack.c.l.b16 %v3106
    %v3155 = vunpack.c.l.b16 %v3107
    %v3156 = vunpack.c.l.b16 %v3108
    %v3157 = vunpack.c.l.b16 %v3109
    %v3158 = vunpack.c.l.b16 %v3110
    %v3159 = vunpack.c.l.b16 %v3111
    %v3160 = vunpack.c.l.b16 %v3112
    %v3161 = vunpack.c.l.b16 %v3113
    %v3162 = vunpack.c.l.b16 %v3114
    %v3163 = vpack.c.b16 %v3140, %v3139
    %v3164 = vpack.c.b16 %v3142, %v3141
    %v3165 = vpack.c.b16 %v3144, %v3143
    %v3166 = vpack.c.b16 %v3146, %v3145
    %v3167 = vpack.c.b16 %v3148, %v3147
    %v3168 = vpack.c.b16 %v3150, %v3149
    %v3169 = vpack.c.b16 %v3152, %v3151
    %v3170 = vpack.c.b16 %v3154, %v3153
    %v3171 = vpack.c.b16 %v3156, %v3155
    %v3172 = vpack.c.b16 %v3158, %v3157
    %v3173 = vpack.c.b16 %v3160, %v3159
    %v3174 = vpack.c.b16 %v3162, %v3161
    %v3188 = vsel %vm114, %v3089, 0
    %3190 = vmatprep.subr.bf16.mxu0 0
    %3191 = vmatpush1.bf16.msra.mxu0 %v3163
    %3192 = vmatprep.subr.bf16.mxu0 0
    %3193 = vmatpush1.bf16.msra.mxu0 %v3164
    %3194 = vmatprep.subr.bf16.mxu0 0
    %3195 = vmatpush1.bf16.msra.mxu0 %v3165
    %3196 = vmatprep.subr.bf16.mxu0 0
    %3197 = vmatpush1.bf16.msra.mxu0 %v3166
    %3198 = vmatprep.subr.bf16.mxu0 0
    %3199 = vmatpush1.bf16.msra.mxu0 %v3167
    %3200 = vmatprep.subr.bf16.mxu0 0
    %3201 = vmatpush1.bf16.msra.mxu0 %v3168
    %3202 = vmatprep.subr.bf16.mxu0 0
    %3203 = vmatpush1.bf16.msra.mxu0 %v3169
    %3204 = vmatprep.subr.bf16.mxu0 0
    %3205 = vmatpush1.bf16.msra.mxu0 %v3170
    %3206 = vmatprep.subr.bf16.mxu0 0
    %3207 = vmatpush1.bf16.msra.mxu0 %v3171
    %3208 = vmatprep.subr.bf16.mxu0 0
    %3209 = vmatpush1.bf16.msra.mxu0 %v3172
    %3210 = vmatprep.subr.bf16.mxu0 0
    %3211 = vmatpush1.bf16.msra.mxu0 %v3173
    %3212 = vmatprep.subr.bf16.mxu0 0
    %3213 = vmatpush1.bf16.msra.mxu0 %v3174
    %3214 = vmatprep.subr.bf16.mxu0 0
    %3215 = vmatpush1.bf16.msra.mxu0 0
    %3216 = vmatprep.subr.bf16.mxu0 0
    %3217 = vmatpush1.bf16.msra.mxu0 0
    %3218 = vmatprep.subr.bf16.mxu0 0
    %3219 = vmatpush1.bf16.msra.mxu0 0
    %3220 = vmatprep.subr.bf16.mxu0 0
    %3221 = vmatpush1.bf16.msra.mxu0 0
    %3222 = vmatprep.mubr.bf16.mxu0 %v3188
    %3223 = vmatmul.mubr.bf16.gmra.mrb[0].mxu0 %v3088
    %v3224 = vpop.f32.mrb[0].mxu0
    %v3225 = vadd.f32 0.0, %v3224
    %v3226 = vpop.f32.mrb[0].mxu0
    %v3227 = vpop.f32.mrb[0].mxu0
    %v3228 = vadd.f32 0.0, %v3227
    %v3229 = vpop.f32.mrb[0].mxu0
    %3230 = vdwg.mxu0
    %v3255 = vunpack.c.l.b16 %v3010
    %v3256 = vunpack.c.l.b16 %v3011
    %v3257 = vunpack.c.l.b16 %v3012
    %v3258 = vunpack.c.l.b16 %v3013
    %v3259 = vunpack.c.l.b16 %v3014
    %v3260 = vunpack.c.l.b16 %v3015
    %v3261 = vunpack.c.l.b16 %v3016
    %v3262 = vunpack.c.l.b16 %v3017
    %v3263 = vunpack.c.l.b16 %v3018
    %v3264 = vunpack.c.l.b16 %v3019
    %v3265 = vunpack.c.l.b16 %v3020
    %v3266 = vunpack.c.l.b16 %v3021
    %v3267 = vunpack.c.l.b16 %v3022
    %v3268 = vunpack.c.l.b16 %v3023
    %v3269 = vunpack.c.l.b16 %v3024
    %v3270 = vunpack.c.l.b16 %v3025
    %v3271 = vunpack.c.l.b16 %v3026
    %v3272 = vunpack.c.l.b16 %v3027
    %v3273 = vunpack.c.l.b16 %v3028
    %v3274 = vunpack.c.l.b16 %v3029
    %v3275 = vunpack.c.l.b16 %v3030
    %v3276 = vunpack.c.l.b16 %v3031
    %v3277 = vunpack.c.l.b16 %v3032
    %v3278 = vunpack.c.l.b16 %v3033
    %v3279 = vpack.c.b16 %v3256, %v3255
    %v3280 = vpack.c.b16 %v3258, %v3257
    %v3281 = vpack.c.b16 %v3260, %v3259
    %v3282 = vpack.c.b16 %v3262, %v3261
    %v3283 = vpack.c.b16 %v3264, %v3263
    %v3284 = vpack.c.b16 %v3266, %v3265
    %v3285 = vpack.c.b16 %v3268, %v3267
    %v3286 = vpack.c.b16 %v3270, %v3269
    %v3287 = vpack.c.b16 %v3272, %v3271
    %v3288 = vpack.c.b16 %v3274, %v3273
    %v3289 = vpack.c.b16 %v3276, %v3275
    %v3290 = vpack.c.b16 %v3278, %v3277
    %v3304 = vsel %vm114, %v3009, 0
    %3306 = vmatprep.subr.bf16.mxu0 0
    %3307 = vmatpush1.bf16.msra.mxu0 %v3279
    %3308 = vmatprep.subr.bf16.mxu0 0
    %3309 = vmatpush1.bf16.msra.mxu0 %v3280
    %3310 = vmatprep.subr.bf16.mxu0 0
    %3311 = vmatpush1.bf16.msra.mxu0 %v3281
    %3312 = vmatprep.subr.bf16.mxu0 0
    %3313 = vmatpush1.bf16.msra.mxu0 %v3282
    %3314 = vmatprep.subr.bf16.mxu0 0
    %3315 = vmatpush1.bf16.msra.mxu0 %v3283
    %3316 = vmatprep.subr.bf16.mxu0 0
    %3317 = vmatpush1.bf16.msra.mxu0 %v3284
    %3318 = vmatprep.subr.bf16.mxu0 0
    %3319 = vmatpush1.bf16.msra.mxu0 %v3285
    %3320 = vmatprep.subr.bf16.mxu0 0
    %3321 = vmatpush1.bf16.msra.mxu0 %v3286
    %3322 = vmatprep.subr.bf16.mxu0 0
    %3323 = vmatpush1.bf16.msra.mxu0 %v3287
    %3324 = vmatprep.subr.bf16.mxu0 0
    %3325 = vmatpush1.bf16.msra.mxu0 %v3288
    %3326 = vmatprep.subr.bf16.mxu0 0
    %3327 = vmatpush1.bf16.msra.mxu0 %v3289
    %3328 = vmatprep.subr.bf16.mxu0 0
    %3329 = vmatpush1.bf16.msra.mxu0 %v3290
    %3330 = vmatprep.subr.bf16.mxu0 0
    %3331 = vmatpush1.bf16.msra.mxu0 0
    %3332 = vmatprep.subr.bf16.mxu0 0
    %3333 = vmatpush1.bf16.msra.mxu0 0
    %3334 = vmatprep.subr.bf16.mxu0 0
    %3335 = vmatpush1.bf16.msra.mxu0 0
    %3336 = vmatprep.subr.bf16.mxu0 0
    %3337 = vmatpush1.bf16.msra.mxu0 0
    %3338 = vmatprep.mubr.bf16.mxu0 %v3304
    %3339 = vmatmul.mubr.bf16.gmra.mrb[0].mxu0 %v3008
    %v3340 = vpop.f32.mrb[0].mxu0
    %v3341 = vadd.f32 %v3225, %v3340
    %v3342 = vpop.f32.mrb[0].mxu0
    %v3343 = vpop.f32.mrb[0].mxu0
    %v3344 = vadd.f32 %v3228, %v3343
    %v3345 = vpop.f32.mrb[0].mxu0
    %3346 = vdwg.mxu0
    %s3347 = scalar_lea.vmem %s13, 16
    %v3348 = vld [vmem:[%s3347] sm:$0xf]
    %v3349 = vld [vmem:[%s3347 + $0x4] sm:$0xf]
    %v3352 = vunpack.c.l.b16 %v3348
    %v3353 = vunpack.c.l.b16 %v3349
    %v3354 = vpack.c.b16 %v3353, %v3352
    %v3356 = vsel %vm1499, %v3354, 0
    %3358 = vmatprep.subr.bf16.mxu0 %v2954
    %3359 = vmatpush1.bf16.msra.mxu0 %v2953
    %3360 = vmatprep.subr.bf16.mxu0 0
    %3361 = vmatpush1.bf16.msra.mxu0 0
    %3362 = vmatprep.subr.bf16.mxu0 0
    %3363 = vmatpush1.bf16.msra.mxu0 0
    %3364 = vmatprep.subr.bf16.mxu0 0
    %3365 = vmatpush1.bf16.msra.mxu0 0
    %3366 = vmatprep.subr.bf16.mxu0 0
    %3367 = vmatpush1.bf16.msra.mxu0 0
    %3368 = vmatprep.subr.bf16.mxu0 0
    %3369 = vmatpush1.bf16.msra.mxu0 0
    %3370 = vmatprep.subr.bf16.mxu0 0
    %3371 = vmatpush1.bf16.msra.mxu0 0
    %3372 = vmatprep.subr.bf16.mxu0 0
    %3373 = vmatpush1.bf16.msra.mxu0 0
    %3374 = vmatprep.subr.bf16.mxu0 0
    %3375 = vmatpush1.bf16.msra.mxu0 0
    %3376 = vmatprep.subr.bf16.mxu0 0
    %3377 = vmatpush1.bf16.msra.mxu0 0
    %3378 = vmatprep.subr.bf16.mxu0 0
    %3379 = vmatpush1.bf16.msra.mxu0 0
    %3380 = vmatprep.subr.bf16.mxu0 0
    %3381 = vmatpush1.bf16.msra.mxu0 0
    %3382 = vmatprep.subr.bf16.mxu0 0
    %3383 = vmatpush1.bf16.msra.mxu0 0
    %3384 = vmatprep.subr.bf16.mxu0 0
    %3385 = vmatpush1.bf16.msra.mxu0 0
    %3386 = vmatprep.subr.bf16.mxu0 0
    %3387 = vmatpush1.bf16.msra.mxu0 0
    %3388 = vmatprep.subr.bf16.mxu0 0
    %3389 = vmatpush1.bf16.msra.mxu0 0
    %3390 = vmatprep.mubr.bf16.mxu0 0
    %3391 = vmatmul.mubr.bf16.gmra.mrb[0].mxu0 %v3356
    %v3392 = vpop.f32.mrb[0].mxu0
    %v3393 = vadd.f32 0.0, %v3392
    %v3394 = vpop.f32.mrb[0].mxu0
    %v3395 = vadd.f32 0.0, %v3394
    %v3396 = vpop.f32.mrb[0].mxu0
    %v3397 = vadd.f32 0.0, %v3396
    %v3398 = vpop.f32.mrb[0].mxu0
    %v3399 = vadd.f32 0.0, %v3398
    %3400 = vdwg.mxu0
    %v3401 = vpack.c.bf16 %v3397, %v3393
    %v3402 = vpack.c.bf16 %v3399, %v3395
    %s3403 = scalar_lea.vmem %s14, 192
    %v3404 = vld [vmem:[%s3403] sm:$0xf]
    %v3405 = vld [vmem:[%s3403 + $0x4] sm:$0xf]
    %v3406 = vld [vmem:[%s3403 + $0x8] sm:$0xf]
    %v3407 = vld [vmem:[%s3403 + $0xc] sm:$0xf]
    %v3408 = vld [vmem:[%s3403 + $0x10] sm:$0xf]
    %v3409 = vld [vmem:[%s3403 + $0x14] sm:$0xf]
    %v3410 = vld [vmem:[%s3403 + $0x18] sm:$0xf]
    %v3411 = vld [vmem:[%s3403 + $0x1c] sm:$0xf]
    %v3412 = vld [vmem:[%s3403 + $0x20] sm:$0xf]
    %v3413 = vld [vmem:[%s3403 + $0x24] sm:$0xf]
    %v3414 = vld [vmem:[%s3403 + $0x28] sm:$0xf]
    %v3415 = vld [vmem:[%s3403 + $0x2c] sm:$0xf]
    %v3416 = vld [vmem:[%s3403 + $0x30] sm:$0xf]
    %v3417 = vld [vmem:[%s3403 + $0x34] sm:$0xf]
    %v3418 = vld [vmem:[%s3403 + $0x38] sm:$0xf]
    %v3419 = vld [vmem:[%s3403 + $0x3c] sm:$0xf]
    %v3420 = vld [vmem:[%s3403 + $0x40] sm:$0xf]
    %v3421 = vld [vmem:[%s3403 + $0x44] sm:$0xf]
    %v3422 = vld [vmem:[%s3403 + $0x48] sm:$0xf]
    %v3423 = vld [vmem:[%s3403 + $0x4c] sm:$0xf]
    %v3424 = vld [vmem:[%s3403 + $0x50] sm:$0xf]
    %v3425 = vld [vmem:[%s3403 + $0x54] sm:$0xf]
    %v3426 = vld [vmem:[%s3403 + $0x58] sm:$0xf]
    %v3427 = vld [vmem:[%s3403 + $0x5c] sm:$0xf]
    %v3452 = vunpack.c.l.b16 %v3404
    %v3453 = vunpack.c.l.b16 %v3405
    %v3454 = vunpack.c.l.b16 %v3406
    %v3455 = vunpack.c.l.b16 %v3407
    %v3456 = vunpack.c.l.b16 %v3408
    %v3457 = vunpack.c.l.b16 %v3409
    %v3458 = vunpack.c.l.b16 %v3410
    %v3459 = vunpack.c.l.b16 %v3411
    %v3460 = vunpack.c.l.b16 %v3412
    %v3461 = vunpack.c.l.b16 %v3413
    %v3462 = vunpack.c.l.b16 %v3414
    %v3463 = vunpack.c.l.b16 %v3415
    %v3464 = vunpack.c.l.b16 %v3416
    %v3465 = vunpack.c.l.b16 %v3417
    %v3466 = vunpack.c.l.b16 %v3418
    %v3467 = vunpack.c.l.b16 %v3419
    %v3468 = vunpack.c.l.b16 %v3420
    %v3469 = vunpack.c.l.b16 %v3421
    %v3470 = vunpack.c.l.b16 %v3422
    %v3471 = vunpack.c.l.b16 %v3423
    %v3472 = vunpack.c.l.b16 %v3424
    %v3473 = vunpack.c.l.b16 %v3425
    %v3474 = vunpack.c.l.b16 %v3426
    %v3475 = vunpack.c.l.b16 %v3427
    %v3476 = vpack.c.b16 %v3453, %v3452
    %v3477 = vpack.c.b16 %v3455, %v3454
    %v3478 = vpack.c.b16 %v3457, %v3456
    %v3479 = vpack.c.b16 %v3459, %v3458
    %v3480 = vpack.c.b16 %v3461, %v3460
    %v3481 = vpack.c.b16 %v3463, %v3462
    %v3482 = vpack.c.b16 %v3465, %v3464
    %v3483 = vpack.c.b16 %v3467, %v3466
    %v3484 = vpack.c.b16 %v3469, %v3468
    %v3485 = vpack.c.b16 %v3471, %v3470
    %v3486 = vpack.c.b16 %v3473, %v3472
    %v3487 = vpack.c.b16 %v3475, %v3474
    %v3501 = vsel %vm114, %v3402, 0
    %3503 = vmatprep.subr.bf16.mxu0 0
    %3504 = vmatpush1.bf16.msra.mxu0 %v3476
    %3505 = vmatprep.subr.bf16.mxu0 0
    %3506 = vmatpush1.bf16.msra.mxu0 %v3477
    %3507 = vmatprep.subr.bf16.mxu0 0
    %3508 = vmatpush1.bf16.msra.mxu0 %v3478
    %3509 = vmatprep.subr.bf16.mxu0 0
    %3510 = vmatpush1.bf16.msra.mxu0 %v3479
    %3511 = vmatprep.subr.bf16.mxu0 0
    %3512 = vmatpush1.bf16.msra.mxu0 %v3480
    %3513 = vmatprep.subr.bf16.mxu0 0
    %3514 = vmatpush1.bf16.msra.mxu0 %v3481
    %3515 = vmatprep.subr.bf16.mxu0 0
    %3516 = vmatpush1.bf16.msra.mxu0 %v3482
    %3517 = vmatprep.subr.bf16.mxu0 0
    %3518 = vmatpush1.bf16.msra.mxu0 %v3483
    %3519 = vmatprep.subr.bf16.mxu0 0
    %3520 = vmatpush1.bf16.msra.mxu0 %v3484
    %3521 = vmatprep.subr.bf16.mxu0 0
    %3522 = vmatpush1.bf16.msra.mxu0 %v3485
    %3523 = vmatprep.subr.bf16.mxu0 0
    %3524 = vmatpush1.bf16.msra.mxu0 %v3486
    %3525 = vmatprep.subr.bf16.mxu0 0
    %3526 = vmatpush1.bf16.msra.mxu0 %v3487
    %3527 = vmatprep.subr.bf16.mxu0 0
    %3528 = vmatpush1.bf16.msra.mxu0 0
    %3529 = vmatprep.subr.bf16.mxu0 0
    %3530 = vmatpush1.bf16.msra.mxu0 0
    %3531 = vmatprep.subr.bf16.mxu0 0
    %3532 = vmatpush1.bf16.msra.mxu0 0
    %3533 = vmatprep.subr.bf16.mxu0 0
    %3534 = vmatpush1.bf16.msra.mxu0 0
    %3535 = vmatprep.mubr.bf16.mxu0 %v3501
    %3536 = vmatmul.mubr.bf16.gmra.mrb[0].mxu0 %v3401
    %v3537 = vpop.f32.mrb[0].mxu0
    %v3538 = vadd.f32 0.0, %v3537
    %v3539 = vpop.f32.mrb[0].mxu0
    %v3540 = vpop.f32.mrb[0].mxu0
    %v3541 = vadd.f32 0.0, %v3540
    %v3542 = vpop.f32.mrb[0].mxu0
    %3543 = vdwg.mxu0
    %v3544 = vadd.f32 %v3341, %v3538
    %v3545 = vadd.f32 %v3344, %v3541
    %s3546 = scalar_lea.vmem %s13, 24
    %v3547 = vld [vmem:[%s3546] sm:$0xf]
    %v3548 = vld [vmem:[%s3546 + $0x4] sm:$0xf]
    %v3551 = vunpack.c.l.b16 %v3547
    %v3552 = vunpack.c.l.b16 %v3548
    %v3553 = vpack.c.b16 %v3552, %v3551
    %v3555 = vsel %vm1499, %v3553, 0
    %3557 = vmatprep.subr.bf16.mxu0 %v2954
    %3558 = vmatpush1.bf16.msra.mxu0 %v2953
    %3559 = vmatprep.subr.bf16.mxu0 0
    %3560 = vmatpush1.bf16.msra.mxu0 0
    %3561 = vmatprep.subr.bf16.mxu0 0
    %3562 = vmatpush1.bf16.msra.mxu0 0
    %3563 = vmatprep.subr.bf16.mxu0 0
    %3564 = vmatpush1.bf16.msra.mxu0 0
    %3565 = vmatprep.subr.bf16.mxu0 0
    %3566 = vmatpush1.bf16.msra.mxu0 0
    %3567 = vmatprep.subr.bf16.mxu0 0
    %3568 = vmatpush1.bf16.msra.mxu0 0
    %3569 = vmatprep.subr.bf16.mxu0 0
    %3570 = vmatpush1.bf16.msra.mxu0 0
    %3571 = vmatprep.subr.bf16.mxu0 0
    %3572 = vmatpush1.bf16.msra.mxu0 0
    %3573 = vmatprep.subr.bf16.mxu0 0
    %3574 = vmatpush1.bf16.msra.mxu0 0
    %3575 = vmatprep.subr.bf16.mxu0 0
    %3576 = vmatpush1.bf16.msra.mxu0 0
    %3577 = vmatprep.subr.bf16.mxu0 0
    %3578 = vmatpush1.bf16.msra.mxu0 0
    %3579 = vmatprep.subr.bf16.mxu0 0
    %3580 = vmatpush1.bf16.msra.mxu0 0
    %3581 = vmatprep.subr.bf16.mxu0 0
    %3582 = vmatpush1.bf16.msra.mxu0 0
    %3583 = vmatprep.subr.bf16.mxu0 0
    %3584 = vmatpush1.bf16.msra.mxu0 0
    %3585 = vmatprep.subr.bf16.mxu0 0
    %3586 = vmatpush1.bf16.msra.mxu0 0
    %3587 = vmatprep.subr.bf16.mxu0 0
    %3588 = vmatpush1.bf16.msra.mxu0 0
    %3589 = vmatprep.mubr.bf16.mxu0 0
    %3590 = vmatmul.mubr.bf16.gmra.mrb[0].mxu0 %v3555
    %v3591 = vpop.f32.mrb[0].mxu0
    %v3592 = vadd.f32 0.0, %v3591
    %v3593 = vpop.f32.mrb[0].mxu0
    %v3594 = vadd.f32 0.0, %v3593
    %v3595 = vpop.f32.mrb[0].mxu0
    %v3596 = vadd.f32 0.0, %v3595
    %v3597 = vpop.f32.mrb[0].mxu0
    %v3598 = vadd.f32 0.0, %v3597
    %3599 = vdwg.mxu0
    %v3600 = vpack.c.bf16 %v3596, %v3592
    %v3601 = vpack.c.bf16 %v3598, %v3594
    %s3602 = scalar_lea.vmem %s14, 288
    %v3603 = vld [vmem:[%s3602] sm:$0xf]
    %v3604 = vld [vmem:[%s3602 + $0x4] sm:$0xf]
    %v3605 = vld [vmem:[%s3602 + $0x8] sm:$0xf]
    %v3606 = vld [vmem:[%s3602 + $0xc] sm:$0xf]
    %v3607 = vld [vmem:[%s3602 + $0x10] sm:$0xf]
    %v3608 = vld [vmem:[%s3602 + $0x14] sm:$0xf]
    %v3609 = vld [vmem:[%s3602 + $0x18] sm:$0xf]
    %v3610 = vld [vmem:[%s3602 + $0x1c] sm:$0xf]
    %v3611 = vld [vmem:[%s3602 + $0x20] sm:$0xf]
    %v3612 = vld [vmem:[%s3602 + $0x24] sm:$0xf]
    %v3613 = vld [vmem:[%s3602 + $0x28] sm:$0xf]
    %v3614 = vld [vmem:[%s3602 + $0x2c] sm:$0xf]
    %v3615 = vld [vmem:[%s3602 + $0x30] sm:$0xf]
    %v3616 = vld [vmem:[%s3602 + $0x34] sm:$0xf]
    %v3617 = vld [vmem:[%s3602 + $0x38] sm:$0xf]
    %v3618 = vld [vmem:[%s3602 + $0x3c] sm:$0xf]
    %v3619 = vld [vmem:[%s3602 + $0x40] sm:$0xf]
    %v3620 = vld [vmem:[%s3602 + $0x44] sm:$0xf]
    %v3621 = vld [vmem:[%s3602 + $0x48] sm:$0xf]
    %v3622 = vld [vmem:[%s3602 + $0x4c] sm:$0xf]
    %v3623 = vld [vmem:[%s3602 + $0x50] sm:$0xf]
    %v3624 = vld [vmem:[%s3602 + $0x54] sm:$0xf]
    %v3625 = vld [vmem:[%s3602 + $0x58] sm:$0xf]
    %v3626 = vld [vmem:[%s3602 + $0x5c] sm:$0xf]
    %v3651 = vunpack.c.l.b16 %v3603
    %v3652 = vunpack.c.l.b16 %v3604
    %v3653 = vunpack.c.l.b16 %v3605
    %v3654 = vunpack.c.l.b16 %v3606
    %v3655 = vunpack.c.l.b16 %v3607
    %v3656 = vunpack.c.l.b16 %v3608
    %v3657 = vunpack.c.l.b16 %v3609
    %v3658 = vunpack.c.l.b16 %v3610
    %v3659 = vunpack.c.l.b16 %v3611
    %v3660 = vunpack.c.l.b16 %v3612
    %v3661 = vunpack.c.l.b16 %v3613
    %v3662 = vunpack.c.l.b16 %v3614
    %v3663 = vunpack.c.l.b16 %v3615
    %v3664 = vunpack.c.l.b16 %v3616
    %v3665 = vunpack.c.l.b16 %v3617
    %v3666 = vunpack.c.l.b16 %v3618
    %v3667 = vunpack.c.l.b16 %v3619
    %v3668 = vunpack.c.l.b16 %v3620
    %v3669 = vunpack.c.l.b16 %v3621
    %v3670 = vunpack.c.l.b16 %v3622
    %v3671 = vunpack.c.l.b16 %v3623
    %v3672 = vunpack.c.l.b16 %v3624
    %v3673 = vunpack.c.l.b16 %v3625
    %v3674 = vunpack.c.l.b16 %v3626
    %v3675 = vpack.c.b16 %v3652, %v3651
    %v3676 = vpack.c.b16 %v3654, %v3653
    %v3677 = vpack.c.b16 %v3656, %v3655
    %v3678 = vpack.c.b16 %v3658, %v3657
    %v3679 = vpack.c.b16 %v3660, %v3659
    %v3680 = vpack.c.b16 %v3662, %v3661
    %v3681 = vpack.c.b16 %v3664, %v3663
    %v3682 = vpack.c.b16 %v3666, %v3665
    %v3683 = vpack.c.b16 %v3668, %v3667
    %v3684 = vpack.c.b16 %v3670, %v3669
    %v3685 = vpack.c.b16 %v3672, %v3671
    %v3686 = vpack.c.b16 %v3674, %v3673
    %v3700 = vsel %vm114, %v3601, 0
    %3702 = vmatprep.subr.bf16.mxu0 0
    %3703 = vmatpush1.bf16.msra.mxu0 %v3675
    %3704 = vmatprep.subr.bf16.mxu0 0
    %3705 = vmatpush1.bf16.msra.mxu0 %v3676
    %3706 = vmatprep.subr.bf16.mxu0 0
    %3707 = vmatpush1.bf16.msra.mxu0 %v3677
    %3708 = vmatprep.subr.bf16.mxu0 0
    %3709 = vmatpush1.bf16.msra.mxu0 %v3678
    %3710 = vmatprep.subr.bf16.mxu0 0
    %3711 = vmatpush1.bf16.msra.mxu0 %v3679
    %3712 = vmatprep.subr.bf16.mxu0 0
    %3713 = vmatpush1.bf16.msra.mxu0 %v3680
    %3714 = vmatprep.subr.bf16.mxu0 0
    %3715 = vmatpush1.bf16.msra.mxu0 %v3681
    %3716 = vmatprep.subr.bf16.mxu0 0
    %3717 = vmatpush1.bf16.msra.mxu0 %v3682
    %3718 = vmatprep.subr.bf16.mxu0 0
    %3719 = vmatpush1.bf16.msra.mxu0 %v3683
    %3720 = vmatprep.subr.bf16.mxu0 0
    %3721 = vmatpush1.bf16.msra.mxu0 %v3684
    %3722 = vmatprep.subr.bf16.mxu0 0
    %3723 = vmatpush1.bf16.msra.mxu0 %v3685
    %3724 = vmatprep.subr.bf16.mxu0 0
    %3725 = vmatpush1.bf16.msra.mxu0 %v3686
    %3726 = vmatprep.subr.bf16.mxu0 0
    %3727 = vmatpush1.bf16.msra.mxu0 0
    %3728 = vmatprep.subr.bf16.mxu0 0
    %3729 = vmatpush1.bf16.msra.mxu0 0
    %3730 = vmatprep.subr.bf16.mxu0 0
    %3731 = vmatpush1.bf16.msra.mxu0 0
    %3732 = vmatprep.subr.bf16.mxu0 0
    %3733 = vmatpush1.bf16.msra.mxu0 0
    %3734 = vmatprep.mubr.bf16.mxu0 %v3700
    %3735 = vmatmul.mubr.bf16.gmra.mrb[0].mxu0 %v3600
    %v3736 = vpop.f32.mrb[0].mxu0
    %v3737 = vadd.f32 0.0, %v3736
    %v3738 = vpop.f32.mrb[0].mxu0
    %v3739 = vpop.f32.mrb[0].mxu0
    %v3740 = vadd.f32 0.0, %v3739
    %v3741 = vpop.f32.mrb[0].mxu0
    %3742 = vdwg.mxu0
    %v3743 = vadd.f32 %v3544, %v3737
    %v3744 = vadd.f32 %v3545, %v3740
    %v3745 = vld [vmem:[%s15] sm:$0x1]
    %v3747 = vlaneseq
    %v3748 = vshrl.u32 %v3747, 7
    %v3749 = vsub.s32 0, %v3748
    %v3750 = vrot.slane %v3745, %v3749
    %v3752 = vadd.f32 %v3743, %v3750
    %v3753 = vadd.f32 %v3744, %v3750
    %3754 = vst [vmem:[%s16] sm:$0xff] %v3752
    %3755 = vst [vmem:[%s16 + $0x8] sm:$0xff] %v3753
    // Predicated region
    $region70: #{patch_discriminator_forward.1} parent=1 // pred_check
      _
    $region71: #{patch_discriminator_forward.1} parent=1 // pred_check_branch
      %3757 = sbr.rel (0) target = $region73
    $region72: #{patch_discriminator_forward.1} parent=1 // pred_region
      _
    $region73: #{patch_discriminator_forward.1} parent=1 // pred_fallthru
      _
    // Predicated region
    $region74: #{patch_discriminator_forward.1} parent=1 // pred_check
      _
    $region75: #{patch_discriminator_forward.1} parent=1 // pred_check_branch
      %3759 = sbr.rel (0) target = $region77
    $region76: #{patch_discriminator_forward.1} parent=1 // pred_region
      _
    $region77: #{patch_discriminator_forward.1} parent=1 // pred_fallthru
      _
    %3760 = vsyncpa [#allocation3], 1

</llo_original>
